<compile_context>
chip_gen: v7x
topology: tpu7x:2x2x1
jax: 0.10.0
libtpu: 0.0.40
codegen_flags: <defaults>
</compile_context>

<pallas_src>
import functools

import jax
import jax.numpy as jnp
from jax import lax
from jax.experimental import pallas as pl
from jax.experimental.pallas import tpu as pltpu

LANE = 128                      # TPU lane width -> in-kernel channel padding
MATMUL_DTYPE = jnp.bfloat16     # set to jnp.float32 for strict f32 parity


def _round_up(x, m):
    return (x + m - 1) // m * m


# ----------------------------- in-kernel math -------------------------------

def _erf(x):
    # Abramowitz & Stegun 7.1.26 rational approximation (|err| < 1.5e-7).
    a1, a2, a3, a4, a5 = (0.254829592, -0.284496736, 1.421413741,
                          -1.453152027, 1.061405429)
    p = 0.3275911
    sign = jnp.where(x >= 0.0, 1.0, -1.0)
    ax = jnp.abs(x)
    # [R8] divide on the EUP slot (free alongside VPU/MXU work)
    t = pl.reciprocal(1.0 + p * ax, approx=True)
    poly = ((((a5 * t + a4) * t + a3) * t + a2) * t + a1) * t
    return sign * (1.0 - poly * jnp.exp(-ax * ax))


def _gelu_exact(x):
    # matches torch.nn.GELU() (erf form)
    return 0.5 * x * (1.0 + _erf(x * 0.7071067811865476))


def _pool2x2(x):
    """MaxPool2d(kernel=2, stride=2): (2r, W, C) -> (r, W//2, C). Exact in bf16."""
    r2, w, c = x.shape
    r, wp = r2 // 2, w // 2
    x = jnp.max(x.reshape(r, 2, w, c), axis=1)       # pair rows
    return jnp.max(x.reshape(r, wp, 2, c), axis=2)   # pair columns


def _lanepad(v, extra):
    """Zero-extend the last (lane) dim by `extra` channels, in-register [R3]."""
    if extra == 0:
        return v
    return jnp.concatenate(
        [v, jnp.zeros(v.shape[:-1] + (extra,), v.dtype)], axis=-1)


def _conv3x3_bias_gelu(pad_ref, w_ref, b_ref, rows, cols):
    """3x3 conv as 9 accumulating tap matmuls [R1].

    pad_ref: (rows+2, cols+2, Ci) zero-bordered activations (MATMUL_DTYPE).
    w_ref:   (9, Ci, Co) packed weights, BN scale already folded.
    b_ref:   (1, Co) f32 folded-BN bias.
    Returns GELU(conv + bias) as (rows, cols, Co) f32.
    """
    ci = pad_ref.shape[-1]
    co = w_ref.shape[-1]
    acc = None
    for t in range(9):                     # fully unrolled, one MXU matmul each
        dy, dx = divmod(t, 3)
        lhs = pad_ref[dy:dy + rows, dx:dx + cols, :].reshape(rows * cols, ci)
        contrib = jnp.dot(lhs, w_ref[t], preferred_element_type=jnp.float32)
        acc = contrib if acc is None else acc + contrib
    y = _gelu_exact(acc + b_ref[...])      # bias + GELU in f32
    return y.reshape(rows, cols, co)


# --------------------------------- kernel ------------------------------------

def _down_kernel(x_ref, xt_ref, xb_ref, w1_ref, b1_ref, w2_ref, b2_ref,
                 o_ref, pad1, pad2):
    hi = pl.program_id(1)                  # H-tile index
    n_ht = pl.num_programs(1)
    _, th2, w_in, c_in = x_ref.shape       # th2 = 2 * TH input rows
    th = th2 // 2                          # pooled rows produced by this tile
    wp = w_in // 2
    c_in_p = pad1.shape[-1]
    c_mid_p = pad2.shape[-1]
    c_out_p = o_ref.shape[-1]

    # ---- fused MaxPool2d(2) on main rows + 2-pooled-row halos (bf16) [R4/R5]
    pooled = _pool2x2(x_ref[...].reshape(th2, w_in, c_in))     # (th, wp, c_in)
    top = _pool2x2(xt_ref[...].reshape(4, w_in, c_in))         # (2,  wp, c_in)
    bot = _pool2x2(xb_ref[...].reshape(4, w_in, c_in))         # (2,  wp, c_in)
    # halo rows outside the image are conv1's zero padding
    top = jnp.where(hi > 0, top, jnp.zeros_like(top))
    bot = jnp.where(hi < n_ht - 1, bot, jnp.zeros_like(bot))

    # ---- pad1: pooled rows [th*hi-2, th*hi+th+2) with conv1 zero border ------
    # Only the two border columns are zero-filled; the interior (rows x cols x
    # all lanes, channel padding folded in-register) is rewritten every step,
    # so no cross-step scratch state exists (megacore-safe) [R2].
    zc1 = jnp.zeros((th + 4, 1, c_in_p), pad1.dtype)
    pad1[:, 0:1, :] = zc1
    pad1[:, wp + 1:wp + 2, :] = zc1
    cpad = c_in_p - c_in
    pad1[0:2, 1:wp + 1, :] = _lanepad(top, cpad)
    pad1[2:th + 2, 1:wp + 1, :] = _lanepad(pooled, cpad)
    pad1[th + 2:th + 4, 1:wp + 1, :] = _lanepad(bot, cpad)

    # ---- conv1 -> BN(scale folded) -> GELU (computes th+2 rows: +1 halo/conv)
    h1 = _conv3x3_bias_gelu(pad1, w1_ref, b1_ref, th + 2, wp)  # f32
    h1 = h1.astype(pad2.dtype)   # padded mid channels are exactly 0 (0*w + 0 bias)

    # ---- pad2: h1 rows [th*hi-1, th*hi+th+1) with conv2 zero border ----------
    zc2 = jnp.zeros((th + 2, 1, c_mid_p), pad2.dtype)
    pad2[:, 0:1, :] = zc2
    pad2[:, wp + 1:wp + 2, :] = zc2
    zrow = jnp.zeros((1, wp, c_mid_p), pad2.dtype)
    # h1 rows that fall outside the image are conv2's zero padding
    pad2[0:1, 1:wp + 1, :] = jnp.where(hi > 0, h1[0:1], zrow)
    pad2[1:th + 1, 1:wp + 1, :] = h1[1:th + 1]
    pad2[th + 1:th + 2, 1:wp + 1, :] = jnp.where(hi < n_ht - 1,
                                                 h1[th + 1:th + 2], zrow)

    # ---- conv2 -> BN -> GELU -> bf16 output [R10] ----------------------------
    y = _conv3x3_bias_gelu(pad2, w2_ref, b2_ref, th, wp)       # (th, wp, c_out_p)
    o_ref[...] = y.reshape(1, th, wp, c_out_p).astype(o_ref.dtype)


# ------------------------------- wrappers ------------------------------------

def _down_pallas(x, w1p, b1p, w2p, b2p, th):
    n, he, we, c_in = x.shape
    _, c_in_p, c_mid_p = w1p.shape
    c_out_p = w2p.shape[-1]
    hp, wp = he // 2, we // 2
    ht = hp // th
    bpe = jnp.dtype(MATMUL_DTYPE).itemsize

    # [R6] VMEM budget (double-buffered blocks + scratches + f32 temps)
    vmem_est = (
        2 * (2 * th) * we * c_in * bpe
        + 2 * 2 * 4 * we * c_in * bpe
        + 2 * (w1p.size + w2p.size) * bpe
        + 2 * (b1p.size + b2p.size) * 4
        + (th + 4) * (wp + 2) * c_in_p * bpe
        + (th + 2) * (wp + 2) * c_mid_p * bpe
        + 2 * th * wp * c_out_p * bpe
        + 4 * (th + 2) * wp * max(c_mid_p, c_out_p) * 4
    )
    vmem_limit = int(min(max(1.5 * vmem_est + (2 << 20), 32 << 20), 60 << 20))

    # [R12] advisory cost estimate for XLA's scheduler
    cost = pl.CostEstimate(
        flops=int(2 * n * hp * wp * 9 * (c_in_p * c_mid_p + c_mid_p * c_out_p)),
        transcendentals=int(n * hp * wp * (c_mid_p + c_out_p)),
        bytes_accessed=int(x.size * bpe + (w1p.size + w2p.size) * bpe
                           + (b1p.size + b2p.size) * 4
                           + n * hp * wp * c_out_p * bpe),
    )

    return pl.pallas_call(
        _down_kernel,
        out_shape=jax.ShapeDtypeStruct((n, hp, wp, c_out_p), MATMUL_DTYPE),
        grid_spec=pltpu.PrefetchScalarGridSpec(
            num_scalar_prefetch=0,
            grid=(n, ht),                                    # [R5]
            in_specs=[
                # main input rows [2*th*h, 2*th*(h+1)) of image b
                pl.BlockSpec((1, 2 * th, we, c_in), lambda b, h: (b, h, 0, 0)),
                # 4-row halo above / below (clamped; masked at image edges)
                pl.BlockSpec((1, 4, we, c_in),
                             lambda b, h: (b, jnp.maximum((th // 2) * h - 1, 0),
                                           0, 0)),
                pl.BlockSpec((1, 4, we, c_in),
                             lambda b, h: (b, jnp.minimum((th // 2) * (h + 1),
                                                          he // 4 - 1), 0, 0)),
                # grid-invariant weights / biases (fetched once per core) [R7]
                pl.BlockSpec((9, c_in_p, c_mid_p), lambda b, h: (0, 0, 0)),
                pl.BlockSpec((1, c_mid_p), lambda b, h: (0, 0)),
                pl.BlockSpec((9, c_mid_p, c_out_p), lambda b, h: (0, 0, 0)),
                pl.BlockSpec((1, c_out_p), lambda b, h: (0, 0)),
            ],
            out_specs=pl.BlockSpec((1, th, wp, c_out_p),
                                   lambda b, h: (b, h, 0, 0)),
            scratch_shapes=[
                pltpu.VMEM((th + 4, wp + 2, c_in_p), MATMUL_DTYPE),   # conv1 in
                pltpu.VMEM((th + 2, wp + 2, c_mid_p), MATMUL_DTYPE),  # conv2 in
            ],
        ),
        compiler_params=pltpu.CompilerParams(
            dimension_semantics=("parallel", "parallel"),
            vmem_limit_bytes=vmem_limit),
        cost_estimate=cost,
    )(x, x, x, w1p, b1p, w2p, b2p)


def _fold_and_pack(w, s, cin_p, cout_p):
    """HWIO (3,3,cin,cout) * BN scale -> zero-padded (9, cin_p, cout_p) bf16."""
    kh, kw, cin, cout = w.shape
    wf = w.astype(jnp.float32) * s.reshape(1, 1, 1, cout).astype(jnp.float32)
    wf = jnp.pad(wf, ((0, 0), (0, 0), (0, cin_p - cin), (0, cout_p - cout)))
    return wf.reshape(kh * kw, cin_p, cout_p).astype(MATMUL_DTYPE)


def _pick_tile_rows(hp, target=64):
    """Largest even divisor of hp that is <= target (pooled rows per H tile)."""
    best = 0
    t = 2
    while t <= min(hp, target):
        if hp % t == 0:
            best = t
        t += 2
    return best if best >= 2 else hp


@functools.partial(jax.jit, static_argnames=("tile_rows",))
def down_forward(x_nchw, w1, s1, b1, w2, s2, b2, tile_rows=None):
    """PyTorch-style NCHW in / NCHW out (bf16). (s, b) are eval-mode-folded BN."""
    x = jnp.transpose(x_nchw, (0, 2, 3, 1))                  # NCHW -> NHWC
    _, h, w, c_in = x.shape
    he, we = (h // 2) * 2, (w // 2) * 2                      # MaxPool2d(2) floors
    assert he >= 4 and we >= 2, "Down kernel needs at least a 4x2 input"
    x = x[:, :he, :we, :].astype(MATMUL_DTYPE)               # bf16 activations [R4]

    c_mid, c_out = w1.shape[3], w2.shape[3]
    c_in_p = _round_up(c_in, LANE)       # lane padding happens in-kernel [R3]
    c_mid_p = _round_up(c_mid, LANE)
    c_out_p = _round_up(c_out, LANE)

    w1p = _fold_and_pack(w1, s1, c_in_p, c_mid_p)            # (9, c_in_p, c_mid_p)
    w2p = _fold_and_pack(w2, s2, c_mid_p, c_out_p)
    b1p = jnp.pad(b1.astype(jnp.float32), ((0, 0), (0, c_mid_p - c_mid)))
    b2p = jnp.pad(b2.astype(jnp.float32), ((0, 0), (0, c_out_p - c_out)))

    hp = he // 2
    if (tile_rows is not None and 2 <= tile_rows <= hp
            and hp % tile_rows == 0 and tile_rows % 2 == 0):
        th = tile_rows
    else:
        th = _pick_tile_rows(hp)

    y = _down_pallas(x, w1p, b1p, w2p, b2p, th)              # (N, Hp, Wp, c_out_p)
    return jnp.transpose(y[..., :c_out], (0, 3, 1, 2))       # NHWC -> NCHW (bf16)


def make_down_params(key, in_channels, out_channels, dtype=jnp.float32):
    """Deterministic synthetic parameters matching Down(in_ch, out_ch)."""
    mid = out_channels
    ks = jax.random.split(key, 10)

    def conv_init(k, shape):
        fan_in = shape[0] * shape[1] * shape[2]
        bound = 1.0 / (fan_in ** 0.5)
        return jax.random.uniform(k, shape, dtype, -bound, bound)

    def bn_fold(kg, kb, km, kv, c):
        gamma = jax.random.uniform(kg, (c,), dtype, 0.5, 1.5)
        beta = 0.1 * jax.random.normal(kb, (c,), dtype)
        mean = 0.1 * jax.random.normal(km, (c,), dtype)
        var = jax.random.uniform(kv, (c,), dtype, 0.5, 1.5)
        eps = 1e-5
        scale = gamma / jnp.sqrt(var + eps)
        bias = beta - mean * scale
        return scale.reshape(1, c), bias.reshape(1, c)

    w1 = conv_init(ks[0], (3, 3, in_channels, mid))                 # HWIO
    w2 = conv_init(ks[1], (3, 3, mid, out_channels))
    s1, b1 = bn_fold(ks[2], ks[3], ks[4], ks[5], mid)
    s2, b2 = bn_fold(ks[6], ks[7], ks[8], ks[9], out_channels)
    return w1, s1, b1, w2, s2, b2


# ------------------------- pure-JAX reference check --------------------------

def down_reference(x_nchw, w1, s1, b1, w2, s2, b2):
    """Reference mirroring the kernel's quantization points (bf16 conv operands,
    f32 accumulation, f32 BN-bias + exact-erf GELU)."""
    x = jnp.transpose(x_nchw, (0, 2, 3, 1)).astype(jnp.float32)
    _, h, w, _ = x.shape
    x = x[:, :(h // 2) * 2, :(w // 2) * 2, :]
    p = lax.reduce_window(x, -jnp.inf, lax.max,
                          (1, 2, 2, 1), (1, 2, 2, 1), "VALID")

    def block(hh, wt, s, b):
        wf = (wt.astype(jnp.float32)
              * s.reshape(1, 1, 1, -1).astype(jnp.float32)).astype(MATMUL_DTYPE)
        y = lax.conv_general_dilated(
            hh.astype(MATMUL_DTYPE), wf, (1, 1), "SAME",
            dimension_numbers=("NHWC", "HWIO", "NHWC"),
            preferred_element_type=jnp.float32)
        y = y + b[0].astype(jnp.float32)
        return 0.5 * y * (1.0 + lax.erf(y * 0.7071067811865476))

    hh = block(p, w1, s1, b1)
    hh = block(hh, w2, s2, b2)
    return jnp.transpose(hh, (0, 3, 1, 2))


# --------------------------------- main ---------------------------------------

if __name__ == "__main__":
    key = jax.random.PRNGKey(0)
    kx, kp = jax.random.split(key)

    N, CIN, H, W = 2, 4, 16, 16
    COUT = 8

    x = jax.random.normal(kx, (N, CIN, H, W), jnp.float32)   # NCHW like torch
    params = make_down_params(kp, CIN, COUT)

    ref = down_reference(x, *params)

    # exercise both the H-tiled path (2 row-tiles per image) and single-tile path
    for tr in (4, None):
        y = jax.block_until_ready(down_forward(x, *params, tile_rows=tr))
        assert y.shape == (N, COUT, H // 2, W // 2), y.shape
        err = float(jnp.max(jnp.abs(y.astype(jnp.float32) - ref)))
        # bf16 activations / output + EUP-approx reciprocal in erf -> bf16-scale tol
        assert err < 2e-2, f"tile_rows={tr}: mismatch vs reference, max_err={err}"

    print("KERNEL_OK")
</pallas_src>

<mosaic_0001>
module attributes {stable_mosaic.version = 11 : i64} {
  func.func @_down_kernel(%arg0: i32, %arg1: i32, %arg2: memref<1x8x16x4xbf16, #tpu.memory_space<vmem>>, %arg3: memref<1x4x16x4xbf16, #tpu.memory_space<vmem>>, %arg4: memref<1x4x16x4xbf16, #tpu.memory_space<vmem>>, %arg5: memref<9x128x128xbf16, #tpu.memory_space<vmem>>, %arg6: memref<1x128xf32, #tpu.memory_space<vmem>>, %arg7: memref<9x128x128xbf16, #tpu.memory_space<vmem>>, %arg8: memref<1x128xf32, #tpu.memory_space<vmem>>, %arg9: memref<1x4x8x128xbf16, #tpu.memory_space<vmem>>, %arg10: memref<8x10x128xbf16, #tpu.memory_space<vmem>>, %arg11: memref<6x10x128xbf16, #tpu.memory_space<vmem>>) attributes {dimension_semantics = [#tpu.dimension_semantics<parallel>, #tpu.dimension_semantics<parallel>], iteration_bounds = array<i64: 2, 2>, scalar_prefetch = 0 : i64, scratch_operands = 2 : i64, tpu.core_type = #tpu.core_type<tc>, window_params = [{transform_indices = @transform_0, window_bounds = array<i64: 1, 8, 16, 4>}, {transform_indices = @transform_1, window_bounds = array<i64: 1, 4, 16, 4>}, {transform_indices = @transform_2, window_bounds = array<i64: 1, 4, 16, 4>}, {pipeline_mode = #tpu.pipeline_mode<synchronous>, transform_indices = @transform_3, window_bounds = array<i64: 9, 128, 128>}, {pipeline_mode = #tpu.pipeline_mode<synchronous>, transform_indices = @transform_4, window_bounds = array<i64: 1, 128>}, {pipeline_mode = #tpu.pipeline_mode<synchronous>, transform_indices = @transform_5, window_bounds = array<i64: 9, 128, 128>}, {pipeline_mode = #tpu.pipeline_mode<synchronous>, transform_indices = @transform_6, window_bounds = array<i64: 1, 128>}, {transform_indices = @transform_7, window_bounds = array<i64: 1, 4, 8, 128>}]} {
    %c0 = arith.constant 0 : index
    %c0_0 = arith.constant 0 : index
    %c0_1 = arith.constant 0 : index
    %c0_2 = arith.constant 0 : index
    %0 = vector.load %arg2[%c0, %c0_0, %c0_1, %c0_2] : memref<1x8x16x4xbf16, #tpu.memory_space<vmem>>, vector<1x8x16x4xbf16>
    %1 = vector.shape_cast %0 : vector<1x8x16x4xbf16> to vector<8x16x4xbf16>
    %2 = vector.shape_cast %1 : vector<8x16x4xbf16> to vector<4x2x16x4xbf16>
    %cst = arith.constant dense<0xFF80> : vector<4x16x4xbf16>
    %3 = vector.multi_reduction <maximumf>, %2, %cst [1] : vector<4x2x16x4xbf16> to vector<4x16x4xbf16>
    %4 = vector.shape_cast %3 : vector<4x16x4xbf16> to vector<4x8x2x4xbf16>
    %cst_3 = arith.constant dense<0xFF80> : vector<4x8x4xbf16>
    %5 = vector.multi_reduction <maximumf>, %4, %cst_3 [2] : vector<4x8x2x4xbf16> to vector<4x8x4xbf16>
    %c0_4 = arith.constant 0 : index
    %c0_5 = arith.constant 0 : index
    %c0_6 = arith.constant 0 : index
    %c0_7 = arith.constant 0 : index
    %6 = vector.load %arg3[%c0_4, %c0_5, %c0_6, %c0_7] : memref<1x4x16x4xbf16, #tpu.memory_space<vmem>>, vector<1x4x16x4xbf16>
    %7 = vector.shape_cast %6 : vector<1x4x16x4xbf16> to vector<4x16x4xbf16>
    %8 = vector.shape_cast %7 : vector<4x16x4xbf16> to vector<2x2x16x4xbf16>
    %cst_8 = arith.constant dense<0xFF80> : vector<2x16x4xbf16>
    %9 = vector.multi_reduction <maximumf>, %8, %cst_8 [1] : vector<2x2x16x4xbf16> to vector<2x16x4xbf16>
    %10 = vector.shape_cast %9 : vector<2x16x4xbf16> to vector<2x8x2x4xbf16>
    %cst_9 = arith.constant dense<0xFF80> : vector<2x8x4xbf16>
    %11 = vector.multi_reduction <maximumf>, %10, %cst_9 [2] : vector<2x8x2x4xbf16> to vector<2x8x4xbf16>
    %c0_10 = arith.constant 0 : index
    %c0_11 = arith.constant 0 : index
    %c0_12 = arith.constant 0 : index
    %c0_13 = arith.constant 0 : index
    %12 = vector.load %arg4[%c0_10, %c0_11, %c0_12, %c0_13] : memref<1x4x16x4xbf16, #tpu.memory_space<vmem>>, vector<1x4x16x4xbf16>
    %13 = vector.shape_cast %12 : vector<1x4x16x4xbf16> to vector<4x16x4xbf16>
    %14 = vector.shape_cast %13 : vector<4x16x4xbf16> to vector<2x2x16x4xbf16>
    %cst_14 = arith.constant dense<0xFF80> : vector<2x16x4xbf16>
    %15 = vector.multi_reduction <maximumf>, %14, %cst_14 [1] : vector<2x2x16x4xbf16> to vector<2x16x4xbf16>
    %16 = vector.shape_cast %15 : vector<2x16x4xbf16> to vector<2x8x2x4xbf16>
    %cst_15 = arith.constant dense<0xFF80> : vector<2x8x4xbf16>
    %17 = vector.multi_reduction <maximumf>, %16, %cst_15 [2] : vector<2x8x2x4xbf16> to vector<2x8x4xbf16>
    %c0_i32 = arith.constant 0 : i32
    %18 = arith.cmpi sgt, %arg1, %c0_i32 : i32
    %cst_16 = arith.constant 0.000000e+00 : bf16
    %19 = vector.broadcast %cst_16 : bf16 to vector<2x8x4xbf16>
    %20 = arith.select %18, %11, %19 : vector<2x8x4xbf16>
    %c1_i32 = arith.constant 1 : i32
    %21 = arith.cmpi slt, %arg1, %c1_i32 : i32
    %cst_17 = arith.constant 0.000000e+00 : bf16
    %22 = vector.broadcast %cst_17 : bf16 to vector<2x8x4xbf16>
    %23 = arith.select %21, %17, %22 : vector<2x8x4xbf16>
    %cst_18 = arith.constant 0.000000e+00 : bf16
    %24 = vector.broadcast %cst_18 : bf16 to vector<8x1x128xbf16>
    %c0_19 = arith.constant 0 : index
    %c0_20 = arith.constant 0 : index
    %c0_21 = arith.constant 0 : index
    %25 = vector.load %arg10[%c0_19, %c0_20, %c0_21] : memref<8x10x128xbf16, #tpu.memory_space<vmem>>, vector<8x1x128xbf16>
    tpu.vector_store %arg10[%c0_19, %c0_20, %c0_21], %24 {strides = array<i32>} : memref<8x10x128xbf16, #tpu.memory_space<vmem>>, vector<8x1x128xbf16>,
    %c0_22 = arith.constant 0 : index
    %c9 = arith.constant 9 : index
    %c0_23 = arith.constant 0 : index
    %26 = vector.load %arg10[%c0_22, %c9, %c0_23] : memref<8x10x128xbf16, #tpu.memory_space<vmem>>, vector<8x1x128xbf16>
    tpu.vector_store %arg10[%c0_22, %c9, %c0_23], %24 {strides = array<i32>} : memref<8x10x128xbf16, #tpu.memory_space<vmem>>, vector<8x1x128xbf16>,
    %cst_24 = arith.constant 0.000000e+00 : bf16
    %27 = vector.broadcast %cst_24 : bf16 to vector<2x8x124xbf16>
    %28 = tpu.concatenate %20, %27 in 2 : vector<2x8x4xbf16>, vector<2x8x124xbf16> -> vector<2x8x128xbf16>
    %c0_25 = arith.constant 0 : index
    %c1 = arith.constant 1 : index
    %c0_26 = arith.constant 0 : index
    %29 = vector.load %arg10[%c0_25, %c1, %c0_26] : memref<8x10x128xbf16, #tpu.memory_space<vmem>>, vector<2x8x128xbf16>
    tpu.vector_store %arg10[%c0_25, %c1, %c0_26], %28 {strides = array<i32>} : memref<8x10x128xbf16, #tpu.memory_space<vmem>>, vector<2x8x128xbf16>,
    %cst_27 = arith.constant 0.000000e+00 : bf16
    %30 = vector.broadcast %cst_27 : bf16 to vector<4x8x124xbf16>
    %31 = tpu.concatenate %5, %30 in 2 : vector<4x8x4xbf16>, vector<4x8x124xbf16> -> vector<4x8x128xbf16>
    %c2 = arith.constant 2 : index
    %c1_28 = arith.constant 1 : index
    %c0_29 = arith.constant 0 : index
    %32 = vector.load %arg10[%c2, %c1_28, %c0_29] : memref<8x10x128xbf16, #tpu.memory_space<vmem>>, vector<4x8x128xbf16>
    tpu.vector_store %arg10[%c2, %c1_28, %c0_29], %31 {strides = array<i32>} : memref<8x10x128xbf16, #tpu.memory_space<vmem>>, vector<4x8x128xbf16>,
    %cst_30 = arith.constant 0.000000e+00 : bf16
    %33 = vector.broadcast %cst_30 : bf16 to vector<2x8x124xbf16>
    %34 = tpu.concatenate %23, %33 in 2 : vector<2x8x4xbf16>, vector<2x8x124xbf16> -> vector<2x8x128xbf16>
    %c6 = arith.constant 6 : index
    %c1_31 = arith.constant 1 : index
    %c0_32 = arith.constant 0 : index
    %35 = vector.load %arg10[%c6, %c1_31, %c0_32] : memref<8x10x128xbf16, #tpu.memory_space<vmem>>, vector<2x8x128xbf16>
    tpu.vector_store %arg10[%c6, %c1_31, %c0_32], %34 {strides = array<i32>} : memref<8x10x128xbf16, #tpu.memory_space<vmem>>, vector<2x8x128xbf16>,
    %c0_33 = arith.constant 0 : index
    %c0_34 = arith.constant 0 : index
    %c0_35 = arith.constant 0 : index
    %36 = vector.load %arg10[%c0_33, %c0_34, %c0_35] : memref<8x10x128xbf16, #tpu.memory_space<vmem>>, vector<6x8x128xbf16>
    %37 = vector.shape_cast %36 : vector<6x8x128xbf16> to vector<48x128xbf16>
    %c0_36 = arith.constant 0 : index
    %c0_37 = arith.constant 0 : index
    %c0_38 = arith.constant 0 : index
    %38 = vector.load %arg5[%c0_36, %c0_37, %c0_38] : memref<9x128x128xbf16, #tpu.memory_space<vmem>>, vector<1x128x128xbf16>
    %39 = vector.shape_cast %38 : vector<1x128x128xbf16> to vector<128x128xbf16>
    %cst_39 = arith.constant dense<0.000000e+00> : vector<48x128xf32>
    %40 = tpu.matmul %37, %39, %cst_39 {dimension_numbers = #tpu.dot_dimension_numbers<[1], [0], [0], [1], [0, 0, 1, 1], [], []>} : vector<48x128xbf16>, vector<128x128xbf16>, vector<48x128xf32> -> vector<48x128xf32>
    %c0_40 = arith.constant 0 : index
    %c1_41 = arith.constant 1 : index
    %c0_42 = arith.constant 0 : index
    %41 = vector.load %arg10[%c0_40, %c1_41, %c0_42] : memref<8x10x128xbf16, #tpu.memory_space<vmem>>, vector<6x8x128xbf16>
    %42 = vector.shape_cast %41 : vector<6x8x128xbf16> to vector<48x128xbf16>
    %c1_43 = arith.constant 1 : index
    %c0_44 = arith.constant 0 : index
    %c0_45 = arith.constant 0 : index
    %43 = vector.load %arg5[%c1_43, %c0_44, %c0_45] : memref<9x128x128xbf16, #tpu.memory_space<vmem>>, vector<1x128x128xbf16>
    %44 = vector.shape_cast %43 : vector<1x128x128xbf16> to vector<128x128xbf16>
    %cst_46 = arith.constant dense<0.000000e+00> : vector<48x128xf32>
    %45 = tpu.matmul %42, %44, %cst_46 {dimension_numbers = #tpu.dot_dimension_numbers<[1], [0], [0], [1], [0, 0, 1, 1], [], []>} : vector<48x128xbf16>, vector<128x128xbf16>, vector<48x128xf32> -> vector<48x128xf32>
    %46 = arith.addf %40, %45 : vector<48x128xf32>
    %c0_47 = arith.constant 0 : index
    %c2_48 = arith.constant 2 : index
    %c0_49 = arith.constant 0 : index
    %47 = vector.load %arg10[%c0_47, %c2_48, %c0_49] : memref<8x10x128xbf16, #tpu.memory_space<vmem>>, vector<6x8x128xbf16>
    %48 = vector.shape_cast %47 : vector<6x8x128xbf16> to vector<48x128xbf16>
    %c2_50 = arith.constant 2 : index
    %c0_51 = arith.constant 0 : index
    %c0_52 = arith.constant 0 : index
    %49 = vector.load %arg5[%c2_50, %c0_51, %c0_52] : memref<9x128x128xbf16, #tpu.memory_space<vmem>>, vector<1x128x128xbf16>
    %50 = vector.shape_cast %49 : vector<1x128x128xbf16> to vector<128x128xbf16>
    %cst_53 = arith.constant dense<0.000000e+00> : vector<48x128xf32>
    %51 = tpu.matmul %48, %50, %cst_53 {dimension_numbers = #tpu.dot_dimension_numbers<[1], [0], [0], [1], [0, 0, 1, 1], [], []>} : vector<48x128xbf16>, vector<128x128xbf16>, vector<48x128xf32> -> vector<48x128xf32>
    %52 = arith.addf %46, %51 : vector<48x128xf32>
    %c1_54 = arith.constant 1 : index
    %c0_55 = arith.constant 0 : index
    %c0_56 = arith.constant 0 : index
    %53 = vector.load %arg10[%c1_54, %c0_55, %c0_56] : memref<8x10x128xbf16, #tpu.memory_space<vmem>>, vector<6x8x128xbf16>
    %54 = vector.shape_cast %53 : vector<6x8x128xbf16> to vector<48x128xbf16>
    %c3 = arith.constant 3 : index
    %c0_57 = arith.constant 0 : index
    %c0_58 = arith.constant 0 : index
    %55 = vector.load %arg5[%c3, %c0_57, %c0_58] : memref<9x128x128xbf16, #tpu.memory_space<vmem>>, vector<1x128x128xbf16>
    %56 = vector.shape_cast %55 : vector<1x128x128xbf16> to vector<128x128xbf16>
    %cst_59 = arith.constant dense<0.000000e+00> : vector<48x128xf32>
    %57 = tpu.matmul %54, %56, %cst_59 {dimension_numbers = #tpu.dot_dimension_numbers<[1], [0], [0], [1], [0, 0, 1, 1], [], []>} : vector<48x128xbf16>, vector<128x128xbf16>, vector<48x128xf32> -> vector<48x128xf32>
    %58 = arith.addf %52, %57 : vector<48x128xf32>
    %c1_60 = arith.constant 1 : index
    %c1_61 = arith.constant 1 : index
    %c0_62 = arith.constant 0 : index
    %59 = vector.load %arg10[%c1_60, %c1_61, %c0_62] : memref<8x10x128xbf16, #tpu.memory_space<vmem>>, vector<6x8x128xbf16>
    %60 = vector.shape_cast %59 : vector<6x8x128xbf16> to vector<48x128xbf16>
    %c4 = arith.constant 4 : index
    %c0_63 = arith.constant 0 : index
    %c0_64 = arith.constant 0 : index
    %61 = vector.load %arg5[%c4, %c0_63, %c0_64] : memref<9x128x128xbf16, #tpu.memory_space<vmem>>, vector<1x128x128xbf16>
    %62 = vector.shape_cast %61 : vector<1x128x128xbf16> to vector<128x128xbf16>
    %cst_65 = arith.constant dense<0.000000e+00> : vector<48x128xf32>
    %63 = tpu.matmul %60, %62, %cst_65 {dimension_numbers = #tpu.dot_dimension_numbers<[1], [0], [0], [1], [0, 0, 1, 1], [], []>} : vector<48x128xbf16>, vector<128x128xbf16>, vector<48x128xf32> -> vector<48x128xf32>
    %64 = arith.addf %58, %63 : vector<48x128xf32>
    %c1_66 = arith.constant 1 : index
    %c2_67 = arith.constant 2 : index
    %c0_68 = arith.constant 0 : index
    %65 = vector.load %arg10[%c1_66, %c2_67, %c0_68] : memref<8x10x128xbf16, #tpu.memory_space<vmem>>, vector<6x8x128xbf16>
    %66 = vector.shape_cast %65 : vector<6x8x128xbf16> to vector<48x128xbf16>
    %c5 = arith.constant 5 : index
    %c0_69 = arith.constant 0 : index
    %c0_70 = arith.constant 0 : index
    %67 = vector.load %arg5[%c5, %c0_69, %c0_70] : memref<9x128x128xbf16, #tpu.memory_space<vmem>>, vector<1x128x128xbf16>
    %68 = vector.shape_cast %67 : vector<1x128x128xbf16> to vector<128x128xbf16>
    %cst_71 = arith.constant dense<0.000000e+00> : vector<48x128xf32>
    %69 = tpu.matmul %66, %68, %cst_71 {dimension_numbers = #tpu.dot_dimension_numbers<[1], [0], [0], [1], [0, 0, 1, 1], [], []>} : vector<48x128xbf16>, vector<128x128xbf16>, vector<48x128xf32> -> vector<48x128xf32>
    %70 = arith.addf %64, %69 : vector<48x128xf32>
    %c2_72 = arith.constant 2 : index
    %c0_73 = arith.constant 0 : index
    %c0_74 = arith.constant 0 : index
    %71 = vector.load %arg10[%c2_72, %c0_73, %c0_74] : memref<8x10x128xbf16, #tpu.memory_space<vmem>>, vector<6x8x128xbf16>
    %72 = vector.shape_cast %71 : vector<6x8x128xbf16> to vector<48x128xbf16>
    %c6_75 = arith.constant 6 : index
    %c0_76 = arith.constant 0 : index
    %c0_77 = arith.constant 0 : index
    %73 = vector.load %arg5[%c6_75, %c0_76, %c0_77] : memref<9x128x128xbf16, #tpu.memory_space<vmem>>, vector<1x128x128xbf16>
    %74 = vector.shape_cast %73 : vector<1x128x128xbf16> to vector<128x128xbf16>
    %cst_78 = arith.constant dense<0.000000e+00> : vector<48x128xf32>
    %75 = tpu.matmul %72, %74, %cst_78 {dimension_numbers = #tpu.dot_dimension_numbers<[1], [0], [0], [1], [0, 0, 1, 1], [], []>} : vector<48x128xbf16>, vector<128x128xbf16>, vector<48x128xf32> -> vector<48x128xf32>
    %76 = arith.addf %70, %75 : vector<48x128xf32>
    %c2_79 = arith.constant 2 : index
    %c1_80 = arith.constant 1 : index
    %c0_81 = arith.constant 0 : index
    %77 = vector.load %arg10[%c2_79, %c1_80, %c0_81] : memref<8x10x128xbf16, #tpu.memory_space<vmem>>, vector<6x8x128xbf16>
    %78 = vector.shape_cast %77 : vector<6x8x128xbf16> to vector<48x128xbf16>
    %c7 = arith.constant 7 : index
    %c0_82 = arith.constant 0 : index
    %c0_83 = arith.constant 0 : index
    %79 = vector.load %arg5[%c7, %c0_82, %c0_83] : memref<9x128x128xbf16, #tpu.memory_space<vmem>>, vector<1x128x128xbf16>
    %80 = vector.shape_cast %79 : vector<1x128x128xbf16> to vector<128x128xbf16>
    %cst_84 = arith.constant dense<0.000000e+00> : vector<48x128xf32>
    %81 = tpu.matmul %78, %80, %cst_84 {dimension_numbers = #tpu.dot_dimension_numbers<[1], [0], [0], [1], [0, 0, 1, 1], [], []>} : vector<48x128xbf16>, vector<128x128xbf16>, vector<48x128xf32> -> vector<48x128xf32>
    %82 = arith.addf %76, %81 : vector<48x128xf32>
    %c2_85 = arith.constant 2 : index
    %c2_86 = arith.constant 2 : index
    %c0_87 = arith.constant 0 : index
    %83 = vector.load %arg10[%c2_85, %c2_86, %c0_87] : memref<8x10x128xbf16, #tpu.memory_space<vmem>>, vector<6x8x128xbf16>
    %84 = vector.shape_cast %83 : vector<6x8x128xbf16> to vector<48x128xbf16>
    %c8 = arith.constant 8 : index
    %c0_88 = arith.constant 0 : index
    %c0_89 = arith.constant 0 : index
    %85 = vector.load %arg5[%c8, %c0_88, %c0_89] : memref<9x128x128xbf16, #tpu.memory_space<vmem>>, vector<1x128x128xbf16>
    %86 = vector.shape_cast %85 : vector<1x128x128xbf16> to vector<128x128xbf16>
    %cst_90 = arith.constant dense<0.000000e+00> : vector<48x128xf32>
    %87 = tpu.matmul %84, %86, %cst_90 {dimension_numbers = #tpu.dot_dimension_numbers<[1], [0], [0], [1], [0, 0, 1, 1], [], []>} : vector<48x128xbf16>, vector<128x128xbf16>, vector<48x128xf32> -> vector<48x128xf32>
    %88 = arith.addf %82, %87 : vector<48x128xf32>
    %c0_91 = arith.constant 0 : index
    %c0_92 = arith.constant 0 : index
    %89 = vector.load %arg6[%c0_91, %c0_92] : memref<1x128xf32, #tpu.memory_space<vmem>>, vector<1x128xf32>
    %90 = vector.broadcast %89 : vector<1x128xf32> to vector<48x128xf32>
    %91 = arith.addf %88, %90 : vector<48x128xf32>
    %cst_93 = arith.constant 5.000000e-01 : f32
    %92 = vector.broadcast %cst_93 : f32 to vector<48x128xf32>
    %93 = arith.mulf %92, %91 : vector<48x128xf32>
    %cst_94 = arith.constant 0.707106769 : f32
    %94 = vector.broadcast %cst_94 : f32 to vector<48x128xf32>
    %95 = arith.mulf %91, %94 : vector<48x128xf32>
    %cst_95 = arith.constant 0.000000e+00 : f32
    %96 = vector.broadcast %cst_95 : f32 to vector<48x128xf32>
    %97 = arith.cmpf oge, %95, %96 : vector<48x128xf32>
    %cst_96 = arith.constant 1.000000e+00 : f32
    %cst_97 = arith.constant -1.000000e+00 : f32
    %98 = vector.broadcast %cst_96 : f32 to vector<48x128xf32>
    %99 = vector.broadcast %cst_97 : f32 to vector<48x128xf32>
    %100 = arith.select %97, %98, %99 : vector<48x128xi1>, vector<48x128xf32>
    %101 = math.absf %95 : vector<48x128xf32>
    %cst_98 = arith.constant 0.327591091 : f32
    %102 = vector.broadcast %cst_98 : f32 to vector<48x128xf32>
    %103 = arith.mulf %102, %101 : vector<48x128xf32>
    %cst_99 = arith.constant 1.000000e+00 : f32
    %104 = vector.broadcast %cst_99 : f32 to vector<48x128xf32>
    %105 = arith.addf %104, %103 : vector<48x128xf32>
    %106 = tpu.reciprocal %105 {approx = true} : vector<48x128xf32> -> vector<48x128xf32>
    %cst_100 = arith.constant 1.06140542 : f32
    %107 = vector.broadcast %cst_100 : f32 to vector<48x128xf32>
    %108 = arith.mulf %107, %106 : vector<48x128xf32>
    %cst_101 = arith.constant -1.45315206 : f32
    %109 = vector.broadcast %cst_101 : f32 to vector<48x128xf32>
    %110 = arith.addf %108, %109 : vector<48x128xf32>
    %111 = arith.mulf %110, %106 : vector<48x128xf32>
    %cst_102 = arith.constant 1.42141378 : f32
    %112 = vector.broadcast %cst_102 : f32 to vector<48x128xf32>
    %113 = arith.addf %111, %112 : vector<48x128xf32>
    %114 = arith.mulf %113, %106 : vector<48x128xf32>
    %cst_103 = arith.constant -0.284496725 : f32
    %115 = vector.broadcast %cst_103 : f32 to vector<48x128xf32>
    %116 = arith.addf %114, %115 : vector<48x128xf32>
    %117 = arith.mulf %116, %106 : vector<48x128xf32>
    %cst_104 = arith.constant 0.254829586 : f32
    %118 = vector.broadcast %cst_104 : f32 to vector<48x128xf32>
    %119 = arith.addf %117, %118 : vector<48x128xf32>
    %120 = arith.mulf %119, %106 : vector<48x128xf32>
    %cst_105 = arith.constant 0.000000e+00 : f32
    %121 = vector.broadcast %cst_105 : f32 to vector<48x128xf32>
    %122 = arith.subf %121, %101 : vector<48x128xf32>
    %123 = arith.mulf %122, %101 : vector<48x128xf32>
    %124 = math.exp %123 : vector<48x128xf32>
    %125 = arith.mulf %120, %124 : vector<48x128xf32>
    %cst_106 = arith.constant 1.000000e+00 : f32
    %126 = vector.broadcast %cst_106 : f32 to vector<48x128xf32>
    %127 = arith.subf %126, %125 : vector<48x128xf32>
    %128 = arith.mulf %100, %127 : vector<48x128xf32>
    %cst_107 = arith.constant 1.000000e+00 : f32
    %129 = vector.broadcast %cst_107 : f32 to vector<48x128xf32>
    %130 = arith.addf %129, %128 : vector<48x128xf32>
    %131 = arith.mulf %93, %130 : vector<48x128xf32>
    %132 = vector.shape_cast %131 : vector<48x128xf32> to vector<6x8x128xf32>
    %133 = arith.truncf %132 : vector<6x8x128xf32> to vector<6x8x128xbf16>
    %cst_108 = arith.constant 0.000000e+00 : bf16
    %134 = vector.broadcast %cst_108 : bf16 to vector<6x1x128xbf16>
    %c0_109 = arith.constant 0 : index
    %c0_110 = arith.constant 0 : index
    %c0_111 = arith.constant 0 : index
    %135 = vector.load %arg11[%c0_109, %c0_110, %c0_111] : memref<6x10x128xbf16, #tpu.memory_space<vmem>>, vector<6x1x128xbf16>
    tpu.vector_store %arg11[%c0_109, %c0_110, %c0_111], %134 {strides = array<i32>} : memref<6x10x128xbf16, #tpu.memory_space<vmem>>, vector<6x1x128xbf16>,
    %c0_112 = arith.constant 0 : index
    %c9_113 = arith.constant 9 : index
    %c0_114 = arith.constant 0 : index
    %136 = vector.load %arg11[%c0_112, %c9_113, %c0_114] : memref<6x10x128xbf16, #tpu.memory_space<vmem>>, vector<6x1x128xbf16>
    tpu.vector_store %arg11[%c0_112, %c9_113, %c0_114], %134 {strides = array<i32>} : memref<6x10x128xbf16, #tpu.memory_space<vmem>>, vector<6x1x128xbf16>,
    %cst_115 = arith.constant 0.000000e+00 : bf16
    %137 = vector.broadcast %cst_115 : bf16 to vector<1x8x128xbf16>
    %c0_i32_116 = arith.constant 0 : i32
    %138 = arith.cmpi sgt, %arg1, %c0_i32_116 : i32
    %139 = vector.extract_strided_slice %133 {offsets = [0, 0, 0], sizes = [1, 8, 128], strides = [1, 1, 1]} : vector<6x8x128xbf16> to vector<1x8x128xbf16>
    %140 = arith.select %138, %139, %137 : vector<1x8x128xbf16>
    %c0_117 = arith.constant 0 : index
    %c1_118 = arith.constant 1 : index
    %c0_119 = arith.constant 0 : index
    %141 = vector.load %arg11[%c0_117, %c1_118, %c0_119] : memref<6x10x128xbf16, #tpu.memory_space<vmem>>, vector<1x8x128xbf16>
    tpu.vector_store %arg11[%c0_117, %c1_118, %c0_119], %140 {strides = array<i32>} : memref<6x10x128xbf16, #tpu.memory_space<vmem>>, vector<1x8x128xbf16>,
    %142 = vector.extract_strided_slice %133 {offsets = [1, 0, 0], sizes = [4, 8, 128], strides = [1, 1, 1]} : vector<6x8x128xbf16> to vector<4x8x128xbf16>
    %c1_120 = arith.constant 1 : index
    %c1_121 = arith.constant 1 : index
    %c0_122 = arith.constant 0 : index
    %143 = vector.load %arg11[%c1_120, %c1_121, %c0_122] : memref<6x10x128xbf16, #tpu.memory_space<vmem>>, vector<4x8x128xbf16>
    tpu.vector_store %arg11[%c1_120, %c1_121, %c0_122], %142 {strides = array<i32>} : memref<6x10x128xbf16, #tpu.memory_space<vmem>>, vector<4x8x128xbf16>,
    %c1_i32_123 = arith.constant 1 : i32
    %144 = arith.cmpi slt, %arg1, %c1_i32_123 : i32
    %145 = vector.extract_strided_slice %133 {offsets = [5, 0, 0], sizes = [1, 8, 128], strides = [1, 1, 1]} : vector<6x8x128xbf16> to vector<1x8x128xbf16>
    %146 = arith.select %144, %145, %137 : vector<1x8x128xbf16>
    %c5_124 = arith.constant 5 : index
    %c1_125 = arith.constant 1 : index
    %c0_126 = arith.constant 0 : index
    %147 = vector.load %arg11[%c5_124, %c1_125, %c0_126] : memref<6x10x128xbf16, #tpu.memory_space<vmem>>, vector<1x8x128xbf16>
    tpu.vector_store %arg11[%c5_124, %c1_125, %c0_126], %146 {strides = array<i32>} : memref<6x10x128xbf16, #tpu.memory_space<vmem>>, vector<1x8x128xbf16>,
    %c0_127 = arith.constant 0 : index
    %c0_128 = arith.constant 0 : index
    %c0_129 = arith.constant 0 : index
    %148 = vector.load %arg11[%c0_127, %c0_128, %c0_129] : memref<6x10x128xbf16, #tpu.memory_space<vmem>>, vector<4x8x128xbf16>
    %149 = vector.shape_cast %148 : vector<4x8x128xbf16> to vector<32x128xbf16>
    %c0_130 = arith.constant 0 : index
    %c0_131 = arith.constant 0 : index
    %c0_132 = arith.constant 0 : index
    %150 = vector.load %arg7[%c0_130, %c0_131, %c0_132] : memref<9x128x128xbf16, #tpu.memory_space<vmem>>, vector<1x128x128xbf16>
    %151 = vector.shape_cast %150 : vector<1x128x128xbf16> to vector<128x128xbf16>
    %cst_133 = arith.constant dense<0.000000e+00> : vector<32x128xf32>
    %152 = tpu.matmul %149, %151, %cst_133 {dimension_numbers = #tpu.dot_dimension_numbers<[1], [0], [0], [1], [0, 0, 1, 1], [], []>} : vector<32x128xbf16>, vector<128x128xbf16>, vector<32x128xf32> -> vector<32x128xf32>
    %c0_134 = arith.constant 0 : index
    %c1_135 = arith.constant 1 : index
    %c0_136 = arith.constant 0 : index
    %153 = vector.load %arg11[%c0_134, %c1_135, %c0_136] : memref<6x10x128xbf16, #tpu.memory_space<vmem>>, vector<4x8x128xbf16>
    %154 = vector.shape_cast %153 : vector<4x8x128xbf16> to vector<32x128xbf16>
    %c1_137 = arith.constant 1 : index
    %c0_138 = arith.constant 0 : index
    %c0_139 = arith.constant 0 : index
    %155 = vector.load %arg7[%c1_137, %c0_138, %c0_139] : memref<9x128x128xbf16, #tpu.memory_space<vmem>>, vector<1x128x128xbf16>
    %156 = vector.shape_cast %155 : vector<1x128x128xbf16> to vector<128x128xbf16>
    %cst_140 = arith.constant dense<0.000000e+00> : vector<32x128xf32>
    %157 = tpu.matmul %154, %156, %cst_140 {dimension_numbers = #tpu.dot_dimension_numbers<[1], [0], [0], [1], [0, 0, 1, 1], [], []>} : vector<32x128xbf16>, vector<128x128xbf16>, vector<32x128xf32> -> vector<32x128xf32>
    %158 = arith.addf %152, %157 : vector<32x128xf32>
    %c0_141 = arith.constant 0 : index
    %c2_142 = arith.constant 2 : index
    %c0_143 = arith.constant 0 : index
    %159 = vector.load %arg11[%c0_141, %c2_142, %c0_143] : memref<6x10x128xbf16, #tpu.memory_space<vmem>>, vector<4x8x128xbf16>
    %160 = vector.shape_cast %159 : vector<4x8x128xbf16> to vector<32x128xbf16>
    %c2_144 = arith.constant 2 : index
    %c0_145 = arith.constant 0 : index
    %c0_146 = arith.constant 0 : index
    %161 = vector.load %arg7[%c2_144, %c0_145, %c0_146] : memref<9x128x128xbf16, #tpu.memory_space<vmem>>, vector<1x128x128xbf16>
    %162 = vector.shape_cast %161 : vector<1x128x128xbf16> to vector<128x128xbf16>
    %cst_147 = arith.constant dense<0.000000e+00> : vector<32x128xf32>
    %163 = tpu.matmul %160, %162, %cst_147 {dimension_numbers = #tpu.dot_dimension_numbers<[1], [0], [0], [1], [0, 0, 1, 1], [], []>} : vector<32x128xbf16>, vector<128x128xbf16>, vector<32x128xf32> -> vector<32x128xf32>
    %164 = arith.addf %158, %163 : vector<32x128xf32>
    %c1_148 = arith.constant 1 : index
    %c0_149 = arith.constant 0 : index
    %c0_150 = arith.constant 0 : index
    %165 = vector.load %arg11[%c1_148, %c0_149, %c0_150] : memref<6x10x128xbf16, #tpu.memory_space<vmem>>, vector<4x8x128xbf16>
    %166 = vector.shape_cast %165 : vector<4x8x128xbf16> to vector<32x128xbf16>
    %c3_151 = arith.constant 3 : index
    %c0_152 = arith.constant 0 : index
    %c0_153 = arith.constant 0 : index
    %167 = vector.load %arg7[%c3_151, %c0_152, %c0_153] : memref<9x128x128xbf16, #tpu.memory_space<vmem>>, vector<1x128x128xbf16>
    %168 = vector.shape_cast %167 : vector<1x128x128xbf16> to vector<128x128xbf16>
    %cst_154 = arith.constant dense<0.000000e+00> : vector<32x128xf32>
    %169 = tpu.matmul %166, %168, %cst_154 {dimension_numbers = #tpu.dot_dimension_numbers<[1], [0], [0], [1], [0, 0, 1, 1], [], []>} : vector<32x128xbf16>, vector<128x128xbf16>, vector<32x128xf32> -> vector<32x128xf32>
    %170 = arith.addf %164, %169 : vector<32x128xf32>
    %c1_155 = arith.constant 1 : index
    %c1_156 = arith.constant 1 : index
    %c0_157 = arith.constant 0 : index
    %171 = vector.load %arg11[%c1_155, %c1_156, %c0_157] : memref<6x10x128xbf16, #tpu.memory_space<vmem>>, vector<4x8x128xbf16>
    %172 = vector.shape_cast %171 : vector<4x8x128xbf16> to vector<32x128xbf16>
    %c4_158 = arith.constant 4 : index
    %c0_159 = arith.constant 0 : index
    %c0_160 = arith.constant 0 : index
    %173 = vector.load %arg7[%c4_158, %c0_159, %c0_160] : memref<9x128x128xbf16, #tpu.memory_space<vmem>>, vector<1x128x128xbf16>
    %174 = vector.shape_cast %173 : vector<1x128x128xbf16> to vector<128x128xbf16>
    %cst_161 = arith.constant dense<0.000000e+00> : vector<32x128xf32>
    %175 = tpu.matmul %172, %174, %cst_161 {dimension_numbers = #tpu.dot_dimension_numbers<[1], [0], [0], [1], [0, 0, 1, 1], [], []>} : vector<32x128xbf16>, vector<128x128xbf16>, vector<32x128xf32> -> vector<32x128xf32>
    %176 = arith.addf %170, %175 : vector<32x128xf32>
    %c1_162 = arith.constant 1 : index
    %c2_163 = arith.constant 2 : index
    %c0_164 = arith.constant 0 : index
    %177 = vector.load %arg11[%c1_162, %c2_163, %c0_164] : memref<6x10x128xbf16, #tpu.memory_space<vmem>>, vector<4x8x128xbf16>
    %178 = vector.shape_cast %177 : vector<4x8x128xbf16> to vector<32x128xbf16>
    %c5_165 = arith.constant 5 : index
    %c0_166 = arith.constant 0 : index
    %c0_167 = arith.constant 0 : index
    %179 = vector.load %arg7[%c5_165, %c0_166, %c0_167] : memref<9x128x128xbf16, #tpu.memory_space<vmem>>, vector<1x128x128xbf16>
    %180 = vector.shape_cast %179 : vector<1x128x128xbf16> to vector<128x128xbf16>
    %cst_168 = arith.constant dense<0.000000e+00> : vector<32x128xf32>
    %181 = tpu.matmul %178, %180, %cst_168 {dimension_numbers = #tpu.dot_dimension_numbers<[1], [0], [0], [1], [0, 0, 1, 1], [], []>} : vector<32x128xbf16>, vector<128x128xbf16>, vector<32x128xf32> -> vector<32x128xf32>
    %182 = arith.addf %176, %181 : vector<32x128xf32>
    %c2_169 = arith.constant 2 : index
    %c0_170 = arith.constant 0 : index
    %c0_171 = arith.constant 0 : index
    %183 = vector.load %arg11[%c2_169, %c0_170, %c0_171] : memref<6x10x128xbf16, #tpu.memory_space<vmem>>, vector<4x8x128xbf16>
    %184 = vector.shape_cast %183 : vector<4x8x128xbf16> to vector<32x128xbf16>
    %c6_172 = arith.constant 6 : index
    %c0_173 = arith.constant 0 : index
    %c0_174 = arith.constant 0 : index
    %185 = vector.load %arg7[%c6_172, %c0_173, %c0_174] : memref<9x128x128xbf16, #tpu.memory_space<vmem>>, vector<1x128x128xbf16>
    %186 = vector.shape_cast %185 : vector<1x128x128xbf16> to vector<128x128xbf16>
    %cst_175 = arith.constant dense<0.000000e+00> : vector<32x128xf32>
    %187 = tpu.matmul %184, %186, %cst_175 {dimension_numbers = #tpu.dot_dimension_numbers<[1], [0], [0], [1], [0, 0, 1, 1], [], []>} : vector<32x128xbf16>, vector<128x128xbf16>, vector<32x128xf32> -> vector<32x128xf32>
    %188 = arith.addf %182, %187 : vector<32x128xf32>
    %c2_176 = arith.constant 2 : index
    %c1_177 = arith.constant 1 : index
    %c0_178 = arith.constant 0 : index
    %189 = vector.load %arg11[%c2_176, %c1_177, %c0_178] : memref<6x10x128xbf16, #tpu.memory_space<vmem>>, vector<4x8x128xbf16>
    %190 = vector.shape_cast %189 : vector<4x8x128xbf16> to vector<32x128xbf16>
    %c7_179 = arith.constant 7 : index
    %c0_180 = arith.constant 0 : index
    %c0_181 = arith.constant 0 : index
    %191 = vector.load %arg7[%c7_179, %c0_180, %c0_181] : memref<9x128x128xbf16, #tpu.memory_space<vmem>>, vector<1x128x128xbf16>
    %192 = vector.shape_cast %191 : vector<1x128x128xbf16> to vector<128x128xbf16>
    %cst_182 = arith.constant dense<0.000000e+00> : vector<32x128xf32>
    %193 = tpu.matmul %190, %192, %cst_182 {dimension_numbers = #tpu.dot_dimension_numbers<[1], [0], [0], [1], [0, 0, 1, 1], [], []>} : vector<32x128xbf16>, vector<128x128xbf16>, vector<32x128xf32> -> vector<32x128xf32>
    %194 = arith.addf %188, %193 : vector<32x128xf32>
    %c2_183 = arith.constant 2 : index
    %c2_184 = arith.constant 2 : index
    %c0_185 = arith.constant 0 : index
    %195 = vector.load %arg11[%c2_183, %c2_184, %c0_185] : memref<6x10x128xbf16, #tpu.memory_space<vmem>>, vector<4x8x128xbf16>
    %196 = vector.shape_cast %195 : vector<4x8x128xbf16> to vector<32x128xbf16>
    %c8_186 = arith.constant 8 : index
    %c0_187 = arith.constant 0 : index
    %c0_188 = arith.constant 0 : index
    %197 = vector.load %arg7[%c8_186, %c0_187, %c0_188] : memref<9x128x128xbf16, #tpu.memory_space<vmem>>, vector<1x128x128xbf16>
    %198 = vector.shape_cast %197 : vector<1x128x128xbf16> to vector<128x128xbf16>
    %cst_189 = arith.constant dense<0.000000e+00> : vector<32x128xf32>
    %199 = tpu.matmul %196, %198, %cst_189 {dimension_numbers = #tpu.dot_dimension_numbers<[1], [0], [0], [1], [0, 0, 1, 1], [], []>} : vector<32x128xbf16>, vector<128x128xbf16>, vector<32x128xf32> -> vector<32x128xf32>
    %200 = arith.addf %194, %199 : vector<32x128xf32>
    %c0_190 = arith.constant 0 : index
    %c0_191 = arith.constant 0 : index
    %201 = vector.load %arg8[%c0_190, %c0_191] : memref<1x128xf32, #tpu.memory_space<vmem>>, vector<1x128xf32>
    %202 = vector.broadcast %201 : vector<1x128xf32> to vector<32x128xf32>
    %203 = arith.addf %200, %202 : vector<32x128xf32>
    %cst_192 = arith.constant 5.000000e-01 : f32
    %204 = vector.broadcast %cst_192 : f32 to vector<32x128xf32>
    %205 = arith.mulf %204, %203 : vector<32x128xf32>
    %cst_193 = arith.constant 0.707106769 : f32
    %206 = vector.broadcast %cst_193 : f32 to vector<32x128xf32>
    %207 = arith.mulf %203, %206 : vector<32x128xf32>
    %cst_194 = arith.constant 0.000000e+00 : f32
    %208 = vector.broadcast %cst_194 : f32 to vector<32x128xf32>
    %209 = arith.cmpf oge, %207, %208 : vector<32x128xf32>
    %cst_195 = arith.constant 1.000000e+00 : f32
    %cst_196 = arith.constant -1.000000e+00 : f32
    %210 = vector.broadcast %cst_195 : f32 to vector<32x128xf32>
    %211 = vector.broadcast %cst_196 : f32 to vector<32x128xf32>
    %212 = arith.select %209, %210, %211 : vector<32x128xi1>, vector<32x128xf32>
    %213 = math.absf %207 : vector<32x128xf32>
    %cst_197 = arith.constant 0.327591091 : f32
    %214 = vector.broadcast %cst_197 : f32 to vector<32x128xf32>
    %215 = arith.mulf %214, %213 : vector<32x128xf32>
    %cst_198 = arith.constant 1.000000e+00 : f32
    %216 = vector.broadcast %cst_198 : f32 to vector<32x128xf32>
    %217 = arith.addf %216, %215 : vector<32x128xf32>
    %218 = tpu.reciprocal %217 {approx = true} : vector<32x128xf32> -> vector<32x128xf32>
    %cst_199 = arith.constant 1.06140542 : f32
    %219 = vector.broadcast %cst_199 : f32 to vector<32x128xf32>
    %220 = arith.mulf %219, %218 : vector<32x128xf32>
    %cst_200 = arith.constant -1.45315206 : f32
    %221 = vector.broadcast %cst_200 : f32 to vector<32x128xf32>
    %222 = arith.addf %220, %221 : vector<32x128xf32>
    %223 = arith.mulf %222, %218 : vector<32x128xf32>
    %cst_201 = arith.constant 1.42141378 : f32
    %224 = vector.broadcast %cst_201 : f32 to vector<32x128xf32>
    %225 = arith.addf %223, %224 : vector<32x128xf32>
    %226 = arith.mulf %225, %218 : vector<32x128xf32>
    %cst_202 = arith.constant -0.284496725 : f32
    %227 = vector.broadcast %cst_202 : f32 to vector<32x128xf32>
    %228 = arith.addf %226, %227 : vector<32x128xf32>
    %229 = arith.mulf %228, %218 : vector<32x128xf32>
    %cst_203 = arith.constant 0.254829586 : f32
    %230 = vector.broadcast %cst_203 : f32 to vector<32x128xf32>
    %231 = arith.addf %229, %230 : vector<32x128xf32>
    %232 = arith.mulf %231, %218 : vector<32x128xf32>
    %cst_204 = arith.constant 0.000000e+00 : f32
    %233 = vector.broadcast %cst_204 : f32 to vector<32x128xf32>
    %234 = arith.subf %233, %213 : vector<32x128xf32>
    %235 = arith.mulf %234, %213 : vector<32x128xf32>
    %236 = math.exp %235 : vector<32x128xf32>
    %237 = arith.mulf %232, %236 : vector<32x128xf32>
    %cst_205 = arith.constant 1.000000e+00 : f32
    %238 = vector.broadcast %cst_205 : f32 to vector<32x128xf32>
    %239 = arith.subf %238, %237 : vector<32x128xf32>
    %240 = arith.mulf %212, %239 : vector<32x128xf32>
    %cst_206 = arith.constant 1.000000e+00 : f32
    %241 = vector.broadcast %cst_206 : f32 to vector<32x128xf32>
    %242 = arith.addf %241, %240 : vector<32x128xf32>
    %243 = arith.mulf %205, %242 : vector<32x128xf32>
    %244 = vector.shape_cast %243 : vector<32x128xf32> to vector<4x8x128xf32>
    %245 = vector.shape_cast %244 : vector<4x8x128xf32> to vector<1x4x8x128xf32>
    %246 = arith.truncf %245 : vector<1x4x8x128xf32> to vector<1x4x8x128xbf16>
    %c0_207 = arith.constant 0 : index
    %c0_208 = arith.constant 0 : index
    %c0_209 = arith.constant 0 : index
    %c0_210 = arith.constant 0 : index
    %247 = vector.load %arg9[%c0_207, %c0_208, %c0_209, %c0_210] : memref<1x4x8x128xbf16, #tpu.memory_space<vmem>>, vector<1x4x8x128xbf16>
    tpu.vector_store %arg9[%c0_207, %c0_208, %c0_209, %c0_210], %246 {strides = array<i32>} : memref<1x4x8x128xbf16, #tpu.memory_space<vmem>>, vector<1x4x8x128xbf16>,
    return
  }
  func.func @transform_0(%arg0: i32, %arg1: i32) -> (i32, i32, i32, i32) {
    %c0_i32 = arith.constant 0 : i32
    %c0_i32_0 = arith.constant 0 : i32
    %c0_i32_1 = arith.constant 0 : i32
    return %arg0, %arg1, %c0_i32, %c0_i32_0 : i32, i32, i32, i32
  }
  func.func @transform_1(%arg0: i32, %arg1: i32) -> (i32, i32, i32, i32) {
    %c2_i32 = arith.constant 2 : i32
    %0 = arith.muli %c2_i32, %arg1 : i32
    %c1_i32 = arith.constant 1 : i32
    %1 = arith.subi %0, %c1_i32 : i32
    %c0_i32 = arith.constant 0 : i32
    %2 = arith.maxsi %1, %c0_i32 : i32
    %c0_i32_0 = arith.constant 0 : i32
    %c0_i32_1 = arith.constant 0 : i32
    %c0_i32_2 = arith.constant 0 : i32
    return %arg0, %2, %c0_i32_0, %c0_i32_1 : i32, i32, i32, i32
  }
  func.func @transform_2(%arg0: i32, %arg1: i32) -> (i32, i32, i32, i32) {
    %c1_i32 = arith.constant 1 : i32
    %0 = arith.addi %arg1, %c1_i32 : i32
    %c2_i32 = arith.constant 2 : i32
    %1 = arith.muli %c2_i32, %0 : i32
    %c3_i32 = arith.constant 3 : i32
    %2 = arith.minsi %1, %c3_i32 : i32
    %c0_i32 = arith.constant 0 : i32
    %c0_i32_0 = arith.constant 0 : i32
    %c0_i32_1 = arith.constant 0 : i32
    return %arg0, %2, %c0_i32, %c0_i32_0 : i32, i32, i32, i32
  }
  func.func @transform_3(%arg0: i32, %arg1: i32) -> (i32, i32, i32) {
    %c0_i32 = arith.constant 0 : i32
    %c0_i32_0 = arith.constant 0 : i32
    %c0_i32_1 = arith.constant 0 : i32
    %c0_i32_2 = arith.constant 0 : i32
    return %c0_i32, %c0_i32_0, %c0_i32_1 : i32, i32, i32
  }
  func.func @transform_4(%arg0: i32, %arg1: i32) -> (i32, i32) {
    %c0_i32 = arith.constant 0 : i32
    %c0_i32_0 = arith.constant 0 : i32
    %c0_i32_1 = arith.constant 0 : i32
    return %c0_i32, %c0_i32_0 : i32, i32
  }
  func.func @transform_5(%arg0: i32, %arg1: i32) -> (i32, i32, i32) {
    %c0_i32 = arith.constant 0 : i32
    %c0_i32_0 = arith.constant 0 : i32
    %c0_i32_1 = arith.constant 0 : i32
    %c0_i32_2 = arith.constant 0 : i32
    return %c0_i32, %c0_i32_0, %c0_i32_1 : i32, i32, i32
  }
  func.func @transform_6(%arg0: i32, %arg1: i32) -> (i32, i32) {
    %c0_i32 = arith.constant 0 : i32
    %c0_i32_0 = arith.constant 0 : i32
    %c0_i32_1 = arith.constant 0 : i32
    return %c0_i32, %c0_i32_0 : i32, i32
  }
  func.func @transform_7(%arg0: i32, %arg1: i32) -> (i32, i32, i32, i32) {
    %c0_i32 = arith.constant 0 : i32
    %c0_i32_0 = arith.constant 0 : i32
    %c0_i32_1 = arith.constant 0 : i32
    return %arg0, %arg1, %c0_i32, %c0_i32_0 : i32, i32, i32, i32
  }
}

</mosaic_0001>

<llo_original>
// kernel: down_forward.1
$region0: #{down_forward.1}
  #allocation0 [shape = 'u32[]', space=smem, size = 0x4, offset = 0x4, fixed_abs, tag = 'smem constant byte address 0x4 - core index']
  #allocation1 [shape = 'u32[144,128]{1,0:T(1,128)}', space=vmem, size = 0x12000, scoped, tag = 'internal scratch']
  #allocation2 [shape = 'bf16[8,10,128]{2,1,0:T(8,128)(2,1)}', space=vmem, size = 0x8000, scoped, tag = 'scratch operand']
  #allocation3 [shape = 'bf16[6,10,128]{2,1,0:T(8,128)(2,1)}', space=vmem, size = 0x6000, scoped, tag = 'scratch operand']
  %s0 = inlined_call_operand.vmem [shape: bf16[2,16,16,4], index: 0, kind: input, shape index: {}, may-alias: {0,1,2}]
  %s1 = inlined_call_operand.vmem [shape: bf16[2,16,16,4], index: 1, kind: input, shape index: {}, may-alias: {0,1,2}]
  %s2 = inlined_call_operand.vmem [shape: bf16[2,16,16,4], index: 2, kind: input, shape index: {}, may-alias: {0,1,2}]
  %s3 = inlined_call_operand.vmem [shape: bf16[9,128,128], index: 3, kind: input, shape index: {}]
  %s4 = inlined_call_operand.vmem [shape: f32[1,128], index: 4, kind: input, shape index: {}]
  %s5 = inlined_call_operand.vmem [shape: bf16[9,128,128], index: 5, kind: input, shape index: {}]
  %s6 = inlined_call_operand.vmem [shape: f32[1,128], index: 6, kind: input, shape index: {}]
  %s7 = inlined_call_operand.vmem [shape: bf16[2,8,8,128], index: 7, kind: output, shape index: {}]
  %s8 = sld [smem:[#allocation0]]
  $region61: #{down_forward.1} parent=0
    _
  %s10 = ssub.s32 1, %s8
  %s11 = scalar_select 0, %s10, %s8
  loop: start=0, step=1, limit=6
  $region2: #{down_forward.1} parent=0 // loop_pre_header
    _
  $region3: #{down_forward.1} parent=0 // loop_header
    %s13 = sphi 0, %s17
    %p14 = scmp.ge.s32.totalorder %s13, 6
    %s20 = sphi 0, %s32
    %s21 = sphi 0, %s28
    %s22 = sphi 0, %s20
    %s23 = sphi 0, %s21
    %s24 = sphi 0, %s22
    %s25 = sphi 0, %s23
    %s37 = sphi 0, %s39
    %s40 = sphi 0, %s37
    %s41 = sphi 0, %s40
    %s57 = sphi 0, %s41
    %s73 = sphi 0, %s75
    %s76 = sphi 0, %s73
    %s77 = sphi 0, %s76
    %s93 = sphi 0, %s77
    %s109 = sphi 0, %s111
    %s112 = sphi 0, %s109
    %s113 = sphi 0, %s112
    %s129 = sphi 0, %s113
    %s133 = sphi 0, %s133
    %s135 = sphi 0, %s133
    %s136 = sphi 0, %s135
    %s150 = sphi 0, %s136
    %s154 = sphi 0, %s154
    %s156 = sphi 0, %s154
    %s157 = sphi 0, %s156
    %s171 = sphi 0, %s157
    %s175 = sphi 0, %s175
    %s177 = sphi 0, %s175
    %s178 = sphi 0, %s177
    %s192 = sphi 0, %s178
    %s196 = sphi 0, %s196
    %s198 = sphi 0, %s196
    %s199 = sphi 0, %s198
    %s213 = sphi 0, %s199
    %s221 = sphi 0, %s223
    %s224 = sphi 0, %s221
    %s225 = sphi 0, %s224
    %s241 = sphi 0, %s225
  $region4: #{down_forward.1} parent=0 // loop_header_branch
    %16 = sbr.rel (%p14) target = $region8
  $region5: #{down_forward.1} parent=0 // loop_body
    %s18 = ssub.s32 %s13, 1
    %s19 = ssub.s32 %s13, 2
    %s26 = sadd.s32 1, %s21
    %p27 = scmp.ge.s32.totalorder %s26, 2
    %s28 = scalar_select %p27, 0, %s26
    %s29 = sadd.s32 1, %s20
    %s30 = scalar_select %p27, %s29, %s20
    %p31 = scmp.ge.s32.totalorder %s30, 2
    %s32 = scalar_select %p31, 0, %s30
    %s33 = ssub.s32 %s20, %s32
    %s34 = ssub.s32 %s21, %s28
    %s35 = sor.u32 %s33, %s34
    %p36 = scmp.eq.s32.totalorder %s35, 0
    %s38 = sadd.s32 %s37, 1
    %s39 = scalar_select %p36, %s37, %s38
    %p42 = pneg %p36
    %p43 = scmp.eq.s32.totalorder %s13, 3
    %p44 = por %p42, %p43
    %p45 = scmp.ne.s32.totalorder %s37, %s40
    %p46 = scmp.eq.s32.totalorder %s13, 0
    %p47 = por %p45, %p46
    %p48 = scmp.ne.s32.totalorder %s37, %s40
    %p49 = scmp.eq.s32.totalorder %s18, 3
    %p50 = por %p48, %p49
    %p51 = scmp.ne.s32.totalorder %s40, %s41
    %p52 = scmp.eq.s32.totalorder %s18, 0
    %p53 = por %p51, %p52
    %p54 = scmp.ne.s32.totalorder %s40, %s41
    %p55 = scmp.eq.s32.totalorder %s19, 3
    %p56 = por %p54, %p55
    %p58 = scmp.ne.s32.totalorder %s41, %s57
    %p59 = scmp.eq.s32.totalorder %s19, 0
    %p60 = por %p58, %p59
    %s61 = smul.u32 %s21, 2
    %s62 = ssub.s32 %s61, 1
    %p63 = scmp.gt.s32.totalorder %s62, 0
    %s64 = scalar_select %p63, %s62, 0
    %s65 = smul.u32 %s28, 2
    %s66 = ssub.s32 %s65, 1
    %p67 = scmp.gt.s32.totalorder %s66, 0
    %s68 = scalar_select %p67, %s66, 0
    %s69 = ssub.s32 %s20, %s32
    %s70 = ssub.s32 %s64, %s68
    %s71 = sor.u32 %s69, %s70
    %p72 = scmp.eq.s32.totalorder %s71, 0
    %s74 = sadd.s32 %s73, 1
    %s75 = scalar_select %p72, %s73, %s74
    %p78 = pneg %p72
    %p79 = scmp.eq.s32.totalorder %s13, 3
    %p80 = por %p78, %p79
    %p81 = scmp.ne.s32.totalorder %s73, %s76
    %p82 = scmp.eq.s32.totalorder %s13, 0
    %p83 = por %p81, %p82
    %p84 = scmp.ne.s32.totalorder %s73, %s76
    %p85 = scmp.eq.s32.totalorder %s18, 3
    %p86 = por %p84, %p85
    %p87 = scmp.ne.s32.totalorder %s76, %s77
    %p88 = scmp.eq.s32.totalorder %s18, 0
    %p89 = por %p87, %p88
    %p90 = scmp.ne.s32.totalorder %s76, %s77
    %p91 = scmp.eq.s32.totalorder %s19, 3
    %p92 = por %p90, %p91
    %p94 = scmp.ne.s32.totalorder %s77, %s93
    %p95 = scmp.eq.s32.totalorder %s19, 0
    %p96 = por %p94, %p95
    %s97 = sadd.s32 %s21, 1
    %s98 = smul.u32 %s97, 2
    %p99 = scmp.lt.s32.totalorder %s98, 3
    %s100 = scalar_select %p99, %s98, 3
    %s101 = sadd.s32 %s28, 1
    %s102 = smul.u32 %s101, 2
    %p103 = scmp.lt.s32.totalorder %s102, 3
    %s104 = scalar_select %p103, %s102, 3
    %s105 = ssub.s32 %s20, %s32
    %s106 = ssub.s32 %s100, %s104
    %s107 = sor.u32 %s105, %s106
    %p108 = scmp.eq.s32.totalorder %s107, 0
    %s110 = sadd.s32 %s109, 1
    %s111 = scalar_select %p108, %s109, %s110
    %p114 = pneg %p108
    %p115 = scmp.eq.s32.totalorder %s13, 3
    %p116 = por %p114, %p115
    %p117 = scmp.ne.s32.totalorder %s109, %s112
    %p118 = scmp.eq.s32.totalorder %s13, 0
    %p119 = por %p117, %p118
    %p120 = scmp.ne.s32.totalorder %s109, %s112
    %p121 = scmp.eq.s32.totalorder %s18, 3
    %p122 = por %p120, %p121
    %p123 = scmp.ne.s32.totalorder %s112, %s113
    %p124 = scmp.eq.s32.totalorder %s18, 0
    %p125 = por %p123, %p124
    %p126 = scmp.ne.s32.totalorder %s112, %s113
    %p127 = scmp.eq.s32.totalorder %s19, 3
    %p128 = por %p126, %p127
    %p130 = scmp.ne.s32.totalorder %s113, %s129
    %p131 = scmp.eq.s32.totalorder %s19, 0
    %p132 = por %p130, %p131
    %s134 = sadd.s32 %s133, 1
    %p137 = scmp.eq.s32.totalorder %s13, 3
    %p138 = scmp.ne.s32.totalorder %s133, %s135
    %p139 = scmp.eq.s32.totalorder %s13, 0
    %p140 = por %p138, %p139
    %p141 = scmp.ne.s32.totalorder %s133, %s135
    %p142 = scmp.eq.s32.totalorder %s18, 3
    %p143 = por %p141, %p142
    %p144 = scmp.ne.s32.totalorder %s135, %s136
    %p145 = scmp.eq.s32.totalorder %s18, 0
    %p146 = por %p144, %p145
    %p147 = scmp.ne.s32.totalorder %s135, %s136
    %p148 = scmp.eq.s32.totalorder %s19, 3
    %p149 = por %p147, %p148
    %p151 = scmp.ne.s32.totalorder %s136, %s150
    %p152 = scmp.eq.s32.totalorder %s19, 0
    %p153 = por %p151, %p152
    %s155 = sadd.s32 %s154, 1
    %p158 = scmp.eq.s32.totalorder %s13, 3
    %p159 = scmp.ne.s32.totalorder %s154, %s156
    %p160 = scmp.eq.s32.totalorder %s13, 0
    %p161 = por %p159, %p160
    %p162 = scmp.ne.s32.totalorder %s154, %s156
    %p163 = scmp.eq.s32.totalorder %s18, 3
    %p164 = por %p162, %p163
    %p165 = scmp.ne.s32.totalorder %s156, %s157
    %p166 = scmp.eq.s32.totalorder %s18, 0
    %p167 = por %p165, %p166
    %p168 = scmp.ne.s32.totalorder %s156, %s157
    %p169 = scmp.eq.s32.totalorder %s19, 3
    %p170 = por %p168, %p169
    %p172 = scmp.ne.s32.totalorder %s157, %s171
    %p173 = scmp.eq.s32.totalorder %s19, 0
    %p174 = por %p172, %p173
    %s176 = sadd.s32 %s175, 1
    %p179 = scmp.eq.s32.totalorder %s13, 3
    %p180 = scmp.ne.s32.totalorder %s175, %s177
    %p181 = scmp.eq.s32.totalorder %s13, 0
    %p182 = por %p180, %p181
    %p183 = scmp.ne.s32.totalorder %s175, %s177
    %p184 = scmp.eq.s32.totalorder %s18, 3
    %p185 = por %p183, %p184
    %p186 = scmp.ne.s32.totalorder %s177, %s178
    %p187 = scmp.eq.s32.totalorder %s18, 0
    %p188 = por %p186, %p187
    %p189 = scmp.ne.s32.totalorder %s177, %s178
    %p190 = scmp.eq.s32.totalorder %s19, 3
    %p191 = por %p189, %p190
    %p193 = scmp.ne.s32.totalorder %s178, %s192
    %p194 = scmp.eq.s32.totalorder %s19, 0
    %p195 = por %p193, %p194
    %s197 = sadd.s32 %s196, 1
    %p200 = scmp.eq.s32.totalorder %s13, 3
    %p201 = scmp.ne.s32.totalorder %s196, %s198
    %p202 = scmp.eq.s32.totalorder %s13, 0
    %p203 = por %p201, %p202
    %p204 = scmp.ne.s32.totalorder %s196, %s198
    %p205 = scmp.eq.s32.totalorder %s18, 3
    %p206 = por %p204, %p205
    %p207 = scmp.ne.s32.totalorder %s198, %s199
    %p208 = scmp.eq.s32.totalorder %s18, 0
    %p209 = por %p207, %p208
    %p210 = scmp.ne.s32.totalorder %s198, %s199
    %p211 = scmp.eq.s32.totalorder %s19, 3
    %p212 = por %p210, %p211
    %p214 = scmp.ne.s32.totalorder %s199, %s213
    %p215 = scmp.eq.s32.totalorder %s19, 0
    %p216 = por %p214, %p215
    %s217 = ssub.s32 %s20, %s32
    %s218 = ssub.s32 %s21, %s28
    %s219 = sor.u32 %s217, %s218
    %p220 = scmp.eq.s32.totalorder %s219, 0
    %s222 = sadd.s32 %s221, 1
    %s223 = scalar_select %p220, %s221, %s222
    %p226 = pneg %p220
    %p227 = scmp.eq.s32.totalorder %s13, 3
    %p228 = por %p226, %p227
    %p229 = scmp.ne.s32.totalorder %s221, %s224
    %p230 = scmp.eq.s32.totalorder %s13, 0
    %p231 = por %p229, %p230
    %p232 = scmp.ne.s32.totalorder %s221, %s224
    %p233 = scmp.eq.s32.totalorder %s18, 3
    %p234 = por %p232, %p233
    %p235 = scmp.ne.s32.totalorder %s224, %s225
    %p236 = scmp.eq.s32.totalorder %s18, 0
    %p237 = por %p235, %p236
    %p238 = scmp.ne.s32.totalorder %s224, %s225
    %p239 = scmp.eq.s32.totalorder %s19, 3
    %p240 = por %p238, %p239
    %p242 = scmp.ne.s32.totalorder %s225, %s241
    %p243 = scmp.eq.s32.totalorder %s19, 0
    %p244 = por %p242, %p243
    %p245 = scmp.le.s32.totalorder 1, %s13
    %p246 = scmp.lt.s32.totalorder %s13, 5
    %p247 = pnand %p245, %p246
    %p248 = pneg %p247
    // Predicated region
    $region9: #{down_forward.1} parent=5 // pred_check
      _
    $region10: #{down_forward.1} parent=5 // pred_check_branch
      %250 = sbr.rel (%p247) target = $region12
    $region11: #{down_forward.1} parent=5 // pred_region
      %s251 = ssub.s32 %s13, 1
      // Predicated region
      $region13: #{down_forward.1} parent=11 // pred_check
        %p252 = pneg %p146
      $region14: #{down_forward.1} parent=11 // pred_check_branch
        %254 = sbr.rel (%p252) target = $region16
      $region15: #{down_forward.1} parent=11 // pred_region
        _
      $region16: #{down_forward.1} parent=11 // pred_fallthru
        _
      // Predicated region
      $region17: #{down_forward.1} parent=11 // pred_check
        %p255 = pneg %p167
      $region18: #{down_forward.1} parent=11 // pred_check_branch
        %257 = sbr.rel (%p255) target = $region20
      $region19: #{down_forward.1} parent=11 // pred_region
        _
      $region20: #{down_forward.1} parent=11 // pred_fallthru
        _
      // Predicated region
      $region21: #{down_forward.1} parent=11 // pred_check
        %p258 = pneg %p188
      $region22: #{down_forward.1} parent=11 // pred_check_branch
        %260 = sbr.rel (%p258) target = $region24
      $region23: #{down_forward.1} parent=11 // pred_region
        _
      $region24: #{down_forward.1} parent=11 // pred_fallthru
        _
      // Predicated region
      $region25: #{down_forward.1} parent=11 // pred_check
        %p261 = pneg %p209
      $region26: #{down_forward.1} parent=11 // pred_check_branch
        %263 = sbr.rel (%p261) target = $region28
      $region27: #{down_forward.1} parent=11 // pred_region
        _
      $region28: #{down_forward.1} parent=11 // pred_fallthru
        _
    $region12: #{down_forward.1} parent=5 // pred_fallthru
      _
    %p264 = scmp.lt.s32.totalorder %s13, 4
    // Predicated region
    $region29: #{down_forward.1} parent=5 // pred_check
      %p265 = pneg %p264
    $region30: #{down_forward.1} parent=5 // pred_check_branch
      %267 = sbr.rel (%p265) target = $region32
    $region31: #{down_forward.1} parent=5 // pred_region
      // Predicated region
      $region33: #{down_forward.1} parent=31 // pred_check
        %p268 = pneg %p47
      $region34: #{down_forward.1} parent=31 // pred_check_branch
        %270 = sbr.rel (%p268) target = $region36
      $region35: #{down_forward.1} parent=31 // pred_region
        %s271 = smul.u32 8, %s21
        %p272 = scmp.lt.s32.totalorder %s20, 1
        %s273 = scalar_select %p272, %s20, 1
        %p274 = scmp.lt.s32.totalorder %s271, 15
        %s275 = scalar_select %p274, %s271, 15
        %s276 = smul.addr %s275, 2
        %s277 = smul.addr %s273, 32
        %s278 = sadd.s32 %s276, %s277
        %s279 = smul.addr %s278, 4
        %s280 = scalar_lea.vmem %s0, %s279
        %s281 = smul.u32 8, %s21
      $region36: #{down_forward.1} parent=31 // pred_fallthru
        _
      // Predicated region
      $region37: #{down_forward.1} parent=31 // pred_check
        %p282 = pneg %p83
      $region38: #{down_forward.1} parent=31 // pred_check_branch
        %284 = sbr.rel (%p282) target = $region40
      $region39: #{down_forward.1} parent=31 // pred_region
        %s285 = smul.u32 %s21, 2
        %s286 = ssub.s32 %s285, 1
        %p287 = scmp.gt.s32.totalorder %s286, 0
        %s288 = scalar_select %p287, %s286, 0
        %s289 = smul.u32 4, %s288
        %p290 = scmp.lt.s32.totalorder %s20, 1
        %s291 = scalar_select %p290, %s20, 1
        %p292 = scmp.lt.s32.totalorder %s289, 15
        %s293 = scalar_select %p292, %s289, 15
        %s294 = smul.addr %s293, 2
        %s295 = smul.addr %s291, 32
        %s296 = sadd.s32 %s294, %s295
        %s297 = smul.addr %s296, 4
        %s298 = scalar_lea.vmem %s1, %s297
        %s299 = smul.u32 %s21, 2
        %s300 = ssub.s32 %s299, 1
        %p301 = scmp.gt.s32.totalorder %s300, 0
        %s302 = scalar_select %p301, %s300, 0
        %s303 = smul.u32 4, %s302
      $region40: #{down_forward.1} parent=31 // pred_fallthru
        _
      // Predicated region
      $region41: #{down_forward.1} parent=31 // pred_check
        %p304 = pneg %p119
      $region42: #{down_forward.1} parent=31 // pred_check_branch
        %306 = sbr.rel (%p304) target = $region44
      $region43: #{down_forward.1} parent=31 // pred_region
        %s307 = sadd.s32 %s21, 1
        %s308 = smul.u32 %s307, 2
        %p309 = scmp.lt.s32.totalorder %s308, 3
        %s310 = scalar_select %p309, %s308, 3
        %s311 = smul.u32 4, %s310
        %p312 = scmp.lt.s32.totalorder %s20, 1
        %s313 = scalar_select %p312, %s20, 1
        %p314 = scmp.lt.s32.totalorder %s311, 15
        %s315 = scalar_select %p314, %s311, 15
        %s316 = smul.addr %s315, 2
        %s317 = smul.addr %s313, 32
        %s318 = sadd.s32 %s316, %s317
        %s319 = smul.addr %s318, 4
        %s320 = scalar_lea.vmem %s2, %s319
        %s321 = sadd.s32 %s21, 1
        %s322 = smul.u32 %s321, 2
        %p323 = scmp.lt.s32.totalorder %s322, 3
        %s324 = scalar_select %p323, %s322, 3
        %s325 = smul.u32 4, %s324
      $region44: #{down_forward.1} parent=31 // pred_fallthru
        _
    $region32: #{down_forward.1} parent=5 // pred_fallthru
      _
    %p326 = scmp.le.s32.totalorder 1, %s13
    %p327 = scmp.lt.s32.totalorder %s13, 5
    %p328 = pnand %p326, %p327
    %p329 = pneg %p328
    // Predicated region
    $region45: #{down_forward.1} parent=5 // pred_check
      _
    $region46: #{down_forward.1} parent=5 // pred_check_branch
      %331 = sbr.rel (%p328) target = $region48
    $region47: #{down_forward.1} parent=5 // pred_region
      %s332 = ssub.s32 %s13, 1
      %s333 = smul.u32 8, %s23
      %p334 = scmp.lt.s32.totalorder %s22, 1
      %s335 = scalar_select %p334, %s22, 1
      %p336 = scmp.lt.s32.totalorder %s333, 15
      %s337 = scalar_select %p336, %s333, 15
      %s338 = smul.addr %s337, 2
      %s339 = smul.addr %s335, 32
      %s340 = sadd.s32 %s338, %s339
      %s341 = smul.addr %s340, 4
      %s342 = scalar_lea.vmem %s0, %s341
      %p343 = pneg %p53
      %p344 = pneg %p50
      %s345 = smul.u32 %s23, 2
      %s346 = ssub.s32 %s345, 1
      %p347 = scmp.gt.s32.totalorder %s346, 0
      %s348 = scalar_select %p347, %s346, 0
      %s349 = smul.u32 4, %s348
      %p350 = scmp.lt.s32.totalorder %s22, 1
      %s351 = scalar_select %p350, %s22, 1
      %p352 = scmp.lt.s32.totalorder %s349, 15
      %s353 = scalar_select %p352, %s349, 15
      %s354 = smul.addr %s353, 2
      %s355 = smul.addr %s351, 32
      %s356 = sadd.s32 %s354, %s355
      %s357 = smul.addr %s356, 4
      %s358 = scalar_lea.vmem %s1, %s357
      %p359 = pneg %p89
      %p360 = pneg %p86
      %s361 = sadd.s32 %s23, 1
      %s362 = smul.u32 %s361, 2
      %p363 = scmp.lt.s32.totalorder %s362, 3
      %s364 = scalar_select %p363, %s362, 3
      %s365 = smul.u32 4, %s364
      %p366 = scmp.lt.s32.totalorder %s22, 1
      %s367 = scalar_select %p366, %s22, 1
      %p368 = scmp.lt.s32.totalorder %s365, 15
      %s369 = scalar_select %p368, %s365, 15
      %s370 = smul.addr %s369, 2
      %s371 = smul.addr %s367, 32
      %s372 = sadd.s32 %s370, %s371
      %s373 = smul.addr %s372, 4
      %s374 = scalar_lea.vmem %s2, %s373
      %p375 = pneg %p125
      %p376 = pneg %p122
      %p377 = pneg %p146
      %p378 = pneg %p143
      %p379 = pneg %p167
      %p380 = pneg %p164
      %p381 = pneg %p188
      %p382 = pneg %p185
      %p383 = pneg %p209
      %p384 = pneg %p206
      %p385 = pneg %p237
      %p386 = pneg %p234
      %s387 = smul.u32 4, %s23
      %p388 = scmp.lt.s32.totalorder %s22, 1
      %s389 = scalar_select %p388, %s22, 1
      %p390 = scmp.lt.s32.totalorder %s387, 7
      %s391 = scalar_select %p390, %s387, 7
      %s392 = smul.addr %s389, 8
      %s393 = sadd.s32 %s391, %s392
      %s394 = smul.addr %s393, 4
      %s395 = scalar_lea.vmem %s7, %s394
      %s396 = smul.u32 8, %s23
      %p397 = scmp.lt.s32.totalorder %s22, 1
      %s398 = scalar_select %p397, %s22, 1
      %p399 = scmp.lt.s32.totalorder %s396, 15
      %s400 = scalar_select %p399, %s396, 15
      %s401 = smul.addr %s400, 2
      %s402 = smul.addr %s398, 32
      %s403 = sadd.s32 %s401, %s402
      %s404 = smul.addr %s403, 4
      %s405 = scalar_lea.vmem %s0, %s404
      %s406 = smul.u32 8, %s23
      %s407 = smul.u32 %s23, 2
      %s408 = ssub.s32 %s407, 1
      %p409 = scmp.gt.s32.totalorder %s408, 0
      %s410 = scalar_select %p409, %s408, 0
      %s411 = smul.u32 4, %s410
      %p412 = scmp.lt.s32.totalorder %s22, 1
      %s413 = scalar_select %p412, %s22, 1
      %p414 = scmp.lt.s32.totalorder %s411, 15
      %s415 = scalar_select %p414, %s411, 15
      %s416 = smul.addr %s415, 2
      %s417 = smul.addr %s413, 32
      %s418 = sadd.s32 %s416, %s417
      %s419 = smul.addr %s418, 4
      %s420 = scalar_lea.vmem %s1, %s419
      %s421 = smul.u32 %s23, 2
      %s422 = ssub.s32 %s421, 1
      %p423 = scmp.gt.s32.totalorder %s422, 0
      %s424 = scalar_select %p423, %s422, 0
      %s425 = smul.u32 4, %s424
      %s426 = sadd.s32 %s23, 1
      %s427 = smul.u32 %s426, 2
      %p428 = scmp.lt.s32.totalorder %s427, 3
      %s429 = scalar_select %p428, %s427, 3
      %s430 = smul.u32 4, %s429
      %p431 = scmp.lt.s32.totalorder %s22, 1
      %s432 = scalar_select %p431, %s22, 1
      %p433 = scmp.lt.s32.totalorder %s430, 15
      %s434 = scalar_select %p433, %s430, 15
      %s435 = smul.addr %s434, 2
      %s436 = smul.addr %s432, 32
      %s437 = sadd.s32 %s435, %s436
      %s438 = smul.addr %s437, 4
      %s439 = scalar_lea.vmem %s2, %s438
      %s440 = sadd.s32 %s23, 1
      %s441 = smul.u32 %s440, 2
      %p442 = scmp.lt.s32.totalorder %s441, 3
      %s443 = scalar_select %p442, %s441, 3
      %s444 = smul.u32 4, %s443
      %s445 = smul.u32 4, %s23
      %p446 = scmp.lt.s32.totalorder %s22, 1
      %s447 = scalar_select %p446, %s22, 1
      %p448 = scmp.lt.s32.totalorder %s445, 7
      %s449 = scalar_select %p448, %s445, 7
      %s450 = smul.addr %s447, 8
      %s451 = sadd.s32 %s449, %s450
      %s452 = smul.addr %s451, 4
      %s453 = scalar_lea.vmem %s7, %s452
      %s454 = smul.u32 4, %s23
      %v457 = vld [vmem:[%s405] sm:$0xf]
      %v458 = vld [vmem:[%s405 + $0x4] sm:$0xf]
      %v459 = vld [vmem:[%s405 + $0x8] sm:$0xf]
      %v460 = vld [vmem:[%s405 + $0xc] sm:$0xf]
      %v461 = vld [vmem:[%s405 + $0x10] sm:$0xf]
      %v462 = vld [vmem:[%s405 + $0x14] sm:$0xf]
      %v463 = vld [vmem:[%s405 + $0x18] sm:$0xf]
      %v464 = vld [vmem:[%s405 + $0x1c] sm:$0xf]
      %v465 = vld [vmem:[%s405 + $0x20] sm:$0xf]
      %v466 = vld [vmem:[%s405 + $0x24] sm:$0xf]
      %v467 = vld [vmem:[%s405 + $0x28] sm:$0xf]
      %v468 = vld [vmem:[%s405 + $0x2c] sm:$0xf]
      %v469 = vld [vmem:[%s405 + $0x30] sm:$0xf]
      %v470 = vld [vmem:[%s405 + $0x34] sm:$0xf]
      %v471 = vld [vmem:[%s405 + $0x38] sm:$0xf]
      %v472 = vld [vmem:[%s405 + $0x3c] sm:$0xf]
      %vm473 = vcmask 27648
      %v476 = vsel %vm473, %v457, 4286644096
      %v479 = vsel %vm473, %v459, 4286644096
      %v481 = vmax.bf16 %v476, %v479
      %v483 = vsel %vm473, %v458, 4286644096
      %v486 = vsel %vm473, %v460, 4286644096
      %v488 = vmax.bf16 %v483, %v486
      %v490 = vsel %vm473, %v461, 4286644096
      %v493 = vsel %vm473, %v463, 4286644096
      %v495 = vmax.bf16 %v490, %v493
      %v497 = vsel %vm473, %v462, 4286644096
      %v500 = vsel %vm473, %v464, 4286644096
      %v502 = vmax.bf16 %v497, %v500
      %v504 = vsel %vm473, %v465, 4286644096
      %v507 = vsel %vm473, %v467, 4286644096
      %v509 = vmax.bf16 %v504, %v507
      %v511 = vsel %vm473, %v466, 4286644096
      %v514 = vsel %vm473, %v468, 4286644096
      %v516 = vmax.bf16 %v511, %v514
      %v518 = vsel %vm473, %v469, 4286644096
      %v521 = vsel %vm473, %v471, 4286644096
      %v523 = vmax.bf16 %v518, %v521
      %v525 = vsel %vm473, %v470, 4286644096
      %v528 = vsel %vm473, %v472, 4286644096
      %v530 = vmax.bf16 %v525, %v528
      %v540 = vunpack.c.l.s4 1966171168
      %v541 = vunpack.c.0.s8 %v540
      %v542 = vlaneseq
      %v543 = vshrl.u32 %v542, 7
      %v544 = vsub.s32 %v541, %v543
      %v545 = vrot.slane %v481, %v544
      %v546 = vcombine.high %v545, %v545
      %v548 = vunpack.c.l.s4 1966171168
      %v549 = vunpack.c.0.s8 %v548
      %v550 = vlaneseq
      %v551 = vshrl.u32 %v550, 7
      %v552 = vsub.s32 %v549, %v551
      %v553 = vrot.slane %v545, %v552
      %v555 = vunpack.c.l.s4 1966171168
      %v556 = vunpack.c.0.s8 %v555
      %v557 = vlaneseq
      %v558 = vshrl.u32 %v557, 7
      %v559 = vsub.s32 %v556, %v558
      %v560 = vrot.slane %v546, %v559
      %v561 = vcombine.high %v553, %v553
      %v562 = vcombine.high %v560, %v560
      %v564 = vunpack.c.l.s4 1966171168
      %v565 = vunpack.c.0.s8 %v564
      %v566 = vlaneseq
      %v567 = vshrl.u32 %v566, 7
      %v568 = vsub.s32 %v565, %v567
      %v569 = vrot.slane %v488, %v568
      %v570 = vcombine.high %v569, %v569
      %v572 = vunpack.c.l.s4 1966171168
      %v573 = vunpack.c.0.s8 %v572
      %v574 = vlaneseq
      %v575 = vshrl.u32 %v574, 7
      %v576 = vsub.s32 %v573, %v575
      %v577 = vrot.slane %v569, %v576
      %v579 = vunpack.c.l.s4 1966171168
      %v580 = vunpack.c.0.s8 %v579
      %v581 = vlaneseq
      %v582 = vshrl.u32 %v581, 7
      %v583 = vsub.s32 %v580, %v582
      %v584 = vrot.slane %v570, %v583
      %v585 = vcombine.high %v577, %v577
      %v586 = vcombine.high %v584, %v584
      %v588 = vunpack.c.l.s4 1966171168
      %v589 = vunpack.c.0.s8 %v588
      %v590 = vlaneseq
      %v591 = vshrl.u32 %v590, 7
      %v592 = vsub.s32 %v589, %v591
      %v593 = vrot.slane %v495, %v592
      %v594 = vcombine.high %v593, %v593
      %v596 = vunpack.c.l.s4 1966171168
      %v597 = vunpack.c.0.s8 %v596
      %v598 = vlaneseq
      %v599 = vshrl.u32 %v598, 7
      %v600 = vsub.s32 %v597, %v599
      %v601 = vrot.slane %v593, %v600
      %v603 = vunpack.c.l.s4 1966171168
      %v604 = vunpack.c.0.s8 %v603
      %v605 = vlaneseq
      %v606 = vshrl.u32 %v605, 7
      %v607 = vsub.s32 %v604, %v606
      %v608 = vrot.slane %v594, %v607
      %v609 = vcombine.high %v601, %v601
      %v610 = vcombine.high %v608, %v608
      %v612 = vunpack.c.l.s4 1966171168
      %v613 = vunpack.c.0.s8 %v612
      %v614 = vlaneseq
      %v615 = vshrl.u32 %v614, 7
      %v616 = vsub.s32 %v613, %v615
      %v617 = vrot.slane %v502, %v616
      %v618 = vcombine.high %v617, %v617
      %v620 = vunpack.c.l.s4 1966171168
      %v621 = vunpack.c.0.s8 %v620
      %v622 = vlaneseq
      %v623 = vshrl.u32 %v622, 7
      %v624 = vsub.s32 %v621, %v623
      %v625 = vrot.slane %v617, %v624
      %v627 = vunpack.c.l.s4 1966171168
      %v628 = vunpack.c.0.s8 %v627
      %v629 = vlaneseq
      %v630 = vshrl.u32 %v629, 7
      %v631 = vsub.s32 %v628, %v630
      %v632 = vrot.slane %v618, %v631
      %v633 = vcombine.high %v625, %v625
      %v634 = vcombine.high %v632, %v632
      %v636 = vunpack.c.l.s4 1966171168
      %v637 = vunpack.c.0.s8 %v636
      %v638 = vlaneseq
      %v639 = vshrl.u32 %v638, 7
      %v640 = vsub.s32 %v637, %v639
      %v641 = vrot.slane %v509, %v640
      %v642 = vcombine.high %v641, %v641
      %v644 = vunpack.c.l.s4 1966171168
      %v645 = vunpack.c.0.s8 %v644
      %v646 = vlaneseq
      %v647 = vshrl.u32 %v646, 7
      %v648 = vsub.s32 %v645, %v647
      %v649 = vrot.slane %v641, %v648
      %v651 = vunpack.c.l.s4 1966171168
      %v652 = vunpack.c.0.s8 %v651
      %v653 = vlaneseq
      %v654 = vshrl.u32 %v653, 7
      %v655 = vsub.s32 %v652, %v654
      %v656 = vrot.slane %v642, %v655
      %v657 = vcombine.high %v649, %v649
      %v658 = vcombine.high %v656, %v656
      %v660 = vunpack.c.l.s4 1966171168
      %v661 = vunpack.c.0.s8 %v660
      %v662 = vlaneseq
      %v663 = vshrl.u32 %v662, 7
      %v664 = vsub.s32 %v661, %v663
      %v665 = vrot.slane %v516, %v664
      %v666 = vcombine.high %v665, %v665
      %v668 = vunpack.c.l.s4 1966171168
      %v669 = vunpack.c.0.s8 %v668
      %v670 = vlaneseq
      %v671 = vshrl.u32 %v670, 7
      %v672 = vsub.s32 %v669, %v671
      %v673 = vrot.slane %v665, %v672
      %v675 = vunpack.c.l.s4 1966171168
      %v676 = vunpack.c.0.s8 %v675
      %v677 = vlaneseq
      %v678 = vshrl.u32 %v677, 7
      %v679 = vsub.s32 %v676, %v678
      %v680 = vrot.slane %v666, %v679
      %v681 = vcombine.high %v673, %v673
      %v682 = vcombine.high %v680, %v680
      %v684 = vunpack.c.l.s4 1966171168
      %v685 = vunpack.c.0.s8 %v684
      %v686 = vlaneseq
      %v687 = vshrl.u32 %v686, 7
      %v688 = vsub.s32 %v685, %v687
      %v689 = vrot.slane %v523, %v688
      %v690 = vcombine.high %v689, %v689
      %v692 = vunpack.c.l.s4 1966171168
      %v693 = vunpack.c.0.s8 %v692
      %v694 = vlaneseq
      %v695 = vshrl.u32 %v694, 7
      %v696 = vsub.s32 %v693, %v695
      %v697 = vrot.slane %v689, %v696
      %v699 = vunpack.c.l.s4 1966171168
      %v700 = vunpack.c.0.s8 %v699
      %v701 = vlaneseq
      %v702 = vshrl.u32 %v701, 7
      %v703 = vsub.s32 %v700, %v702
      %v704 = vrot.slane %v690, %v703
      %v705 = vcombine.high %v697, %v697
      %v706 = vcombine.high %v704, %v704
      %v708 = vunpack.c.l.s4 1966171168
      %v709 = vunpack.c.0.s8 %v708
      %v710 = vlaneseq
      %v711 = vshrl.u32 %v710, 7
      %v712 = vsub.s32 %v709, %v711
      %v713 = vrot.slane %v530, %v712
      %v714 = vcombine.high %v713, %v713
      %v716 = vunpack.c.l.s4 1966171168
      %v717 = vunpack.c.0.s8 %v716
      %v718 = vlaneseq
      %v719 = vshrl.u32 %v718, 7
      %v720 = vsub.s32 %v717, %v719
      %v721 = vrot.slane %v713, %v720
      %v723 = vunpack.c.l.s4 1966171168
      %v724 = vunpack.c.0.s8 %v723
      %v725 = vlaneseq
      %v726 = vshrl.u32 %v725, 7
      %v727 = vsub.s32 %v724, %v726
      %v728 = vrot.slane %v714, %v727
      %v729 = vcombine.high %v721, %v721
      %v730 = vcombine.high %v728, %v728
      %vm731 = vcmask 24576
      %v733 = vsel %vm731, %v553, 4286644096
      %v735 = vunpack.i.l.bf16 %v733
      %v736 = vunpack.i.h.bf16 %v733
      %v737 = vmax.f32 %v735, %v736
      %v738 = vrot.slane %v737, 4
      %v739 = vmax.f32 %v737, %v738
      %v740 = vrot.slane %v739, 2
      %v741 = vmax.f32 %v739, %v740
      %v742 = vrot.slane %v741, 1
      %v743 = vmax.f32 %v741, %v742
      %v744 = vpack.i.bf16 %v743, %v743
      %v746 = vsel %vm731, %v560, 4286644096
      %v748 = vunpack.i.l.bf16 %v746
      %v749 = vunpack.i.h.bf16 %v746
      %v750 = vmax.f32 %v748, %v749
      %v751 = vrot.slane %v750, 4
      %v752 = vmax.f32 %v750, %v751
      %v753 = vrot.slane %v752, 2
      %v754 = vmax.f32 %v752, %v753
      %v755 = vrot.slane %v754, 1
      %v756 = vmax.f32 %v754, %v755
      %v757 = vpack.i.bf16 %v756, %v756
      %v759 = vsel %vm731, %v561, 4286644096
      %v761 = vunpack.i.l.bf16 %v759
      %v762 = vunpack.i.h.bf16 %v759
      %v763 = vmax.f32 %v761, %v762
      %v764 = vrot.slane %v763, 4
      %v765 = vmax.f32 %v763, %v764
      %v766 = vrot.slane %v765, 2
      %v767 = vmax.f32 %v765, %v766
      %v768 = vrot.slane %v767, 1
      %v769 = vmax.f32 %v767, %v768
      %v770 = vpack.i.bf16 %v769, %v769
      %v772 = vsel %vm731, %v562, 4286644096
      %v774 = vunpack.i.l.bf16 %v772
      %v775 = vunpack.i.h.bf16 %v772
      %v776 = vmax.f32 %v774, %v775
      %v777 = vrot.slane %v776, 4
      %v778 = vmax.f32 %v776, %v777
      %v779 = vrot.slane %v778, 2
      %v780 = vmax.f32 %v778, %v779
      %v781 = vrot.slane %v780, 1
      %v782 = vmax.f32 %v780, %v781
      %v783 = vpack.i.bf16 %v782, %v782
      %v785 = vsel %vm731, %v577, 4286644096
      %v787 = vunpack.i.l.bf16 %v785
      %v788 = vunpack.i.h.bf16 %v785
      %v789 = vmax.f32 %v787, %v788
      %v790 = vrot.slane %v789, 4
      %v791 = vmax.f32 %v789, %v790
      %v792 = vrot.slane %v791, 2
      %v793 = vmax.f32 %v791, %v792
      %v794 = vrot.slane %v793, 1
      %v795 = vmax.f32 %v793, %v794
      %v796 = vpack.i.bf16 %v795, %v795
      %v798 = vsel %vm731, %v584, 4286644096
      %v800 = vunpack.i.l.bf16 %v798
      %v801 = vunpack.i.h.bf16 %v798
      %v802 = vmax.f32 %v800, %v801
      %v803 = vrot.slane %v802, 4
      %v804 = vmax.f32 %v802, %v803
      %v805 = vrot.slane %v804, 2
      %v806 = vmax.f32 %v804, %v805
      %v807 = vrot.slane %v806, 1
      %v808 = vmax.f32 %v806, %v807
      %v809 = vpack.i.bf16 %v808, %v808
      %v811 = vsel %vm731, %v585, 4286644096
      %v813 = vunpack.i.l.bf16 %v811
      %v814 = vunpack.i.h.bf16 %v811
      %v815 = vmax.f32 %v813, %v814
      %v816 = vrot.slane %v815, 4
      %v817 = vmax.f32 %v815, %v816
      %v818 = vrot.slane %v817, 2
      %v819 = vmax.f32 %v817, %v818
      %v820 = vrot.slane %v819, 1
      %v821 = vmax.f32 %v819, %v820
      %v822 = vpack.i.bf16 %v821, %v821
      %v824 = vsel %vm731, %v586, 4286644096
      %v826 = vunpack.i.l.bf16 %v824
      %v827 = vunpack.i.h.bf16 %v824
      %v828 = vmax.f32 %v826, %v827
      %v829 = vrot.slane %v828, 4
      %v830 = vmax.f32 %v828, %v829
      %v831 = vrot.slane %v830, 2
      %v832 = vmax.f32 %v830, %v831
      %v833 = vrot.slane %v832, 1
      %v834 = vmax.f32 %v832, %v833
      %v835 = vpack.i.bf16 %v834, %v834
      %v837 = vsel %vm731, %v601, 4286644096
      %v839 = vunpack.i.l.bf16 %v837
      %v840 = vunpack.i.h.bf16 %v837
      %v841 = vmax.f32 %v839, %v840
      %v842 = vrot.slane %v841, 4
      %v843 = vmax.f32 %v841, %v842
      %v844 = vrot.slane %v843, 2
      %v845 = vmax.f32 %v843, %v844
      %v846 = vrot.slane %v845, 1
      %v847 = vmax.f32 %v845, %v846
      %v848 = vpack.i.bf16 %v847, %v847
      %v850 = vsel %vm731, %v608, 4286644096
      %v852 = vunpack.i.l.bf16 %v850
      %v853 = vunpack.i.h.bf16 %v850
      %v854 = vmax.f32 %v852, %v853
      %v855 = vrot.slane %v854, 4
      %v856 = vmax.f32 %v854, %v855
      %v857 = vrot.slane %v856, 2
      %v858 = vmax.f32 %v856, %v857
      %v859 = vrot.slane %v858, 1
      %v860 = vmax.f32 %v858, %v859
      %v861 = vpack.i.bf16 %v860, %v860
      %v863 = vsel %vm731, %v609, 4286644096
      %v865 = vunpack.i.l.bf16 %v863
      %v866 = vunpack.i.h.bf16 %v863
      %v867 = vmax.f32 %v865, %v866
      %v868 = vrot.slane %v867, 4
      %v869 = vmax.f32 %v867, %v868
      %v870 = vrot.slane %v869, 2
      %v871 = vmax.f32 %v869, %v870
      %v872 = vrot.slane %v871, 1
      %v873 = vmax.f32 %v871, %v872
      %v874 = vpack.i.bf16 %v873, %v873
      %v876 = vsel %vm731, %v610, 4286644096
      %v878 = vunpack.i.l.bf16 %v876
      %v879 = vunpack.i.h.bf16 %v876
      %v880 = vmax.f32 %v878, %v879
      %v881 = vrot.slane %v880, 4
      %v882 = vmax.f32 %v880, %v881
      %v883 = vrot.slane %v882, 2
      %v884 = vmax.f32 %v882, %v883
      %v885 = vrot.slane %v884, 1
      %v886 = vmax.f32 %v884, %v885
      %v887 = vpack.i.bf16 %v886, %v886
      %v889 = vsel %vm731, %v625, 4286644096
      %v891 = vunpack.i.l.bf16 %v889
      %v892 = vunpack.i.h.bf16 %v889
      %v893 = vmax.f32 %v891, %v892
      %v894 = vrot.slane %v893, 4
      %v895 = vmax.f32 %v893, %v894
      %v896 = vrot.slane %v895, 2
      %v897 = vmax.f32 %v895, %v896
      %v898 = vrot.slane %v897, 1
      %v899 = vmax.f32 %v897, %v898
      %v900 = vpack.i.bf16 %v899, %v899
      %v902 = vsel %vm731, %v632, 4286644096
      %v904 = vunpack.i.l.bf16 %v902
      %v905 = vunpack.i.h.bf16 %v902
      %v906 = vmax.f32 %v904, %v905
      %v907 = vrot.slane %v906, 4
      %v908 = vmax.f32 %v906, %v907
      %v909 = vrot.slane %v908, 2
      %v910 = vmax.f32 %v908, %v909
      %v911 = vrot.slane %v910, 1
      %v912 = vmax.f32 %v910, %v911
      %v913 = vpack.i.bf16 %v912, %v912
      %v915 = vsel %vm731, %v633, 4286644096
      %v917 = vunpack.i.l.bf16 %v915
      %v918 = vunpack.i.h.bf16 %v915
      %v919 = vmax.f32 %v917, %v918
      %v920 = vrot.slane %v919, 4
      %v921 = vmax.f32 %v919, %v920
      %v922 = vrot.slane %v921, 2
      %v923 = vmax.f32 %v921, %v922
      %v924 = vrot.slane %v923, 1
      %v925 = vmax.f32 %v923, %v924
      %v926 = vpack.i.bf16 %v925, %v925
      %v928 = vsel %vm731, %v634, 4286644096
      %v930 = vunpack.i.l.bf16 %v928
      %v931 = vunpack.i.h.bf16 %v928
      %v932 = vmax.f32 %v930, %v931
      %v933 = vrot.slane %v932, 4
      %v934 = vmax.f32 %v932, %v933
      %v935 = vrot.slane %v934, 2
      %v936 = vmax.f32 %v934, %v935
      %v937 = vrot.slane %v936, 1
      %v938 = vmax.f32 %v936, %v937
      %v939 = vpack.i.bf16 %v938, %v938
      %v941 = vsel %vm731, %v649, 4286644096
      %v943 = vunpack.i.l.bf16 %v941
      %v944 = vunpack.i.h.bf16 %v941
      %v945 = vmax.f32 %v943, %v944
      %v946 = vrot.slane %v945, 4
      %v947 = vmax.f32 %v945, %v946
      %v948 = vrot.slane %v947, 2
      %v949 = vmax.f32 %v947, %v948
      %v950 = vrot.slane %v949, 1
      %v951 = vmax.f32 %v949, %v950
      %v952 = vpack.i.bf16 %v951, %v951
      %v954 = vsel %vm731, %v656, 4286644096
      %v956 = vunpack.i.l.bf16 %v954
      %v957 = vunpack.i.h.bf16 %v954
      %v958 = vmax.f32 %v956, %v957
      %v959 = vrot.slane %v958, 4
      %v960 = vmax.f32 %v958, %v959
      %v961 = vrot.slane %v960, 2
      %v962 = vmax.f32 %v960, %v961
      %v963 = vrot.slane %v962, 1
      %v964 = vmax.f32 %v962, %v963
      %v965 = vpack.i.bf16 %v964, %v964
      %v967 = vsel %vm731, %v657, 4286644096
      %v969 = vunpack.i.l.bf16 %v967
      %v970 = vunpack.i.h.bf16 %v967
      %v971 = vmax.f32 %v969, %v970
      %v972 = vrot.slane %v971, 4
      %v973 = vmax.f32 %v971, %v972
      %v974 = vrot.slane %v973, 2
      %v975 = vmax.f32 %v973, %v974
      %v976 = vrot.slane %v975, 1
      %v977 = vmax.f32 %v975, %v976
      %v978 = vpack.i.bf16 %v977, %v977
      %v980 = vsel %vm731, %v658, 4286644096
      %v982 = vunpack.i.l.bf16 %v980
      %v983 = vunpack.i.h.bf16 %v980
      %v984 = vmax.f32 %v982, %v983
      %v985 = vrot.slane %v984, 4
      %v986 = vmax.f32 %v984, %v985
      %v987 = vrot.slane %v986, 2
      %v988 = vmax.f32 %v986, %v987
      %v989 = vrot.slane %v988, 1
      %v990 = vmax.f32 %v988, %v989
      %v991 = vpack.i.bf16 %v990, %v990
      %v993 = vsel %vm731, %v673, 4286644096
      %v995 = vunpack.i.l.bf16 %v993
      %v996 = vunpack.i.h.bf16 %v993
      %v997 = vmax.f32 %v995, %v996
      %v998 = vrot.slane %v997, 4
      %v999 = vmax.f32 %v997, %v998
      %v1000 = vrot.slane %v999, 2
      %v1001 = vmax.f32 %v999, %v1000
      %v1002 = vrot.slane %v1001, 1
      %v1003 = vmax.f32 %v1001, %v1002
      %v1004 = vpack.i.bf16 %v1003, %v1003
      %v1006 = vsel %vm731, %v680, 4286644096
      %v1008 = vunpack.i.l.bf16 %v1006
      %v1009 = vunpack.i.h.bf16 %v1006
      %v1010 = vmax.f32 %v1008, %v1009
      %v1011 = vrot.slane %v1010, 4
      %v1012 = vmax.f32 %v1010, %v1011
      %v1013 = vrot.slane %v1012, 2
      %v1014 = vmax.f32 %v1012, %v1013
      %v1015 = vrot.slane %v1014, 1
      %v1016 = vmax.f32 %v1014, %v1015
      %v1017 = vpack.i.bf16 %v1016, %v1016
      %v1019 = vsel %vm731, %v681, 4286644096
      %v1021 = vunpack.i.l.bf16 %v1019
      %v1022 = vunpack.i.h.bf16 %v1019
      %v1023 = vmax.f32 %v1021, %v1022
      %v1024 = vrot.slane %v1023, 4
      %v1025 = vmax.f32 %v1023, %v1024
      %v1026 = vrot.slane %v1025, 2
      %v1027 = vmax.f32 %v1025, %v1026
      %v1028 = vrot.slane %v1027, 1
      %v1029 = vmax.f32 %v1027, %v1028
      %v1030 = vpack.i.bf16 %v1029, %v1029
      %v1032 = vsel %vm731, %v682, 4286644096
      %v1034 = vunpack.i.l.bf16 %v1032
      %v1035 = vunpack.i.h.bf16 %v1032
      %v1036 = vmax.f32 %v1034, %v1035
      %v1037 = vrot.slane %v1036, 4
      %v1038 = vmax.f32 %v1036, %v1037
      %v1039 = vrot.slane %v1038, 2
      %v1040 = vmax.f32 %v1038, %v1039
      %v1041 = vrot.slane %v1040, 1
      %v1042 = vmax.f32 %v1040, %v1041
      %v1043 = vpack.i.bf16 %v1042, %v1042
      %v1045 = vsel %vm731, %v697, 4286644096
      %v1047 = vunpack.i.l.bf16 %v1045
      %v1048 = vunpack.i.h.bf16 %v1045
      %v1049 = vmax.f32 %v1047, %v1048
      %v1050 = vrot.slane %v1049, 4
      %v1051 = vmax.f32 %v1049, %v1050
      %v1052 = vrot.slane %v1051, 2
      %v1053 = vmax.f32 %v1051, %v1052
      %v1054 = vrot.slane %v1053, 1
      %v1055 = vmax.f32 %v1053, %v1054
      %v1056 = vpack.i.bf16 %v1055, %v1055
      %v1058 = vsel %vm731, %v704, 4286644096
      %v1060 = vunpack.i.l.bf16 %v1058
      %v1061 = vunpack.i.h.bf16 %v1058
      %v1062 = vmax.f32 %v1060, %v1061
      %v1063 = vrot.slane %v1062, 4
      %v1064 = vmax.f32 %v1062, %v1063
      %v1065 = vrot.slane %v1064, 2
      %v1066 = vmax.f32 %v1064, %v1065
      %v1067 = vrot.slane %v1066, 1
      %v1068 = vmax.f32 %v1066, %v1067
      %v1069 = vpack.i.bf16 %v1068, %v1068
      %v1071 = vsel %vm731, %v705, 4286644096
      %v1073 = vunpack.i.l.bf16 %v1071
      %v1074 = vunpack.i.h.bf16 %v1071
      %v1075 = vmax.f32 %v1073, %v1074
      %v1076 = vrot.slane %v1075, 4
      %v1077 = vmax.f32 %v1075, %v1076
      %v1078 = vrot.slane %v1077, 2
      %v1079 = vmax.f32 %v1077, %v1078
      %v1080 = vrot.slane %v1079, 1
      %v1081 = vmax.f32 %v1079, %v1080
      %v1082 = vpack.i.bf16 %v1081, %v1081
      %v1084 = vsel %vm731, %v706, 4286644096
      %v1086 = vunpack.i.l.bf16 %v1084
      %v1087 = vunpack.i.h.bf16 %v1084
      %v1088 = vmax.f32 %v1086, %v1087
      %v1089 = vrot.slane %v1088, 4
      %v1090 = vmax.f32 %v1088, %v1089
      %v1091 = vrot.slane %v1090, 2
      %v1092 = vmax.f32 %v1090, %v1091
      %v1093 = vrot.slane %v1092, 1
      %v1094 = vmax.f32 %v1092, %v1093
      %v1095 = vpack.i.bf16 %v1094, %v1094
      %v1097 = vsel %vm731, %v721, 4286644096
      %v1099 = vunpack.i.l.bf16 %v1097
      %v1100 = vunpack.i.h.bf16 %v1097
      %v1101 = vmax.f32 %v1099, %v1100
      %v1102 = vrot.slane %v1101, 4
      %v1103 = vmax.f32 %v1101, %v1102
      %v1104 = vrot.slane %v1103, 2
      %v1105 = vmax.f32 %v1103, %v1104
      %v1106 = vrot.slane %v1105, 1
      %v1107 = vmax.f32 %v1105, %v1106
      %v1108 = vpack.i.bf16 %v1107, %v1107
      %v1110 = vsel %vm731, %v728, 4286644096
      %v1112 = vunpack.i.l.bf16 %v1110
      %v1113 = vunpack.i.h.bf16 %v1110
      %v1114 = vmax.f32 %v1112, %v1113
      %v1115 = vrot.slane %v1114, 4
      %v1116 = vmax.f32 %v1114, %v1115
      %v1117 = vrot.slane %v1116, 2
      %v1118 = vmax.f32 %v1116, %v1117
      %v1119 = vrot.slane %v1118, 1
      %v1120 = vmax.f32 %v1118, %v1119
      %v1121 = vpack.i.bf16 %v1120, %v1120
      %v1123 = vsel %vm731, %v729, 4286644096
      %v1125 = vunpack.i.l.bf16 %v1123
      %v1126 = vunpack.i.h.bf16 %v1123
      %v1127 = vmax.f32 %v1125, %v1126
      %v1128 = vrot.slane %v1127, 4
      %v1129 = vmax.f32 %v1127, %v1128
      %v1130 = vrot.slane %v1129, 2
      %v1131 = vmax.f32 %v1129, %v1130
      %v1132 = vrot.slane %v1131, 1
      %v1133 = vmax.f32 %v1131, %v1132
      %v1134 = vpack.i.bf16 %v1133, %v1133
      %v1136 = vsel %vm731, %v730, 4286644096
      %v1138 = vunpack.i.l.bf16 %v1136
      %v1139 = vunpack.i.h.bf16 %v1136
      %v1140 = vmax.f32 %v1138, %v1139
      %v1141 = vrot.slane %v1140, 4
      %v1142 = vmax.f32 %v1140, %v1141
      %v1143 = vrot.slane %v1142, 2
      %v1144 = vmax.f32 %v1142, %v1143
      %v1145 = vrot.slane %v1144, 1
      %v1146 = vmax.f32 %v1144, %v1145
      %v1147 = vpack.i.bf16 %v1146, %v1146
      %v1148 = vld [vmem:[%s420] sm:$0xf]
      %v1149 = vld [vmem:[%s420 + $0x4] sm:$0xf]
      %v1150 = vld [vmem:[%s420 + $0x8] sm:$0xf]
      %v1151 = vld [vmem:[%s420 + $0xc] sm:$0xf]
      %v1152 = vld [vmem:[%s420 + $0x10] sm:$0xf]
      %v1153 = vld [vmem:[%s420 + $0x14] sm:$0xf]
      %v1154 = vld [vmem:[%s420 + $0x18] sm:$0xf]
      %v1155 = vld [vmem:[%s420 + $0x1c] sm:$0xf]
      %v1157 = vsel %vm473, %v1148, 4286644096
      %v1160 = vsel %vm473, %v1150, 4286644096
      %v1162 = vmax.bf16 %v1157, %v1160
      %v1164 = vsel %vm473, %v1149, 4286644096
      %v1167 = vsel %vm473, %v1151, 4286644096
      %v1169 = vmax.bf16 %v1164, %v1167
      %v1171 = vsel %vm473, %v1152, 4286644096
      %v1174 = vsel %vm473, %v1154, 4286644096
      %v1176 = vmax.bf16 %v1171, %v1174
      %v1178 = vsel %vm473, %v1153, 4286644096
      %v1181 = vsel %vm473, %v1155, 4286644096
      %v1183 = vmax.bf16 %v1178, %v1181
      %v1189 = vunpack.c.l.s4 1966171168
      %v1190 = vunpack.c.0.s8 %v1189
      %v1191 = vlaneseq
      %v1192 = vshrl.u32 %v1191, 7
      %v1193 = vsub.s32 %v1190, %v1192
      %v1194 = vrot.slane %v1162, %v1193
      %v1195 = vcombine.high %v1194, %v1194
      %v1197 = vunpack.c.l.s4 1966171168
      %v1198 = vunpack.c.0.s8 %v1197
      %v1199 = vlaneseq
      %v1200 = vshrl.u32 %v1199, 7
      %v1201 = vsub.s32 %v1198, %v1200
      %v1202 = vrot.slane %v1194, %v1201
      %v1204 = vunpack.c.l.s4 1966171168
      %v1205 = vunpack.c.0.s8 %v1204
      %v1206 = vlaneseq
      %v1207 = vshrl.u32 %v1206, 7
      %v1208 = vsub.s32 %v1205, %v1207
      %v1209 = vrot.slane %v1195, %v1208
      %v1210 = vcombine.high %v1202, %v1202
      %v1211 = vcombine.high %v1209, %v1209
      %v1213 = vunpack.c.l.s4 1966171168
      %v1214 = vunpack.c.0.s8 %v1213
      %v1215 = vlaneseq
      %v1216 = vshrl.u32 %v1215, 7
      %v1217 = vsub.s32 %v1214, %v1216
      %v1218 = vrot.slane %v1169, %v1217
      %v1219 = vcombine.high %v1218, %v1218
      %v1221 = vunpack.c.l.s4 1966171168
      %v1222 = vunpack.c.0.s8 %v1221
      %v1223 = vlaneseq
      %v1224 = vshrl.u32 %v1223, 7
      %v1225 = vsub.s32 %v1222, %v1224
      %v1226 = vrot.slane %v1218, %v1225
      %v1228 = vunpack.c.l.s4 1966171168
      %v1229 = vunpack.c.0.s8 %v1228
      %v1230 = vlaneseq
      %v1231 = vshrl.u32 %v1230, 7
      %v1232 = vsub.s32 %v1229, %v1231
      %v1233 = vrot.slane %v1219, %v1232
      %v1234 = vcombine.high %v1226, %v1226
      %v1235 = vcombine.high %v1233, %v1233
      %v1237 = vunpack.c.l.s4 1966171168
      %v1238 = vunpack.c.0.s8 %v1237
      %v1239 = vlaneseq
      %v1240 = vshrl.u32 %v1239, 7
      %v1241 = vsub.s32 %v1238, %v1240
      %v1242 = vrot.slane %v1176, %v1241
      %v1243 = vcombine.high %v1242, %v1242
      %v1245 = vunpack.c.l.s4 1966171168
      %v1246 = vunpack.c.0.s8 %v1245
      %v1247 = vlaneseq
      %v1248 = vshrl.u32 %v1247, 7
      %v1249 = vsub.s32 %v1246, %v1248
      %v1250 = vrot.slane %v1242, %v1249
      %v1252 = vunpack.c.l.s4 1966171168
      %v1253 = vunpack.c.0.s8 %v1252
      %v1254 = vlaneseq
      %v1255 = vshrl.u32 %v1254, 7
      %v1256 = vsub.s32 %v1253, %v1255
      %v1257 = vrot.slane %v1243, %v1256
      %v1258 = vcombine.high %v1250, %v1250
      %v1259 = vcombine.high %v1257, %v1257
      %v1261 = vunpack.c.l.s4 1966171168
      %v1262 = vunpack.c.0.s8 %v1261
      %v1263 = vlaneseq
      %v1264 = vshrl.u32 %v1263, 7
      %v1265 = vsub.s32 %v1262, %v1264
      %v1266 = vrot.slane %v1183, %v1265
      %v1267 = vcombine.high %v1266, %v1266
      %v1269 = vunpack.c.l.s4 1966171168
      %v1270 = vunpack.c.0.s8 %v1269
      %v1271 = vlaneseq
      %v1272 = vshrl.u32 %v1271, 7
      %v1273 = vsub.s32 %v1270, %v1272
      %v1274 = vrot.slane %v1266, %v1273
      %v1276 = vunpack.c.l.s4 1966171168
      %v1277 = vunpack.c.0.s8 %v1276
      %v1278 = vlaneseq
      %v1279 = vshrl.u32 %v1278, 7
      %v1280 = vsub.s32 %v1277, %v1279
      %v1281 = vrot.slane %v1267, %v1280
      %v1282 = vcombine.high %v1274, %v1274
      %v1283 = vcombine.high %v1281, %v1281
      %v1285 = vsel %vm731, %v1202, 4286644096
      %v1287 = vunpack.i.l.bf16 %v1285
      %v1288 = vunpack.i.h.bf16 %v1285
      %v1289 = vmax.f32 %v1287, %v1288
      %v1290 = vrot.slane %v1289, 4
      %v1291 = vmax.f32 %v1289, %v1290
      %v1292 = vrot.slane %v1291, 2
      %v1293 = vmax.f32 %v1291, %v1292
      %v1294 = vrot.slane %v1293, 1
      %v1295 = vmax.f32 %v1293, %v1294
      %v1296 = vpack.i.bf16 %v1295, %v1295
      %v1298 = vsel %vm731, %v1209, 4286644096
      %v1300 = vunpack.i.l.bf16 %v1298
      %v1301 = vunpack.i.h.bf16 %v1298
      %v1302 = vmax.f32 %v1300, %v1301
      %v1303 = vrot.slane %v1302, 4
      %v1304 = vmax.f32 %v1302, %v1303
      %v1305 = vrot.slane %v1304, 2
      %v1306 = vmax.f32 %v1304, %v1305
      %v1307 = vrot.slane %v1306, 1
      %v1308 = vmax.f32 %v1306, %v1307
      %v1309 = vpack.i.bf16 %v1308, %v1308
      %v1311 = vsel %vm731, %v1210, 4286644096
      %v1313 = vunpack.i.l.bf16 %v1311
      %v1314 = vunpack.i.h.bf16 %v1311
      %v1315 = vmax.f32 %v1313, %v1314
      %v1316 = vrot.slane %v1315, 4
      %v1317 = vmax.f32 %v1315, %v1316
      %v1318 = vrot.slane %v1317, 2
      %v1319 = vmax.f32 %v1317, %v1318
      %v1320 = vrot.slane %v1319, 1
      %v1321 = vmax.f32 %v1319, %v1320
      %v1322 = vpack.i.bf16 %v1321, %v1321
      %v1324 = vsel %vm731, %v1211, 4286644096
      %v1326 = vunpack.i.l.bf16 %v1324
      %v1327 = vunpack.i.h.bf16 %v1324
      %v1328 = vmax.f32 %v1326, %v1327
      %v1329 = vrot.slane %v1328, 4
      %v1330 = vmax.f32 %v1328, %v1329
      %v1331 = vrot.slane %v1330, 2
      %v1332 = vmax.f32 %v1330, %v1331
      %v1333 = vrot.slane %v1332, 1
      %v1334 = vmax.f32 %v1332, %v1333
      %v1335 = vpack.i.bf16 %v1334, %v1334
      %v1337 = vsel %vm731, %v1226, 4286644096
      %v1339 = vunpack.i.l.bf16 %v1337
      %v1340 = vunpack.i.h.bf16 %v1337
      %v1341 = vmax.f32 %v1339, %v1340
      %v1342 = vrot.slane %v1341, 4
      %v1343 = vmax.f32 %v1341, %v1342
      %v1344 = vrot.slane %v1343, 2
      %v1345 = vmax.f32 %v1343, %v1344
      %v1346 = vrot.slane %v1345, 1
      %v1347 = vmax.f32 %v1345, %v1346
      %v1348 = vpack.i.bf16 %v1347, %v1347
      %v1350 = vsel %vm731, %v1233, 4286644096
      %v1352 = vunpack.i.l.bf16 %v1350
      %v1353 = vunpack.i.h.bf16 %v1350
      %v1354 = vmax.f32 %v1352, %v1353
      %v1355 = vrot.slane %v1354, 4
      %v1356 = vmax.f32 %v1354, %v1355
      %v1357 = vrot.slane %v1356, 2
      %v1358 = vmax.f32 %v1356, %v1357
      %v1359 = vrot.slane %v1358, 1
      %v1360 = vmax.f32 %v1358, %v1359
      %v1361 = vpack.i.bf16 %v1360, %v1360
      %v1363 = vsel %vm731, %v1234, 4286644096
      %v1365 = vunpack.i.l.bf16 %v1363
      %v1366 = vunpack.i.h.bf16 %v1363
      %v1367 = vmax.f32 %v1365, %v1366
      %v1368 = vrot.slane %v1367, 4
      %v1369 = vmax.f32 %v1367, %v1368
      %v1370 = vrot.slane %v1369, 2
      %v1371 = vmax.f32 %v1369, %v1370
      %v1372 = vrot.slane %v1371, 1
      %v1373 = vmax.f32 %v1371, %v1372
      %v1374 = vpack.i.bf16 %v1373, %v1373
      %v1376 = vsel %vm731, %v1235, 4286644096
      %v1378 = vunpack.i.l.bf16 %v1376
      %v1379 = vunpack.i.h.bf16 %v1376
      %v1380 = vmax.f32 %v1378, %v1379
      %v1381 = vrot.slane %v1380, 4
      %v1382 = vmax.f32 %v1380, %v1381
      %v1383 = vrot.slane %v1382, 2
      %v1384 = vmax.f32 %v1382, %v1383
      %v1385 = vrot.slane %v1384, 1
      %v1386 = vmax.f32 %v1384, %v1385
      %v1387 = vpack.i.bf16 %v1386, %v1386
      %v1389 = vsel %vm731, %v1250, 4286644096
      %v1391 = vunpack.i.l.bf16 %v1389
      %v1392 = vunpack.i.h.bf16 %v1389
      %v1393 = vmax.f32 %v1391, %v1392
      %v1394 = vrot.slane %v1393, 4
      %v1395 = vmax.f32 %v1393, %v1394
      %v1396 = vrot.slane %v1395, 2
      %v1397 = vmax.f32 %v1395, %v1396
      %v1398 = vrot.slane %v1397, 1
      %v1399 = vmax.f32 %v1397, %v1398
      %v1400 = vpack.i.bf16 %v1399, %v1399
      %v1402 = vsel %vm731, %v1257, 4286644096
      %v1404 = vunpack.i.l.bf16 %v1402
      %v1405 = vunpack.i.h.bf16 %v1402
      %v1406 = vmax.f32 %v1404, %v1405
      %v1407 = vrot.slane %v1406, 4
      %v1408 = vmax.f32 %v1406, %v1407
      %v1409 = vrot.slane %v1408, 2
      %v1410 = vmax.f32 %v1408, %v1409
      %v1411 = vrot.slane %v1410, 1
      %v1412 = vmax.f32 %v1410, %v1411
      %v1413 = vpack.i.bf16 %v1412, %v1412
      %v1415 = vsel %vm731, %v1258, 4286644096
      %v1417 = vunpack.i.l.bf16 %v1415
      %v1418 = vunpack.i.h.bf16 %v1415
      %v1419 = vmax.f32 %v1417, %v1418
      %v1420 = vrot.slane %v1419, 4
      %v1421 = vmax.f32 %v1419, %v1420
      %v1422 = vrot.slane %v1421, 2
      %v1423 = vmax.f32 %v1421, %v1422
      %v1424 = vrot.slane %v1423, 1
      %v1425 = vmax.f32 %v1423, %v1424
      %v1426 = vpack.i.bf16 %v1425, %v1425
      %v1428 = vsel %vm731, %v1259, 4286644096
      %v1430 = vunpack.i.l.bf16 %v1428
      %v1431 = vunpack.i.h.bf16 %v1428
      %v1432 = vmax.f32 %v1430, %v1431
      %v1433 = vrot.slane %v1432, 4
      %v1434 = vmax.f32 %v1432, %v1433
      %v1435 = vrot.slane %v1434, 2
      %v1436 = vmax.f32 %v1434, %v1435
      %v1437 = vrot.slane %v1436, 1
      %v1438 = vmax.f32 %v1436, %v1437
      %v1439 = vpack.i.bf16 %v1438, %v1438
      %v1441 = vsel %vm731, %v1274, 4286644096
      %v1443 = vunpack.i.l.bf16 %v1441
      %v1444 = vunpack.i.h.bf16 %v1441
      %v1445 = vmax.f32 %v1443, %v1444
      %v1446 = vrot.slane %v1445, 4
      %v1447 = vmax.f32 %v1445, %v1446
      %v1448 = vrot.slane %v1447, 2
      %v1449 = vmax.f32 %v1447, %v1448
      %v1450 = vrot.slane %v1449, 1
      %v1451 = vmax.f32 %v1449, %v1450
      %v1452 = vpack.i.bf16 %v1451, %v1451
      %v1454 = vsel %vm731, %v1281, 4286644096
      %v1456 = vunpack.i.l.bf16 %v1454
      %v1457 = vunpack.i.h.bf16 %v1454
      %v1458 = vmax.f32 %v1456, %v1457
      %v1459 = vrot.slane %v1458, 4
      %v1460 = vmax.f32 %v1458, %v1459
      %v1461 = vrot.slane %v1460, 2
      %v1462 = vmax.f32 %v1460, %v1461
      %v1463 = vrot.slane %v1462, 1
      %v1464 = vmax.f32 %v1462, %v1463
      %v1465 = vpack.i.bf16 %v1464, %v1464
      %v1467 = vsel %vm731, %v1282, 4286644096
      %v1469 = vunpack.i.l.bf16 %v1467
      %v1470 = vunpack.i.h.bf16 %v1467
      %v1471 = vmax.f32 %v1469, %v1470
      %v1472 = vrot.slane %v1471, 4
      %v1473 = vmax.f32 %v1471, %v1472
      %v1474 = vrot.slane %v1473, 2
      %v1475 = vmax.f32 %v1473, %v1474
      %v1476 = vrot.slane %v1475, 1
      %v1477 = vmax.f32 %v1475, %v1476
      %v1478 = vpack.i.bf16 %v1477, %v1477
      %v1480 = vsel %vm731, %v1283, 4286644096
      %v1482 = vunpack.i.l.bf16 %v1480
      %v1483 = vunpack.i.h.bf16 %v1480
      %v1484 = vmax.f32 %v1482, %v1483
      %v1485 = vrot.slane %v1484, 4
      %v1486 = vmax.f32 %v1484, %v1485
      %v1487 = vrot.slane %v1486, 2
      %v1488 = vmax.f32 %v1486, %v1487
      %v1489 = vrot.slane %v1488, 1
      %v1490 = vmax.f32 %v1488, %v1489
      %v1491 = vpack.i.bf16 %v1490, %v1490
      %v1492 = vld [vmem:[%s439] sm:$0xf]
      %v1493 = vld [vmem:[%s439 + $0x4] sm:$0xf]
      %v1494 = vld [vmem:[%s439 + $0x8] sm:$0xf]
      %v1495 = vld [vmem:[%s439 + $0xc] sm:$0xf]
      %v1496 = vld [vmem:[%s439 + $0x10] sm:$0xf]
      %v1497 = vld [vmem:[%s439 + $0x14] sm:$0xf]
      %v1498 = vld [vmem:[%s439 + $0x18] sm:$0xf]
      %v1499 = vld [vmem:[%s439 + $0x1c] sm:$0xf]
      %v1501 = vsel %vm473, %v1492, 4286644096
      %v1504 = vsel %vm473, %v1494, 4286644096
      %v1506 = vmax.bf16 %v1501, %v1504
      %v1508 = vsel %vm473, %v1493, 4286644096
      %v1511 = vsel %vm473, %v1495, 4286644096
      %v1513 = vmax.bf16 %v1508, %v1511
      %v1515 = vsel %vm473, %v1496, 4286644096
      %v1518 = vsel %vm473, %v1498, 4286644096
      %v1520 = vmax.bf16 %v1515, %v1518
      %v1522 = vsel %vm473, %v1497, 4286644096
      %v1525 = vsel %vm473, %v1499, 4286644096
      %v1527 = vmax.bf16 %v1522, %v1525
      %v1533 = vunpack.c.l.s4 1966171168
      %v1534 = vunpack.c.0.s8 %v1533
      %v1535 = vlaneseq
      %v1536 = vshrl.u32 %v1535, 7
      %v1537 = vsub.s32 %v1534, %v1536
      %v1538 = vrot.slane %v1506, %v1537
      %v1539 = vcombine.high %v1538, %v1538
      %v1541 = vunpack.c.l.s4 1966171168
      %v1542 = vunpack.c.0.s8 %v1541
      %v1543 = vlaneseq
      %v1544 = vshrl.u32 %v1543, 7
      %v1545 = vsub.s32 %v1542, %v1544
      %v1546 = vrot.slane %v1538, %v1545
      %v1548 = vunpack.c.l.s4 1966171168
      %v1549 = vunpack.c.0.s8 %v1548
      %v1550 = vlaneseq
      %v1551 = vshrl.u32 %v1550, 7
      %v1552 = vsub.s32 %v1549, %v1551
      %v1553 = vrot.slane %v1539, %v1552
      %v1554 = vcombine.high %v1546, %v1546
      %v1555 = vcombine.high %v1553, %v1553
      %v1557 = vunpack.c.l.s4 1966171168
      %v1558 = vunpack.c.0.s8 %v1557
      %v1559 = vlaneseq
      %v1560 = vshrl.u32 %v1559, 7
      %v1561 = vsub.s32 %v1558, %v1560
      %v1562 = vrot.slane %v1513, %v1561
      %v1563 = vcombine.high %v1562, %v1562
      %v1565 = vunpack.c.l.s4 1966171168
      %v1566 = vunpack.c.0.s8 %v1565
      %v1567 = vlaneseq
      %v1568 = vshrl.u32 %v1567, 7
      %v1569 = vsub.s32 %v1566, %v1568
      %v1570 = vrot.slane %v1562, %v1569
      %v1572 = vunpack.c.l.s4 1966171168
      %v1573 = vunpack.c.0.s8 %v1572
      %v1574 = vlaneseq
      %v1575 = vshrl.u32 %v1574, 7
      %v1576 = vsub.s32 %v1573, %v1575
      %v1577 = vrot.slane %v1563, %v1576
      %v1578 = vcombine.high %v1570, %v1570
      %v1579 = vcombine.high %v1577, %v1577
      %v1581 = vunpack.c.l.s4 1966171168
      %v1582 = vunpack.c.0.s8 %v1581
      %v1583 = vlaneseq
      %v1584 = vshrl.u32 %v1583, 7
      %v1585 = vsub.s32 %v1582, %v1584
      %v1586 = vrot.slane %v1520, %v1585
      %v1587 = vcombine.high %v1586, %v1586
      %v1589 = vunpack.c.l.s4 1966171168
      %v1590 = vunpack.c.0.s8 %v1589
      %v1591 = vlaneseq
      %v1592 = vshrl.u32 %v1591, 7
      %v1593 = vsub.s32 %v1590, %v1592
      %v1594 = vrot.slane %v1586, %v1593
      %v1596 = vunpack.c.l.s4 1966171168
      %v1597 = vunpack.c.0.s8 %v1596
      %v1598 = vlaneseq
      %v1599 = vshrl.u32 %v1598, 7
      %v1600 = vsub.s32 %v1597, %v1599
      %v1601 = vrot.slane %v1587, %v1600
      %v1602 = vcombine.high %v1594, %v1594
      %v1603 = vcombine.high %v1601, %v1601
      %v1605 = vunpack.c.l.s4 1966171168
      %v1606 = vunpack.c.0.s8 %v1605
      %v1607 = vlaneseq
      %v1608 = vshrl.u32 %v1607, 7
      %v1609 = vsub.s32 %v1606, %v1608
      %v1610 = vrot.slane %v1527, %v1609
      %v1611 = vcombine.high %v1610, %v1610
      %v1613 = vunpack.c.l.s4 1966171168
      %v1614 = vunpack.c.0.s8 %v1613
      %v1615 = vlaneseq
      %v1616 = vshrl.u32 %v1615, 7
      %v1617 = vsub.s32 %v1614, %v1616
      %v1618 = vrot.slane %v1610, %v1617
      %v1620 = vunpack.c.l.s4 1966171168
      %v1621 = vunpack.c.0.s8 %v1620
      %v1622 = vlaneseq
      %v1623 = vshrl.u32 %v1622, 7
      %v1624 = vsub.s32 %v1621, %v1623
      %v1625 = vrot.slane %v1611, %v1624
      %v1626 = vcombine.high %v1618, %v1618
      %v1627 = vcombine.high %v1625, %v1625
      %v1629 = vsel %vm731, %v1546, 4286644096
      %v1631 = vunpack.i.l.bf16 %v1629
      %v1632 = vunpack.i.h.bf16 %v1629
      %v1633 = vmax.f32 %v1631, %v1632
      %v1634 = vrot.slane %v1633, 4
      %v1635 = vmax.f32 %v1633, %v1634
      %v1636 = vrot.slane %v1635, 2
      %v1637 = vmax.f32 %v1635, %v1636
      %v1638 = vrot.slane %v1637, 1
      %v1639 = vmax.f32 %v1637, %v1638
      %v1640 = vpack.i.bf16 %v1639, %v1639
      %v1642 = vsel %vm731, %v1553, 4286644096
      %v1644 = vunpack.i.l.bf16 %v1642
      %v1645 = vunpack.i.h.bf16 %v1642
      %v1646 = vmax.f32 %v1644, %v1645
      %v1647 = vrot.slane %v1646, 4
      %v1648 = vmax.f32 %v1646, %v1647
      %v1649 = vrot.slane %v1648, 2
      %v1650 = vmax.f32 %v1648, %v1649
      %v1651 = vrot.slane %v1650, 1
      %v1652 = vmax.f32 %v1650, %v1651
      %v1653 = vpack.i.bf16 %v1652, %v1652
      %v1655 = vsel %vm731, %v1554, 4286644096
      %v1657 = vunpack.i.l.bf16 %v1655
      %v1658 = vunpack.i.h.bf16 %v1655
      %v1659 = vmax.f32 %v1657, %v1658
      %v1660 = vrot.slane %v1659, 4
      %v1661 = vmax.f32 %v1659, %v1660
      %v1662 = vrot.slane %v1661, 2
      %v1663 = vmax.f32 %v1661, %v1662
      %v1664 = vrot.slane %v1663, 1
      %v1665 = vmax.f32 %v1663, %v1664
      %v1666 = vpack.i.bf16 %v1665, %v1665
      %v1668 = vsel %vm731, %v1555, 4286644096
      %v1670 = vunpack.i.l.bf16 %v1668
      %v1671 = vunpack.i.h.bf16 %v1668
      %v1672 = vmax.f32 %v1670, %v1671
      %v1673 = vrot.slane %v1672, 4
      %v1674 = vmax.f32 %v1672, %v1673
      %v1675 = vrot.slane %v1674, 2
      %v1676 = vmax.f32 %v1674, %v1675
      %v1677 = vrot.slane %v1676, 1
      %v1678 = vmax.f32 %v1676, %v1677
      %v1679 = vpack.i.bf16 %v1678, %v1678
      %v1681 = vsel %vm731, %v1570, 4286644096
      %v1683 = vunpack.i.l.bf16 %v1681
      %v1684 = vunpack.i.h.bf16 %v1681
      %v1685 = vmax.f32 %v1683, %v1684
      %v1686 = vrot.slane %v1685, 4
      %v1687 = vmax.f32 %v1685, %v1686
      %v1688 = vrot.slane %v1687, 2
      %v1689 = vmax.f32 %v1687, %v1688
      %v1690 = vrot.slane %v1689, 1
      %v1691 = vmax.f32 %v1689, %v1690
      %v1692 = vpack.i.bf16 %v1691, %v1691
      %v1694 = vsel %vm731, %v1577, 4286644096
      %v1696 = vunpack.i.l.bf16 %v1694
      %v1697 = vunpack.i.h.bf16 %v1694
      %v1698 = vmax.f32 %v1696, %v1697
      %v1699 = vrot.slane %v1698, 4
      %v1700 = vmax.f32 %v1698, %v1699
      %v1701 = vrot.slane %v1700, 2
      %v1702 = vmax.f32 %v1700, %v1701
      %v1703 = vrot.slane %v1702, 1
      %v1704 = vmax.f32 %v1702, %v1703
      %v1705 = vpack.i.bf16 %v1704, %v1704
      %v1707 = vsel %vm731, %v1578, 4286644096
      %v1709 = vunpack.i.l.bf16 %v1707
      %v1710 = vunpack.i.h.bf16 %v1707
      %v1711 = vmax.f32 %v1709, %v1710
      %v1712 = vrot.slane %v1711, 4
      %v1713 = vmax.f32 %v1711, %v1712
      %v1714 = vrot.slane %v1713, 2
      %v1715 = vmax.f32 %v1713, %v1714
      %v1716 = vrot.slane %v1715, 1
      %v1717 = vmax.f32 %v1715, %v1716
      %v1718 = vpack.i.bf16 %v1717, %v1717
      %v1720 = vsel %vm731, %v1579, 4286644096
      %v1722 = vunpack.i.l.bf16 %v1720
      %v1723 = vunpack.i.h.bf16 %v1720
      %v1724 = vmax.f32 %v1722, %v1723
      %v1725 = vrot.slane %v1724, 4
      %v1726 = vmax.f32 %v1724, %v1725
      %v1727 = vrot.slane %v1726, 2
      %v1728 = vmax.f32 %v1726, %v1727
      %v1729 = vrot.slane %v1728, 1
      %v1730 = vmax.f32 %v1728, %v1729
      %v1731 = vpack.i.bf16 %v1730, %v1730
      %v1733 = vsel %vm731, %v1594, 4286644096
      %v1735 = vunpack.i.l.bf16 %v1733
      %v1736 = vunpack.i.h.bf16 %v1733
      %v1737 = vmax.f32 %v1735, %v1736
      %v1738 = vrot.slane %v1737, 4
      %v1739 = vmax.f32 %v1737, %v1738
      %v1740 = vrot.slane %v1739, 2
      %v1741 = vmax.f32 %v1739, %v1740
      %v1742 = vrot.slane %v1741, 1
      %v1743 = vmax.f32 %v1741, %v1742
      %v1744 = vpack.i.bf16 %v1743, %v1743
      %v1746 = vsel %vm731, %v1601, 4286644096
      %v1748 = vunpack.i.l.bf16 %v1746
      %v1749 = vunpack.i.h.bf16 %v1746
      %v1750 = vmax.f32 %v1748, %v1749
      %v1751 = vrot.slane %v1750, 4
      %v1752 = vmax.f32 %v1750, %v1751
      %v1753 = vrot.slane %v1752, 2
      %v1754 = vmax.f32 %v1752, %v1753
      %v1755 = vrot.slane %v1754, 1
      %v1756 = vmax.f32 %v1754, %v1755
      %v1757 = vpack.i.bf16 %v1756, %v1756
      %v1759 = vsel %vm731, %v1602, 4286644096
      %v1761 = vunpack.i.l.bf16 %v1759
      %v1762 = vunpack.i.h.bf16 %v1759
      %v1763 = vmax.f32 %v1761, %v1762
      %v1764 = vrot.slane %v1763, 4
      %v1765 = vmax.f32 %v1763, %v1764
      %v1766 = vrot.slane %v1765, 2
      %v1767 = vmax.f32 %v1765, %v1766
      %v1768 = vrot.slane %v1767, 1
      %v1769 = vmax.f32 %v1767, %v1768
      %v1770 = vpack.i.bf16 %v1769, %v1769
      %v1772 = vsel %vm731, %v1603, 4286644096
      %v1774 = vunpack.i.l.bf16 %v1772
      %v1775 = vunpack.i.h.bf16 %v1772
      %v1776 = vmax.f32 %v1774, %v1775
      %v1777 = vrot.slane %v1776, 4
      %v1778 = vmax.f32 %v1776, %v1777
      %v1779 = vrot.slane %v1778, 2
      %v1780 = vmax.f32 %v1778, %v1779
      %v1781 = vrot.slane %v1780, 1
      %v1782 = vmax.f32 %v1780, %v1781
      %v1783 = vpack.i.bf16 %v1782, %v1782
      %v1785 = vsel %vm731, %v1618, 4286644096
      %v1787 = vunpack.i.l.bf16 %v1785
      %v1788 = vunpack.i.h.bf16 %v1785
      %v1789 = vmax.f32 %v1787, %v1788
      %v1790 = vrot.slane %v1789, 4
      %v1791 = vmax.f32 %v1789, %v1790
      %v1792 = vrot.slane %v1791, 2
      %v1793 = vmax.f32 %v1791, %v1792
      %v1794 = vrot.slane %v1793, 1
      %v1795 = vmax.f32 %v1793, %v1794
      %v1796 = vpack.i.bf16 %v1795, %v1795
      %v1798 = vsel %vm731, %v1625, 4286644096
      %v1800 = vunpack.i.l.bf16 %v1798
      %v1801 = vunpack.i.h.bf16 %v1798
      %v1802 = vmax.f32 %v1800, %v1801
      %v1803 = vrot.slane %v1802, 4
      %v1804 = vmax.f32 %v1802, %v1803
      %v1805 = vrot.slane %v1804, 2
      %v1806 = vmax.f32 %v1804, %v1805
      %v1807 = vrot.slane %v1806, 1
      %v1808 = vmax.f32 %v1806, %v1807
      %v1809 = vpack.i.bf16 %v1808, %v1808
      %v1811 = vsel %vm731, %v1626, 4286644096
      %v1813 = vunpack.i.l.bf16 %v1811
      %v1814 = vunpack.i.h.bf16 %v1811
      %v1815 = vmax.f32 %v1813, %v1814
      %v1816 = vrot.slane %v1815, 4
      %v1817 = vmax.f32 %v1815, %v1816
      %v1818 = vrot.slane %v1817, 2
      %v1819 = vmax.f32 %v1817, %v1818
      %v1820 = vrot.slane %v1819, 1
      %v1821 = vmax.f32 %v1819, %v1820
      %v1822 = vpack.i.bf16 %v1821, %v1821
      %v1824 = vsel %vm731, %v1627, 4286644096
      %v1826 = vunpack.i.l.bf16 %v1824
      %v1827 = vunpack.i.h.bf16 %v1824
      %v1828 = vmax.f32 %v1826, %v1827
      %v1829 = vrot.slane %v1828, 4
      %v1830 = vmax.f32 %v1828, %v1829
      %v1831 = vrot.slane %v1830, 2
      %v1832 = vmax.f32 %v1830, %v1831
      %v1833 = vrot.slane %v1832, 1
      %v1834 = vmax.f32 %v1832, %v1833
      %v1835 = vpack.i.bf16 %v1834, %v1834
      %p1836 = scmp.gt.s32.totalorder %s23, 0
      %s1837 = scalar_select %p1836, 1, 0
      %v1838 = vstv %s1837
      %vm1839 = vcmp.eq.s32.totalorder %v1838, 1
      %v1840 = vsel %vm1839, %v1296, 0
      %v1841 = vsel %vm1839, %v1309, 0
      %v1842 = vsel %vm1839, %v1322, 0
      %v1843 = vsel %vm1839, %v1335, 0
      %v1844 = vsel %vm1839, %v1348, 0
      %v1845 = vsel %vm1839, %v1361, 0
      %v1846 = vsel %vm1839, %v1374, 0
      %v1847 = vsel %vm1839, %v1387, 0
      %v1848 = vsel %vm1839, %v1400, 0
      %v1849 = vsel %vm1839, %v1413, 0
      %v1850 = vsel %vm1839, %v1426, 0
      %v1851 = vsel %vm1839, %v1439, 0
      %v1852 = vsel %vm1839, %v1452, 0
      %v1853 = vsel %vm1839, %v1465, 0
      %v1854 = vsel %vm1839, %v1478, 0
      %v1855 = vsel %vm1839, %v1491, 0
      %p1856 = scmp.lt.s32.totalorder %s23, 1
      %s1857 = scalar_select %p1856, 1, 0
      %v1858 = vstv %s1857
      %vm1859 = vcmp.eq.s32.totalorder %v1858, 1
      %v1860 = vsel %vm1859, %v1640, 0
      %v1861 = vsel %vm1859, %v1653, 0
      %v1862 = vsel %vm1859, %v1666, 0
      %v1863 = vsel %vm1859, %v1679, 0
      %v1864 = vsel %vm1859, %v1692, 0
      %v1865 = vsel %vm1859, %v1705, 0
      %v1866 = vsel %vm1859, %v1718, 0
      %v1867 = vsel %vm1859, %v1731, 0
      %v1868 = vsel %vm1859, %v1744, 0
      %v1869 = vsel %vm1859, %v1757, 0
      %v1870 = vsel %vm1859, %v1770, 0
      %v1871 = vsel %vm1859, %v1783, 0
      %v1872 = vsel %vm1859, %v1796, 0
      %v1873 = vsel %vm1859, %v1809, 0
      %v1874 = vsel %vm1859, %v1822, 0
      %v1875 = vsel %vm1859, %v1835, 0
      %vm1876 = vcmask 1040384
      %vm1877 = vsmask.f32 256
      %vm1878 = vmand %vm1876, %vm1877
      %v1879 = vld [vmem:[#allocation2] sm:$0x1]
      %v1880 = vsel %vm1878, 0, %v1879
      %1881 = vst [vmem:[#allocation2] sm:$0x1] %v1880
      %v1882 = vld [vmem:[#allocation2 + $0x8] sm:$0x1]
      %v1883 = vsel %vm1878, 0, %v1882
      %1884 = vst [vmem:[#allocation2 + $0x8] sm:$0x1] %v1883
      %v1885 = vld [vmem:[#allocation2 + $0x10] sm:$0x1]
      %v1886 = vsel %vm1878, 0, %v1885
      %1887 = vst [vmem:[#allocation2 + $0x10] sm:$0x1] %v1886
      %v1888 = vld [vmem:[#allocation2 + $0x18] sm:$0x1]
      %v1889 = vsel %vm1878, 0, %v1888
      %1890 = vst [vmem:[#allocation2 + $0x18] sm:$0x1] %v1889
      %v1891 = vld [vmem:[#allocation2 + $0x20] sm:$0x1]
      %v1892 = vsel %vm1878, 0, %v1891
      %1893 = vst [vmem:[#allocation2 + $0x20] sm:$0x1] %v1892
      %v1894 = vld [vmem:[#allocation2 + $0x28] sm:$0x1]
      %v1895 = vsel %vm1878, 0, %v1894
      %1896 = vst [vmem:[#allocation2 + $0x28] sm:$0x1] %v1895
      %v1897 = vld [vmem:[#allocation2 + $0x30] sm:$0x1]
      %v1898 = vsel %vm1878, 0, %v1897
      %1899 = vst [vmem:[#allocation2 + $0x30] sm:$0x1] %v1898
      %v1900 = vld [vmem:[#allocation2 + $0x38] sm:$0x1]
      %v1901 = vsel %vm1878, 0, %v1900
      %1902 = vst [vmem:[#allocation2 + $0x38] sm:$0x1] %v1901
      %vm1903 = vsmask.f32 7938
      %vm1904 = vmand %vm1876, %vm1903
      %v1905 = vld [vmem:[#allocation2 + $0x4] sm:$0x1]
      %v1906 = vsel %vm1904, 0, %v1905
      %1907 = vst [vmem:[#allocation2 + $0x4] sm:$0x1] %v1906
      %v1908 = vld [vmem:[#allocation2 + $0xc] sm:$0x1]
      %v1909 = vsel %vm1904, 0, %v1908
      %1910 = vst [vmem:[#allocation2 + $0xc] sm:$0x1] %v1909
      %v1911 = vld [vmem:[#allocation2 + $0x14] sm:$0x1]
      %v1912 = vsel %vm1904, 0, %v1911
      %1913 = vst [vmem:[#allocation2 + $0x14] sm:$0x1] %v1912
      %v1914 = vld [vmem:[#allocation2 + $0x1c] sm:$0x1]
      %v1915 = vsel %vm1904, 0, %v1914
      %1916 = vst [vmem:[#allocation2 + $0x1c] sm:$0x1] %v1915
      %v1917 = vld [vmem:[#allocation2 + $0x24] sm:$0x1]
      %v1918 = vsel %vm1904, 0, %v1917
      %1919 = vst [vmem:[#allocation2 + $0x24] sm:$0x1] %v1918
      %v1920 = vld [vmem:[#allocation2 + $0x2c] sm:$0x1]
      %v1921 = vsel %vm1904, 0, %v1920
      %1922 = vst [vmem:[#allocation2 + $0x2c] sm:$0x1] %v1921
      %v1923 = vld [vmem:[#allocation2 + $0x34] sm:$0x1]
      %v1924 = vsel %vm1904, 0, %v1923
      %1925 = vst [vmem:[#allocation2 + $0x34] sm:$0x1] %v1924
      %v1926 = vld [vmem:[#allocation2 + $0x3c] sm:$0x1]
      %v1927 = vsel %vm1904, 0, %v1926
      %1928 = vst [vmem:[#allocation2 + $0x3c] sm:$0x1] %v1927
      %v1945 = vunpack.c.l.b16 %v1840
      %v1946 = vunpack.c.l.b16 %v1841
      %v1947 = vunpack.c.l.b16 %v1842
      %v1948 = vunpack.c.l.b16 %v1843
      %v1949 = vunpack.c.l.b16 %v1844
      %v1950 = vunpack.c.l.b16 %v1845
      %v1951 = vunpack.c.l.b16 %v1846
      %v1952 = vunpack.c.l.b16 %v1847
      %v1953 = vunpack.c.l.b16 %v1848
      %v1954 = vunpack.c.l.b16 %v1849
      %v1955 = vunpack.c.l.b16 %v1850
      %v1956 = vunpack.c.l.b16 %v1851
      %v1957 = vunpack.c.l.b16 %v1852
      %v1958 = vunpack.c.l.b16 %v1853
      %v1959 = vunpack.c.l.b16 %v1854
      %v1960 = vunpack.c.l.b16 %v1855
      %vm1961 = vcmask 1041409
      %v1962 = vsel %vm1961, %v1946, %v1945
      %vm1963 = vcmask 1042434
      %v1964 = vsel %vm1963, %v1947, %v1962
      %vm1965 = vcmask 1043459
      %v1966 = vsel %vm1965, %v1948, %v1964
      %vm1967 = vcmask 1044484
      %v1968 = vsel %vm1967, %v1949, %v1966
      %vm1969 = vcmask 1045509
      %v1970 = vsel %vm1969, %v1950, %v1968
      %vm1971 = vcmask 1046534
      %v1972 = vsel %vm1971, %v1951, %v1970
      %vm1973 = vcmask 1047559
      %v1974 = vsel %vm1973, %v1952, %v1972
      %v1975 = vsel %vm1961, %v1954, %v1953
      %v1976 = vsel %vm1963, %v1955, %v1975
      %v1977 = vsel %vm1965, %v1956, %v1976
      %v1978 = vsel %vm1967, %v1957, %v1977
      %v1979 = vsel %vm1969, %v1958, %v1978
      %v1980 = vsel %vm1971, %v1959, %v1979
      %v1981 = vsel %vm1973, %v1960, %v1980
      %v1982 = vpack.c.b16 %v1974, %v1974
      %v1983 = vpack.c.b16 %v1981, %v1981
      %vm1984 = vcmask 31744
      %v1987 = vsel %vm1984, %v1982, 0
      %v1989 = vsel %vm1984, %v1983, 0
      %v1992 = vunpack.c.l.b16 %v1987
      %v1993 = vunpack.c.l.b16 %v1989
      %v1994 = vpack.c.b16 %v1992, %v1992
      %v1995 = vpack.c.b16 %v1993, %v1993
      %v1997 = vshrl.u32 %v1994, 16
      %v1999 = vrot.slane %v1997, 7
      %v2000 = vshll.u32 %v1994, 16
      %v2002 = vor.u32 %v1999, %v2000
      %v2003 = vrot.slane %v1999, 4
      %v2005 = vshrl.u32 %v1995, 16
      %v2007 = vrot.slane %v2005, 7
      %v2008 = vshll.u32 %v1995, 16
      %v2010 = vor.u32 %v2007, %v2008
      %v2011 = vrot.slane %v2007, 4
      %vm2016 = vcmask 1043456
      %vm2017 = vmand %vm2016, %vm1903
      %v2018 = vld [vmem:[#allocation2] sm:$0xf]
      %v2019 = vsel %vm2017, %v2002, %v2018
      %2020 = vst [vmem:[#allocation2] sm:$0xf] %v2019
      %v2021 = vld [vmem:[#allocation2 + $0x4] sm:$0x1]
      %v2022 = vsel %vm1878, %v2003, %v2021
      %2023 = vst [vmem:[#allocation2 + $0x4] sm:$0x1] %v2022
      %v2024 = vld [vmem:[#allocation2 + $0x8] sm:$0xf]
      %v2025 = vsel %vm2017, %v2010, %v2024
      %2026 = vst [vmem:[#allocation2 + $0x8] sm:$0xf] %v2025
      %v2027 = vld [vmem:[#allocation2 + $0xc] sm:$0x1]
      %v2028 = vsel %vm1878, %v2011, %v2027
      %2029 = vst [vmem:[#allocation2 + $0xc] sm:$0x1] %v2028
      %v2062 = vunpack.c.l.b16 %v744
      %v2063 = vunpack.c.l.b16 %v757
      %v2064 = vunpack.c.l.b16 %v770
      %v2065 = vunpack.c.l.b16 %v783
      %v2066 = vunpack.c.l.b16 %v796
      %v2067 = vunpack.c.l.b16 %v809
      %v2068 = vunpack.c.l.b16 %v822
      %v2069 = vunpack.c.l.b16 %v835
      %v2070 = vunpack.c.l.b16 %v848
      %v2071 = vunpack.c.l.b16 %v861
      %v2072 = vunpack.c.l.b16 %v874
      %v2073 = vunpack.c.l.b16 %v887
      %v2074 = vunpack.c.l.b16 %v900
      %v2075 = vunpack.c.l.b16 %v913
      %v2076 = vunpack.c.l.b16 %v926
      %v2077 = vunpack.c.l.b16 %v939
      %v2078 = vunpack.c.l.b16 %v952
      %v2079 = vunpack.c.l.b16 %v965
      %v2080 = vunpack.c.l.b16 %v978
      %v2081 = vunpack.c.l.b16 %v991
      %v2082 = vunpack.c.l.b16 %v1004
      %v2083 = vunpack.c.l.b16 %v1017
      %v2084 = vunpack.c.l.b16 %v1030
      %v2085 = vunpack.c.l.b16 %v1043
      %v2086 = vunpack.c.l.b16 %v1056
      %v2087 = vunpack.c.l.b16 %v1069
      %v2088 = vunpack.c.l.b16 %v1082
      %v2089 = vunpack.c.l.b16 %v1095
      %v2090 = vunpack.c.l.b16 %v1108
      %v2091 = vunpack.c.l.b16 %v1121
      %v2092 = vunpack.c.l.b16 %v1134
      %v2093 = vunpack.c.l.b16 %v1147
      %v2094 = vsel %vm1961, %v2063, %v2062
      %v2095 = vsel %vm1963, %v2064, %v2094
      %v2096 = vsel %vm1965, %v2065, %v2095
      %v2097 = vsel %vm1967, %v2066, %v2096
      %v2098 = vsel %vm1969, %v2067, %v2097
      %v2099 = vsel %vm1971, %v2068, %v2098
      %v2100 = vsel %vm1973, %v2069, %v2099
      %v2101 = vsel %vm1961, %v2071, %v2070
      %v2102 = vsel %vm1963, %v2072, %v2101
      %v2103 = vsel %vm1965, %v2073, %v2102
      %v2104 = vsel %vm1967, %v2074, %v2103
      %v2105 = vsel %vm1969, %v2075, %v2104
      %v2106 = vsel %vm1971, %v2076, %v2105
      %v2107 = vsel %vm1973, %v2077, %v2106
      %v2108 = vsel %vm1961, %v2079, %v2078
      %v2109 = vsel %vm1963, %v2080, %v2108
      %v2110 = vsel %vm1965, %v2081, %v2109
      %v2111 = vsel %vm1967, %v2082, %v2110
      %v2112 = vsel %vm1969, %v2083, %v2111
      %v2113 = vsel %vm1971, %v2084, %v2112
      %v2114 = vsel %vm1973, %v2085, %v2113
      %v2115 = vsel %vm1961, %v2087, %v2086
      %v2116 = vsel %vm1963, %v2088, %v2115
      %v2117 = vsel %vm1965, %v2089, %v2116
      %v2118 = vsel %vm1967, %v2090, %v2117
      %v2119 = vsel %vm1969, %v2091, %v2118
      %v2120 = vsel %vm1971, %v2092, %v2119
      %v2121 = vsel %vm1973, %v2093, %v2120
      %v2122 = vpack.c.b16 %v2100, %v2100
      %v2123 = vpack.c.b16 %v2107, %v2107
      %v2124 = vpack.c.b16 %v2114, %v2114
      %v2125 = vpack.c.b16 %v2121, %v2121
      %v2127 = vsel %vm1984, %v2122, 0
      %v2129 = vsel %vm1984, %v2123, 0
      %v2131 = vsel %vm1984, %v2124, 0
      %v2133 = vsel %vm1984, %v2125, 0
      %v2138 = vunpack.c.l.b16 %v2127
      %v2139 = vunpack.c.l.b16 %v2129
      %v2140 = vunpack.c.l.b16 %v2131
      %v2141 = vunpack.c.l.b16 %v2133
      %v2142 = vpack.c.b16 %v2138, %v2138
      %v2143 = vpack.c.b16 %v2139, %v2139
      %v2144 = vpack.c.b16 %v2140, %v2140
      %v2145 = vpack.c.b16 %v2141, %v2141
      %v2147 = vshrl.u32 %v2142, 16
      %v2149 = vrot.slane %v2147, 7
      %v2150 = vshll.u32 %v2142, 16
      %v2152 = vor.u32 %v2149, %v2150
      %v2153 = vrot.slane %v2149, 4
      %v2155 = vshrl.u32 %v2143, 16
      %v2157 = vrot.slane %v2155, 7
      %v2158 = vshll.u32 %v2143, 16
      %v2160 = vor.u32 %v2157, %v2158
      %v2161 = vrot.slane %v2157, 4
      %v2163 = vshrl.u32 %v2144, 16
      %v2165 = vrot.slane %v2163, 7
      %v2166 = vshll.u32 %v2144, 16
      %v2168 = vor.u32 %v2165, %v2166
      %v2169 = vrot.slane %v2165, 4
      %v2171 = vshrl.u32 %v2145, 16
      %v2173 = vrot.slane %v2171, 7
      %v2174 = vshll.u32 %v2145, 16
      %v2176 = vor.u32 %v2173, %v2174
      %v2177 = vrot.slane %v2173, 4
      %s2186 = scalar_lea.vmem [#allocation2], 16
      %v2187 = vld [vmem:[%s2186] sm:$0xf]
      %v2188 = vsel %vm2017, %v2152, %v2187
      %2189 = vst [vmem:[%s2186] sm:$0xf] %v2188
      %v2190 = vld [vmem:[%s2186 + $0x4] sm:$0x1]
      %v2191 = vsel %vm1878, %v2153, %v2190
      %2192 = vst [vmem:[%s2186 + $0x4] sm:$0x1] %v2191
      %v2193 = vld [vmem:[%s2186 + $0x8] sm:$0xf]
      %v2194 = vsel %vm2017, %v2160, %v2193
      %2195 = vst [vmem:[%s2186 + $0x8] sm:$0xf] %v2194
      %v2196 = vld [vmem:[%s2186 + $0xc] sm:$0x1]
      %v2197 = vsel %vm1878, %v2161, %v2196
      %2198 = vst [vmem:[%s2186 + $0xc] sm:$0x1] %v2197
      %v2199 = vld [vmem:[%s2186 + $0x10] sm:$0xf]
      %v2200 = vsel %vm2017, %v2168, %v2199
      %2201 = vst [vmem:[%s2186 + $0x10] sm:$0xf] %v2200
      %v2202 = vld [vmem:[%s2186 + $0x14] sm:$0x1]
      %v2203 = vsel %vm1878, %v2169, %v2202
      %2204 = vst [vmem:[%s2186 + $0x14] sm:$0x1] %v2203
      %v2205 = vld [vmem:[%s2186 + $0x18] sm:$0xf]
      %v2206 = vsel %vm2017, %v2176, %v2205
      %2207 = vst [vmem:[%s2186 + $0x18] sm:$0xf] %v2206
      %v2208 = vld [vmem:[%s2186 + $0x1c] sm:$0x1]
      %v2209 = vsel %vm1878, %v2177, %v2208
      %2210 = vst [vmem:[%s2186 + $0x1c] sm:$0x1] %v2209
      %v2227 = vunpack.c.l.b16 %v1860
      %v2228 = vunpack.c.l.b16 %v1861
      %v2229 = vunpack.c.l.b16 %v1862
      %v2230 = vunpack.c.l.b16 %v1863
      %v2231 = vunpack.c.l.b16 %v1864
      %v2232 = vunpack.c.l.b16 %v1865
      %v2233 = vunpack.c.l.b16 %v1866
      %v2234 = vunpack.c.l.b16 %v1867
      %v2235 = vunpack.c.l.b16 %v1868
      %v2236 = vunpack.c.l.b16 %v1869
      %v2237 = vunpack.c.l.b16 %v1870
      %v2238 = vunpack.c.l.b16 %v1871
      %v2239 = vunpack.c.l.b16 %v1872
      %v2240 = vunpack.c.l.b16 %v1873
      %v2241 = vunpack.c.l.b16 %v1874
      %v2242 = vunpack.c.l.b16 %v1875
      %v2243 = vsel %vm1961, %v2228, %v2227
      %v2244 = vsel %vm1963, %v2229, %v2243
      %v2245 = vsel %vm1965, %v2230, %v2244
      %v2246 = vsel %vm1967, %v2231, %v2245
      %v2247 = vsel %vm1969, %v2232, %v2246
      %v2248 = vsel %vm1971, %v2233, %v2247
      %v2249 = vsel %vm1973, %v2234, %v2248
      %v2250 = vsel %vm1961, %v2236, %v2235
      %v2251 = vsel %vm1963, %v2237, %v2250
      %v2252 = vsel %vm1965, %v2238, %v2251
      %v2253 = vsel %vm1967, %v2239, %v2252
      %v2254 = vsel %vm1969, %v2240, %v2253
      %v2255 = vsel %vm1971, %v2241, %v2254
      %v2256 = vsel %vm1973, %v2242, %v2255
      %v2257 = vpack.c.b16 %v2249, %v2249
      %v2258 = vpack.c.b16 %v2256, %v2256
      %v2260 = vsel %vm1984, %v2257, 0
      %v2262 = vsel %vm1984, %v2258, 0
      %v2265 = vunpack.c.l.b16 %v2260
      %v2266 = vunpack.c.l.b16 %v2262
      %v2267 = vpack.c.b16 %v2265, %v2265
      %v2268 = vpack.c.b16 %v2266, %v2266
      %v2270 = vshrl.u32 %v2267, 16
      %v2272 = vrot.slane %v2270, 7
      %v2273 = vshll.u32 %v2267, 16
      %v2275 = vor.u32 %v2272, %v2273
      %v2276 = vrot.slane %v2272, 4
      %v2278 = vshrl.u32 %v2268, 16
      %v2280 = vrot.slane %v2278, 7
      %v2281 = vshll.u32 %v2268, 16
      %v2283 = vor.u32 %v2280, %v2281
      %v2284 = vrot.slane %v2280, 4
      %s2289 = scalar_lea.vmem [#allocation2], 48
      %v2290 = vld [vmem:[%s2289] sm:$0xf]
      %v2291 = vsel %vm2017, %v2275, %v2290
      %2292 = vst [vmem:[%s2289] sm:$0xf] %v2291
      %v2293 = vld [vmem:[%s2289 + $0x4] sm:$0x1]
      %v2294 = vsel %vm1878, %v2276, %v2293
      %2295 = vst [vmem:[%s2289 + $0x4] sm:$0x1] %v2294
      %v2296 = vld [vmem:[%s2289 + $0x8] sm:$0xf]
      %v2297 = vsel %vm2017, %v2283, %v2296
      %2298 = vst [vmem:[%s2289 + $0x8] sm:$0xf] %v2297
      %v2299 = vld [vmem:[%s2289 + $0xc] sm:$0x1]
      %v2300 = vsel %vm1878, %v2284, %v2299
      %2301 = vst [vmem:[%s2289 + $0xc] sm:$0x1] %v2300
      %v2302 = vld [vmem:[#allocation2] sm:$0xf]
      %v2303 = vld [vmem:[#allocation2 + $0x8] sm:$0xf]
      %v2304 = vld [vmem:[#allocation2 + $0x10] sm:$0xf]
      %v2305 = vld [vmem:[#allocation2 + $0x18] sm:$0xf]
      %v2306 = vld [vmem:[#allocation2 + $0x20] sm:$0xf]
      %v2307 = vld [vmem:[#allocation2 + $0x28] sm:$0xf]
      %v2308 = vld [vmem:[%s3] sm:$0xf]
      %v2309 = vld [vmem:[%s3 + $0x4] sm:$0xf]
      %v2310 = vld [vmem:[%s3 + $0x8] sm:$0xf]
      %v2311 = vld [vmem:[%s3 + $0xc] sm:$0xf]
      %v2312 = vld [vmem:[%s3 + $0x10] sm:$0xf]
      %v2313 = vld [vmem:[%s3 + $0x14] sm:$0xf]
      %v2314 = vld [vmem:[%s3 + $0x18] sm:$0xf]
      %v2315 = vld [vmem:[%s3 + $0x1c] sm:$0xf]
      %v2316 = vld [vmem:[%s3 + $0x20] sm:$0xf]
      %v2317 = vld [vmem:[%s3 + $0x24] sm:$0xf]
      %v2318 = vld [vmem:[%s3 + $0x28] sm:$0xf]
      %v2319 = vld [vmem:[%s3 + $0x2c] sm:$0xf]
      %v2320 = vld [vmem:[%s3 + $0x30] sm:$0xf]
      %v2321 = vld [vmem:[%s3 + $0x34] sm:$0xf]
      %v2322 = vld [vmem:[%s3 + $0x38] sm:$0xf]
      %v2323 = vld [vmem:[%s3 + $0x3c] sm:$0xf]
      %v2324 = vld [vmem:[#allocation2 + $0x4] sm:$0x1]
      %v2325 = vld [vmem:[#allocation2 + $0xc] sm:$0x1]
      %v2326 = vld [vmem:[#allocation2 + $0x14] sm:$0x1]
      %v2327 = vld [vmem:[#allocation2 + $0x1c] sm:$0x1]
      %v2328 = vld [vmem:[#allocation2 + $0x24] sm:$0x1]
      %v2329 = vld [vmem:[#allocation2 + $0x2c] sm:$0x1]
      %vm2330 = vsmask.f32 3328
      %vm2331 = vsmask.f32 7440
      %vm2332 = vmor %vm2330, %vm2331
      %v2334 = vshrl.u32 %v2302, 16
      %v2336 = vrot.slane %v2334, 4
      %v2337 = vshll.u32 %v2302, 16
      %v2339 = vrot.slane %v2337, 5
      %v2340 = vor.u32 %v2336, %v2339
      %v2341 = vrot.slane %v2340, 4
      %v2343 = vshll.u32 %v2324, 16
      %v2345 = vrot.slane %v2343, 5
      %v2346 = vsel %vm2332, %v2341, %v2345
      %v2348 = vshrl.u32 %v2303, 16
      %v2350 = vrot.slane %v2348, 4
      %v2351 = vshll.u32 %v2303, 16
      %v2353 = vrot.slane %v2351, 5
      %v2354 = vor.u32 %v2350, %v2353
      %v2355 = vrot.slane %v2354, 4
      %v2357 = vshll.u32 %v2325, 16
      %v2359 = vrot.slane %v2357, 5
      %v2360 = vsel %vm2332, %v2355, %v2359
      %v2362 = vshrl.u32 %v2304, 16
      %v2364 = vrot.slane %v2362, 4
      %v2365 = vshll.u32 %v2304, 16
      %v2367 = vrot.slane %v2365, 5
      %v2368 = vor.u32 %v2364, %v2367
      %v2369 = vrot.slane %v2368, 4
      %v2371 = vshll.u32 %v2326, 16
      %v2373 = vrot.slane %v2371, 5
      %v2374 = vsel %vm2332, %v2369, %v2373
      %v2376 = vshrl.u32 %v2305, 16
      %v2378 = vrot.slane %v2376, 4
      %v2379 = vshll.u32 %v2305, 16
      %v2381 = vrot.slane %v2379, 5
      %v2382 = vor.u32 %v2378, %v2381
      %v2383 = vrot.slane %v2382, 4
      %v2385 = vshll.u32 %v2327, 16
      %v2387 = vrot.slane %v2385, 5
      %v2388 = vsel %vm2332, %v2383, %v2387
      %v2390 = vshrl.u32 %v2306, 16
      %v2392 = vrot.slane %v2390, 4
      %v2393 = vshll.u32 %v2306, 16
      %v2395 = vrot.slane %v2393, 5
      %v2396 = vor.u32 %v2392, %v2395
      %v2397 = vrot.slane %v2396, 4
      %v2399 = vshll.u32 %v2328, 16
      %v2401 = vrot.slane %v2399, 5
      %v2402 = vsel %vm2332, %v2397, %v2401
      %v2404 = vshrl.u32 %v2307, 16
      %v2406 = vrot.slane %v2404, 4
      %v2407 = vshll.u32 %v2307, 16
      %v2409 = vrot.slane %v2407, 5
      %v2410 = vor.u32 %v2406, %v2409
      %v2411 = vrot.slane %v2410, 4
      %v2413 = vshll.u32 %v2329, 16
      %v2415 = vrot.slane %v2413, 5
      %v2416 = vsel %vm2332, %v2411, %v2415
      %s2417 = scalar_lea.vmem %s3, 64
      %v2418 = vld [vmem:[%s2417] sm:$0xf]
      %v2419 = vld [vmem:[%s2417 + $0x4] sm:$0xf]
      %v2420 = vld [vmem:[%s2417 + $0x8] sm:$0xf]
      %v2421 = vld [vmem:[%s2417 + $0xc] sm:$0xf]
      %v2422 = vld [vmem:[%s2417 + $0x10] sm:$0xf]
      %v2423 = vld [vmem:[%s2417 + $0x14] sm:$0xf]
      %v2424 = vld [vmem:[%s2417 + $0x18] sm:$0xf]
      %v2425 = vld [vmem:[%s2417 + $0x1c] sm:$0xf]
      %v2426 = vld [vmem:[%s2417 + $0x20] sm:$0xf]
      %v2427 = vld [vmem:[%s2417 + $0x24] sm:$0xf]
      %v2428 = vld [vmem:[%s2417 + $0x28] sm:$0xf]
      %v2429 = vld [vmem:[%s2417 + $0x2c] sm:$0xf]
      %v2430 = vld [vmem:[%s2417 + $0x30] sm:$0xf]
      %v2431 = vld [vmem:[%s2417 + $0x34] sm:$0xf]
      %v2432 = vld [vmem:[%s2417 + $0x38] sm:$0xf]
      %v2433 = vld [vmem:[%s2417 + $0x3c] sm:$0xf]
      %v2434 = vunpack.c.l.b16 %v2346
      %v2435 = vunpack.c.l.b16 %v2360
      %v2436 = vunpack.c.l.b16 %v2374
      %v2437 = vunpack.c.l.b16 %v2388
      %v2438 = vunpack.c.l.b16 %v2402
      %v2439 = vunpack.c.l.b16 %v2416
      %v2440 = vpack.c.b16 %v2435, %v2434
      %v2441 = vpack.c.b16 %v2437, %v2436
      %v2442 = vpack.c.b16 %v2439, %v2438
      %v2462 = vunpack.c.l.b16 %v2418
      %v2463 = vunpack.c.l.b16 %v2419
      %v2464 = vunpack.c.l.b16 %v2420
      %v2465 = vunpack.c.l.b16 %v2421
      %v2466 = vunpack.c.l.b16 %v2422
      %v2467 = vunpack.c.l.b16 %v2423
      %v2468 = vunpack.c.l.b16 %v2424
      %v2469 = vunpack.c.l.b16 %v2425
      %v2470 = vunpack.c.l.b16 %v2426
      %v2471 = vunpack.c.l.b16 %v2427
      %v2472 = vunpack.c.l.b16 %v2428
      %v2473 = vunpack.c.l.b16 %v2429
      %v2474 = vunpack.c.l.b16 %v2430
      %v2475 = vunpack.c.l.b16 %v2431
      %v2476 = vunpack.c.l.b16 %v2432
      %v2477 = vunpack.c.l.b16 %v2433
      %v2478 = vpack.c.b16 %v2463, %v2462
      %v2479 = vpack.c.b16 %v2465, %v2464
      %v2480 = vpack.c.b16 %v2467, %v2466
      %v2481 = vpack.c.b16 %v2469, %v2468
      %v2482 = vpack.c.b16 %v2471, %v2470
      %v2483 = vpack.c.b16 %v2473, %v2472
      %v2484 = vpack.c.b16 %v2475, %v2474
      %v2485 = vpack.c.b16 %v2477, %v2476
      %2494 = vmatprep.subr.bf16.mxu0 0
      %2495 = vmatpush1.bf16.msra.mxu0 %v2478
      %2496 = vmatprep.subr.bf16.mxu0 0
      %2497 = vmatpush1.bf16.msra.mxu0 %v2479
      %2498 = vmatprep.subr.bf16.mxu0 0
      %2499 = vmatpush1.bf16.msra.mxu0 %v2480
      %2500 = vmatprep.subr.bf16.mxu0 0
      %2501 = vmatpush1.bf16.msra.mxu0 %v2481
      %2502 = vmatprep.subr.bf16.mxu0 0
      %2503 = vmatpush1.bf16.msra.mxu0 %v2482
      %2504 = vmatprep.subr.bf16.mxu0 0
      %2505 = vmatpush1.bf16.msra.mxu0 %v2483
      %2506 = vmatprep.subr.bf16.mxu0 0
      %2507 = vmatpush1.bf16.msra.mxu0 %v2484
      %2508 = vmatprep.subr.bf16.mxu0 0
      %2509 = vmatpush1.bf16.msra.mxu0 %v2485
      %2510 = vmatprep.subr.bf16.mxu0 0
      %2511 = vmatpush1.bf16.msra.mxu0 0
      %2512 = vmatprep.subr.bf16.mxu0 0
      %2513 = vmatpush1.bf16.msra.mxu0 0
      %2514 = vmatprep.subr.bf16.mxu0 0
      %2515 = vmatpush1.bf16.msra.mxu0 0
      %2516 = vmatprep.subr.bf16.mxu0 0
      %2517 = vmatpush1.bf16.msra.mxu0 0
      %2518 = vmatprep.subr.bf16.mxu0 0
      %2519 = vmatpush1.bf16.msra.mxu0 0
      %2520 = vmatprep.subr.bf16.mxu0 0
      %2521 = vmatpush1.bf16.msra.mxu0 0
      %2522 = vmatprep.subr.bf16.mxu0 0
      %2523 = vmatpush1.bf16.msra.mxu0 0
      %2524 = vmatprep.subr.bf16.mxu0 0
      %2525 = vmatpush1.bf16.msra.mxu0 0
      %2526 = vmatprep.mubr.bf16.mxu0 0
      %2527 = vmatmul.mubr.bf16.gmra.mrb[0].mxu0 %v2440
      %v2528 = vpop.f32.mrb[0].mxu0
      %v2529 = vadd.f32 0.0, %v2528
      %v2530 = vpop.f32.mrb[0].mxu0
      %v2531 = vpop.f32.mrb[0].mxu0
      %v2532 = vadd.f32 0.0, %v2531
      %v2533 = vpop.f32.mrb[0].mxu0
      %2534 = vmatprep.mubr.bf16.mxu0 0
      %2535 = vmatmul.mubr.bf16.gmra.mrb[0].mxu0 %v2441
      %v2536 = vpop.f32.mrb[0].mxu0
      %v2537 = vadd.f32 0.0, %v2536
      %v2538 = vpop.f32.mrb[0].mxu0
      %v2539 = vpop.f32.mrb[0].mxu0
      %v2540 = vadd.f32 0.0, %v2539
      %v2541 = vpop.f32.mrb[0].mxu0
      %2542 = vmatprep.mubr.bf16.mxu0 0
      %2543 = vmatmul.mubr.bf16.gmra.mrb[0].mxu0 %v2442
      %v2544 = vpop.f32.mrb[0].mxu0
      %v2545 = vadd.f32 0.0, %v2544
      %v2546 = vpop.f32.mrb[0].mxu0
      %v2547 = vpop.f32.mrb[0].mxu0
      %v2548 = vadd.f32 0.0, %v2547
      %v2549 = vpop.f32.mrb[0].mxu0
      %2550 = vdwg.mxu0
      %v2557 = vunpack.c.l.b16 %v2302
      %v2558 = vunpack.c.l.b16 %v2303
      %v2559 = vunpack.c.l.b16 %v2304
      %v2560 = vunpack.c.l.b16 %v2305
      %v2561 = vunpack.c.l.b16 %v2306
      %v2562 = vunpack.c.l.b16 %v2307
      %v2563 = vpack.c.b16 %v2558, %v2557
      %v2564 = vpack.c.b16 %v2560, %v2559
      %v2565 = vpack.c.b16 %v2562, %v2561
      %v2585 = vunpack.c.l.b16 %v2308
      %v2586 = vunpack.c.l.b16 %v2309
      %v2587 = vunpack.c.l.b16 %v2310
      %v2588 = vunpack.c.l.b16 %v2311
      %v2589 = vunpack.c.l.b16 %v2312
      %v2590 = vunpack.c.l.b16 %v2313
      %v2591 = vunpack.c.l.b16 %v2314
      %v2592 = vunpack.c.l.b16 %v2315
      %v2593 = vunpack.c.l.b16 %v2316
      %v2594 = vunpack.c.l.b16 %v2317
      %v2595 = vunpack.c.l.b16 %v2318
      %v2596 = vunpack.c.l.b16 %v2319
      %v2597 = vunpack.c.l.b16 %v2320
      %v2598 = vunpack.c.l.b16 %v2321
      %v2599 = vunpack.c.l.b16 %v2322
      %v2600 = vunpack.c.l.b16 %v2323
      %v2601 = vpack.c.b16 %v2586, %v2585
      %v2602 = vpack.c.b16 %v2588, %v2587
      %v2603 = vpack.c.b16 %v2590, %v2589
      %v2604 = vpack.c.b16 %v2592, %v2591
      %v2605 = vpack.c.b16 %v2594, %v2593
      %v2606 = vpack.c.b16 %v2596, %v2595
      %v2607 = vpack.c.b16 %v2598, %v2597
      %v2608 = vpack.c.b16 %v2600, %v2599
      %2617 = vmatprep.subr.bf16.mxu0 0
      %2618 = vmatpush1.bf16.msra.mxu0 %v2601
      %2619 = vmatprep.subr.bf16.mxu0 0
      %2620 = vmatpush1.bf16.msra.mxu0 %v2602
      %2621 = vmatprep.subr.bf16.mxu0 0
      %2622 = vmatpush1.bf16.msra.mxu0 %v2603
      %2623 = vmatprep.subr.bf16.mxu0 0
      %2624 = vmatpush1.bf16.msra.mxu0 %v2604
      %2625 = vmatprep.subr.bf16.mxu0 0
      %2626 = vmatpush1.bf16.msra.mxu0 %v2605
      %2627 = vmatprep.subr.bf16.mxu0 0
      %2628 = vmatpush1.bf16.msra.mxu0 %v2606
      %2629 = vmatprep.subr.bf16.mxu0 0
      %2630 = vmatpush1.bf16.msra.mxu0 %v2607
      %2631 = vmatprep.subr.bf16.mxu0 0
      %2632 = vmatpush1.bf16.msra.mxu0 %v2608
      %2633 = vmatprep.subr.bf16.mxu0 0
      %2634 = vmatpush1.bf16.msra.mxu0 0
      %2635 = vmatprep.subr.bf16.mxu0 0
      %2636 = vmatpush1.bf16.msra.mxu0 0
      %2637 = vmatprep.subr.bf16.mxu0 0
      %2638 = vmatpush1.bf16.msra.mxu0 0
      %2639 = vmatprep.subr.bf16.mxu0 0
      %2640 = vmatpush1.bf16.msra.mxu0 0
      %2641 = vmatprep.subr.bf16.mxu0 0
      %2642 = vmatpush1.bf16.msra.mxu0 0
      %2643 = vmatprep.subr.bf16.mxu0 0
      %2644 = vmatpush1.bf16.msra.mxu0 0
      %2645 = vmatprep.subr.bf16.mxu0 0
      %2646 = vmatpush1.bf16.msra.mxu0 0
      %2647 = vmatprep.subr.bf16.mxu0 0
      %2648 = vmatpush1.bf16.msra.mxu0 0
      %2649 = vmatprep.mubr.bf16.mxu0 0
      %2650 = vmatmul.mubr.bf16.gmra.mrb[0].mxu0 %v2563
      %v2651 = vpop.f32.mrb[0].mxu0
      %v2652 = vadd.f32 %v2529, %v2651
      %v2653 = vpop.f32.mrb[0].mxu0
      %v2654 = vpop.f32.mrb[0].mxu0
      %v2655 = vadd.f32 %v2532, %v2654
      %v2656 = vpop.f32.mrb[0].mxu0
      %2657 = vmatprep.mubr.bf16.mxu0 0
      %2658 = vmatmul.mubr.bf16.gmra.mrb[0].mxu0 %v2564
      %v2659 = vpop.f32.mrb[0].mxu0
      %v2660 = vadd.f32 %v2537, %v2659
      %v2661 = vpop.f32.mrb[0].mxu0
      %v2662 = vpop.f32.mrb[0].mxu0
      %v2663 = vadd.f32 %v2540, %v2662
      %v2664 = vpop.f32.mrb[0].mxu0
      %2665 = vmatprep.mubr.bf16.mxu0 0
      %2666 = vmatmul.mubr.bf16.gmra.mrb[0].mxu0 %v2565
      %v2667 = vpop.f32.mrb[0].mxu0
      %v2668 = vadd.f32 %v2545, %v2667
      %v2669 = vpop.f32.mrb[0].mxu0
      %v2670 = vpop.f32.mrb[0].mxu0
      %v2671 = vadd.f32 %v2548, %v2670
      %v2672 = vpop.f32.mrb[0].mxu0
      %2673 = vdwg.mxu0
      %v2674 = vld [vmem:[#allocation2] sm:$0xe]
      %v2675 = vld [vmem:[#allocation2 + $0x8] sm:$0xe]
      %v2676 = vld [vmem:[#allocation2 + $0x10] sm:$0xe]
      %v2677 = vld [vmem:[#allocation2 + $0x18] sm:$0xe]
      %v2678 = vld [vmem:[#allocation2 + $0x20] sm:$0xe]
      %v2679 = vld [vmem:[#allocation2 + $0x28] sm:$0xe]
      %vm2692 = vcmask 1042432
      %vm2693 = vcmask 1046532
      %vm2694 = vmor %vm2692, %vm2693
      %v2695 = vrot.slane %v2674, 5
      %v2696 = vrot.slane %v2695, 4
      %v2697 = vrot.slane %v2324, 5
      %v2698 = vsel %vm2694, %v2696, %v2697
      %v2699 = vrot.slane %v2675, 5
      %v2700 = vrot.slane %v2699, 4
      %v2701 = vrot.slane %v2325, 5
      %v2702 = vsel %vm2694, %v2700, %v2701
      %v2703 = vrot.slane %v2676, 5
      %v2704 = vrot.slane %v2703, 4
      %v2705 = vrot.slane %v2326, 5
      %v2706 = vsel %vm2694, %v2704, %v2705
      %v2707 = vrot.slane %v2677, 5
      %v2708 = vrot.slane %v2707, 4
      %v2709 = vrot.slane %v2327, 5
      %v2710 = vsel %vm2694, %v2708, %v2709
      %v2711 = vrot.slane %v2678, 5
      %v2712 = vrot.slane %v2711, 4
      %v2713 = vrot.slane %v2328, 5
      %v2714 = vsel %vm2694, %v2712, %v2713
      %v2715 = vrot.slane %v2679, 5
      %v2716 = vrot.slane %v2715, 4
      %v2717 = vrot.slane %v2329, 5
      %v2718 = vsel %vm2694, %v2716, %v2717
      %s2719 = scalar_lea.vmem %s3, 128
      %v2720 = vld [vmem:[%s2719] sm:$0xf]
      %v2721 = vld [vmem:[%s2719 + $0x4] sm:$0xf]
      %v2722 = vld [vmem:[%s2719 + $0x8] sm:$0xf]
      %v2723 = vld [vmem:[%s2719 + $0xc] sm:$0xf]
      %v2724 = vld [vmem:[%s2719 + $0x10] sm:$0xf]
      %v2725 = vld [vmem:[%s2719 + $0x14] sm:$0xf]
      %v2726 = vld [vmem:[%s2719 + $0x18] sm:$0xf]
      %v2727 = vld [vmem:[%s2719 + $0x1c] sm:$0xf]
      %v2728 = vld [vmem:[%s2719 + $0x20] sm:$0xf]
      %v2729 = vld [vmem:[%s2719 + $0x24] sm:$0xf]
      %v2730 = vld [vmem:[%s2719 + $0x28] sm:$0xf]
      %v2731 = vld [vmem:[%s2719 + $0x2c] sm:$0xf]
      %v2732 = vld [vmem:[%s2719 + $0x30] sm:$0xf]
      %v2733 = vld [vmem:[%s2719 + $0x34] sm:$0xf]
      %v2734 = vld [vmem:[%s2719 + $0x38] sm:$0xf]
      %v2735 = vld [vmem:[%s2719 + $0x3c] sm:$0xf]
      %v2736 = vunpack.c.l.b16 %v2698
      %v2737 = vunpack.c.l.b16 %v2702
      %v2738 = vunpack.c.l.b16 %v2706
      %v2739 = vunpack.c.l.b16 %v2710
      %v2740 = vunpack.c.l.b16 %v2714
      %v2741 = vunpack.c.l.b16 %v2718
      %v2742 = vpack.c.b16 %v2737, %v2736
      %v2743 = vpack.c.b16 %v2739, %v2738
      %v2744 = vpack.c.b16 %v2741, %v2740
      %v2764 = vunpack.c.l.b16 %v2720
      %v2765 = vunpack.c.l.b16 %v2721
      %v2766 = vunpack.c.l.b16 %v2722
      %v2767 = vunpack.c.l.b16 %v2723
      %v2768 = vunpack.c.l.b16 %v2724
      %v2769 = vunpack.c.l.b16 %v2725
      %v2770 = vunpack.c.l.b16 %v2726
      %v2771 = vunpack.c.l.b16 %v2727
      %v2772 = vunpack.c.l.b16 %v2728
      %v2773 = vunpack.c.l.b16 %v2729
      %v2774 = vunpack.c.l.b16 %v2730
      %v2775 = vunpack.c.l.b16 %v2731
      %v2776 = vunpack.c.l.b16 %v2732
      %v2777 = vunpack.c.l.b16 %v2733
      %v2778 = vunpack.c.l.b16 %v2734
      %v2779 = vunpack.c.l.b16 %v2735
      %v2780 = vpack.c.b16 %v2765, %v2764
      %v2781 = vpack.c.b16 %v2767, %v2766
      %v2782 = vpack.c.b16 %v2769, %v2768
      %v2783 = vpack.c.b16 %v2771, %v2770
      %v2784 = vpack.c.b16 %v2773, %v2772
      %v2785 = vpack.c.b16 %v2775, %v2774
      %v2786 = vpack.c.b16 %v2777, %v2776
      %v2787 = vpack.c.b16 %v2779, %v2778
      %2796 = vmatprep.subr.bf16.mxu0 0
      %2797 = vmatpush1.bf16.msra.mxu0 %v2780
      %2798 = vmatprep.subr.bf16.mxu0 0
      %2799 = vmatpush1.bf16.msra.mxu0 %v2781
      %2800 = vmatprep.subr.bf16.mxu0 0
      %2801 = vmatpush1.bf16.msra.mxu0 %v2782
      %2802 = vmatprep.subr.bf16.mxu0 0
      %2803 = vmatpush1.bf16.msra.mxu0 %v2783
      %2804 = vmatprep.subr.bf16.mxu0 0
      %2805 = vmatpush1.bf16.msra.mxu0 %v2784
      %2806 = vmatprep.subr.bf16.mxu0 0
      %2807 = vmatpush1.bf16.msra.mxu0 %v2785
      %2808 = vmatprep.subr.bf16.mxu0 0
      %2809 = vmatpush1.bf16.msra.mxu0 %v2786
      %2810 = vmatprep.subr.bf16.mxu0 0
      %2811 = vmatpush1.bf16.msra.mxu0 %v2787
      %2812 = vmatprep.subr.bf16.mxu0 0
      %2813 = vmatpush1.bf16.msra.mxu0 0
      %2814 = vmatprep.subr.bf16.mxu0 0
      %2815 = vmatpush1.bf16.msra.mxu0 0
      %2816 = vmatprep.subr.bf16.mxu0 0
      %2817 = vmatpush1.bf16.msra.mxu0 0
      %2818 = vmatprep.subr.bf16.mxu0 0
      %2819 = vmatpush1.bf16.msra.mxu0 0
      %2820 = vmatprep.subr.bf16.mxu0 0
      %2821 = vmatpush1.bf16.msra.mxu0 0
      %2822 = vmatprep.subr.bf16.mxu0 0
      %2823 = vmatpush1.bf16.msra.mxu0 0
      %2824 = vmatprep.subr.bf16.mxu0 0
      %2825 = vmatpush1.bf16.msra.mxu0 0
      %2826 = vmatprep.subr.bf16.mxu0 0
      %2827 = vmatpush1.bf16.msra.mxu0 0
      %2828 = vmatprep.mubr.bf16.mxu0 0
      %2829 = vmatmul.mubr.bf16.gmra.mrb[0].mxu0 %v2742
      %v2830 = vpop.f32.mrb[0].mxu0
      %v2831 = vadd.f32 0.0, %v2830
      %v2832 = vpop.f32.mrb[0].mxu0
      %v2833 = vpop.f32.mrb[0].mxu0
      %v2834 = vadd.f32 0.0, %v2833
      %v2835 = vpop.f32.mrb[0].mxu0
      %2836 = vmatprep.mubr.bf16.mxu0 0
      %2837 = vmatmul.mubr.bf16.gmra.mrb[0].mxu0 %v2743
      %v2838 = vpop.f32.mrb[0].mxu0
      %v2839 = vadd.f32 0.0, %v2838
      %v2840 = vpop.f32.mrb[0].mxu0
      %v2841 = vpop.f32.mrb[0].mxu0
      %v2842 = vadd.f32 0.0, %v2841
      %v2843 = vpop.f32.mrb[0].mxu0
      %2844 = vmatprep.mubr.bf16.mxu0 0
      %2845 = vmatmul.mubr.bf16.gmra.mrb[0].mxu0 %v2744
      %v2846 = vpop.f32.mrb[0].mxu0
      %v2847 = vadd.f32 0.0, %v2846
      %v2848 = vpop.f32.mrb[0].mxu0
      %v2849 = vpop.f32.mrb[0].mxu0
      %v2850 = vadd.f32 0.0, %v2849
      %v2851 = vpop.f32.mrb[0].mxu0
      %2852 = vdwg.mxu0
      %v2853 = vadd.f32 %v2652, %v2831
      %v2854 = vadd.f32 %v2655, %v2834
      %v2855 = vadd.f32 %v2660, %v2839
      %v2856 = vadd.f32 %v2663, %v2842
      %v2857 = vadd.f32 %v2668, %v2847
      %v2858 = vadd.f32 %v2671, %v2850
      %s2859 = scalar_lea.vmem [#allocation2], 8
      %v2860 = vld [vmem:[%s2859] sm:$0xf]
      %v2861 = vld [vmem:[%s2859 + $0x8] sm:$0xf]
      %v2862 = vld [vmem:[%s2859 + $0x10] sm:$0xf]
      %v2863 = vld [vmem:[%s2859 + $0x18] sm:$0xf]
      %v2864 = vld [vmem:[%s2859 + $0x20] sm:$0xf]
      %v2865 = vld [vmem:[%s2859 + $0x28] sm:$0xf]
      %s2866 = scalar_lea.vmem %s3, 192
      %v2867 = vld [vmem:[%s2866] sm:$0xf]
      %v2868 = vld [vmem:[%s2866 + $0x4] sm:$0xf]
      %v2869 = vld [vmem:[%s2866 + $0x8] sm:$0xf]
      %v2870 = vld [vmem:[%s2866 + $0xc] sm:$0xf]
      %v2871 = vld [vmem:[%s2866 + $0x10] sm:$0xf]
      %v2872 = vld [vmem:[%s2866 + $0x14] sm:$0xf]
      %v2873 = vld [vmem:[%s2866 + $0x18] sm:$0xf]
      %v2874 = vld [vmem:[%s2866 + $0x1c] sm:$0xf]
      %v2875 = vld [vmem:[%s2866 + $0x20] sm:$0xf]
      %v2876 = vld [vmem:[%s2866 + $0x24] sm:$0xf]
      %v2877 = vld [vmem:[%s2866 + $0x28] sm:$0xf]
      %v2878 = vld [vmem:[%s2866 + $0x2c] sm:$0xf]
      %v2879 = vld [vmem:[%s2866 + $0x30] sm:$0xf]
      %v2880 = vld [vmem:[%s2866 + $0x34] sm:$0xf]
      %v2881 = vld [vmem:[%s2866 + $0x38] sm:$0xf]
      %v2882 = vld [vmem:[%s2866 + $0x3c] sm:$0xf]
      %v2889 = vunpack.c.l.b16 %v2860
      %v2890 = vunpack.c.l.b16 %v2861
      %v2891 = vunpack.c.l.b16 %v2862
      %v2892 = vunpack.c.l.b16 %v2863
      %v2893 = vunpack.c.l.b16 %v2864
      %v2894 = vunpack.c.l.b16 %v2865
      %v2895 = vpack.c.b16 %v2890, %v2889
      %v2896 = vpack.c.b16 %v2892, %v2891
      %v2897 = vpack.c.b16 %v2894, %v2893
      %v2917 = vunpack.c.l.b16 %v2867
      %v2918 = vunpack.c.l.b16 %v2868
      %v2919 = vunpack.c.l.b16 %v2869
      %v2920 = vunpack.c.l.b16 %v2870
      %v2921 = vunpack.c.l.b16 %v2871
      %v2922 = vunpack.c.l.b16 %v2872
      %v2923 = vunpack.c.l.b16 %v2873
      %v2924 = vunpack.c.l.b16 %v2874
      %v2925 = vunpack.c.l.b16 %v2875
      %v2926 = vunpack.c.l.b16 %v2876
      %v2927 = vunpack.c.l.b16 %v2877
      %v2928 = vunpack.c.l.b16 %v2878
      %v2929 = vunpack.c.l.b16 %v2879
      %v2930 = vunpack.c.l.b16 %v2880
      %v2931 = vunpack.c.l.b16 %v2881
      %v2932 = vunpack.c.l.b16 %v2882
      %v2933 = vpack.c.b16 %v2918, %v2917
      %v2934 = vpack.c.b16 %v2920, %v2919
      %v2935 = vpack.c.b16 %v2922, %v2921
      %v2936 = vpack.c.b16 %v2924, %v2923
      %v2937 = vpack.c.b16 %v2926, %v2925
      %v2938 = vpack.c.b16 %v2928, %v2927
      %v2939 = vpack.c.b16 %v2930, %v2929
      %v2940 = vpack.c.b16 %v2932, %v2931
      %2949 = vmatprep.subr.bf16.mxu0 0
      %2950 = vmatpush1.bf16.msra.mxu0 %v2933
      %2951 = vmatprep.subr.bf16.mxu0 0
      %2952 = vmatpush1.bf16.msra.mxu0 %v2934
      %2953 = vmatprep.subr.bf16.mxu0 0
      %2954 = vmatpush1.bf16.msra.mxu0 %v2935
      %2955 = vmatprep.subr.bf16.mxu0 0
      %2956 = vmatpush1.bf16.msra.mxu0 %v2936
      %2957 = vmatprep.subr.bf16.mxu0 0
      %2958 = vmatpush1.bf16.msra.mxu0 %v2937
      %2959 = vmatprep.subr.bf16.mxu0 0
      %2960 = vmatpush1.bf16.msra.mxu0 %v2938
      %2961 = vmatprep.subr.bf16.mxu0 0
      %2962 = vmatpush1.bf16.msra.mxu0 %v2939
      %2963 = vmatprep.subr.bf16.mxu0 0
      %2964 = vmatpush1.bf16.msra.mxu0 %v2940
      %2965 = vmatprep.subr.bf16.mxu0 0
      %2966 = vmatpush1.bf16.msra.mxu0 0
      %2967 = vmatprep.subr.bf16.mxu0 0
      %2968 = vmatpush1.bf16.msra.mxu0 0
      %2969 = vmatprep.subr.bf16.mxu0 0
      %2970 = vmatpush1.bf16.msra.mxu0 0
      %2971 = vmatprep.subr.bf16.mxu0 0
      %2972 = vmatpush1.bf16.msra.mxu0 0
      %2973 = vmatprep.subr.bf16.mxu0 0
      %2974 = vmatpush1.bf16.msra.mxu0 0
      %2975 = vmatprep.subr.bf16.mxu0 0
      %2976 = vmatpush1.bf16.msra.mxu0 0
      %2977 = vmatprep.subr.bf16.mxu0 0
      %2978 = vmatpush1.bf16.msra.mxu0 0
      %2979 = vmatprep.subr.bf16.mxu0 0
      %2980 = vmatpush1.bf16.msra.mxu0 0
      %2981 = vmatprep.mubr.bf16.mxu0 0
      %2982 = vmatmul.mubr.bf16.gmra.mrb[0].mxu0 %v2895
      %v2983 = vpop.f32.mrb[0].mxu0
      %v2984 = vadd.f32 0.0, %v2983
      %v2985 = vpop.f32.mrb[0].mxu0
      %v2986 = vpop.f32.mrb[0].mxu0
      %v2987 = vadd.f32 0.0, %v2986
      %v2988 = vpop.f32.mrb[0].mxu0
      %2989 = vmatprep.mubr.bf16.mxu0 0
      %2990 = vmatmul.mubr.bf16.gmra.mrb[0].mxu0 %v2896
      %v2991 = vpop.f32.mrb[0].mxu0
      %v2992 = vadd.f32 0.0, %v2991
      %v2993 = vpop.f32.mrb[0].mxu0
      %v2994 = vpop.f32.mrb[0].mxu0
      %v2995 = vadd.f32 0.0, %v2994
      %v2996 = vpop.f32.mrb[0].mxu0
      %2997 = vmatprep.mubr.bf16.mxu0 0
      %2998 = vmatmul.mubr.bf16.gmra.mrb[0].mxu0 %v2897
      %v2999 = vpop.f32.mrb[0].mxu0
      %v3000 = vadd.f32 0.0, %v2999
      %v3001 = vpop.f32.mrb[0].mxu0
      %v3002 = vpop.f32.mrb[0].mxu0
      %v3003 = vadd.f32 0.0, %v3002
      %v3004 = vpop.f32.mrb[0].mxu0
      %3005 = vdwg.mxu0
      %v3006 = vadd.f32 %v2853, %v2984
      %v3007 = vadd.f32 %v2854, %v2987
      %v3008 = vadd.f32 %v2855, %v2992
      %v3009 = vadd.f32 %v2856, %v2995
      %v3010 = vadd.f32 %v2857, %v3000
      %v3011 = vadd.f32 %v2858, %v3003
      %v3012 = vld [vmem:[%s2859] sm:$0xf]
      %v3013 = vld [vmem:[%s2859 + $0x4] sm:$0x1]
      %v3014 = vld [vmem:[%s2859 + $0x8] sm:$0xf]
      %v3015 = vld [vmem:[%s2859 + $0xc] sm:$0x1]
      %v3016 = vld [vmem:[%s2859 + $0x10] sm:$0xf]
      %v3017 = vld [vmem:[%s2859 + $0x14] sm:$0x1]
      %v3018 = vld [vmem:[%s2859 + $0x18] sm:$0xf]
      %v3019 = vld [vmem:[%s2859 + $0x1c] sm:$0x1]
      %v3020 = vld [vmem:[%s2859 + $0x20] sm:$0xf]
      %v3021 = vld [vmem:[%s2859 + $0x24] sm:$0x1]
      %v3022 = vld [vmem:[%s2859 + $0x28] sm:$0xf]
      %v3023 = vld [vmem:[%s2859 + $0x2c] sm:$0x1]
      %v3025 = vshrl.u32 %v3012, 16
      %v3027 = vrot.slane %v3025, 4
      %v3028 = vshll.u32 %v3012, 16
      %v3030 = vrot.slane %v3028, 5
      %v3031 = vor.u32 %v3027, %v3030
      %v3032 = vrot.slane %v3031, 4
      %v3034 = vshll.u32 %v3013, 16
      %v3036 = vrot.slane %v3034, 5
      %v3037 = vsel %vm2332, %v3032, %v3036
      %v3039 = vshrl.u32 %v3014, 16
      %v3041 = vrot.slane %v3039, 4
      %v3042 = vshll.u32 %v3014, 16
      %v3044 = vrot.slane %v3042, 5
      %v3045 = vor.u32 %v3041, %v3044
      %v3046 = vrot.slane %v3045, 4
      %v3048 = vshll.u32 %v3015, 16
      %v3050 = vrot.slane %v3048, 5
      %v3051 = vsel %vm2332, %v3046, %v3050
      %v3053 = vshrl.u32 %v3016, 16
      %v3055 = vrot.slane %v3053, 4
      %v3056 = vshll.u32 %v3016, 16
      %v3058 = vrot.slane %v3056, 5
      %v3059 = vor.u32 %v3055, %v3058
      %v3060 = vrot.slane %v3059, 4
      %v3062 = vshll.u32 %v3017, 16
      %v3064 = vrot.slane %v3062, 5
      %v3065 = vsel %vm2332, %v3060, %v3064
      %v3067 = vshrl.u32 %v3018, 16
      %v3069 = vrot.slane %v3067, 4
      %v3070 = vshll.u32 %v3018, 16
      %v3072 = vrot.slane %v3070, 5
      %v3073 = vor.u32 %v3069, %v3072
      %v3074 = vrot.slane %v3073, 4
      %v3076 = vshll.u32 %v3019, 16
      %v3078 = vrot.slane %v3076, 5
      %v3079 = vsel %vm2332, %v3074, %v3078
      %v3081 = vshrl.u32 %v3020, 16
      %v3083 = vrot.slane %v3081, 4
      %v3084 = vshll.u32 %v3020, 16
      %v3086 = vrot.slane %v3084, 5
      %v3087 = vor.u32 %v3083, %v3086
      %v3088 = vrot.slane %v3087, 4
      %v3090 = vshll.u32 %v3021, 16
      %v3092 = vrot.slane %v3090, 5
      %v3093 = vsel %vm2332, %v3088, %v3092
      %v3095 = vshrl.u32 %v3022, 16
      %v3097 = vrot.slane %v3095, 4
      %v3098 = vshll.u32 %v3022, 16
      %v3100 = vrot.slane %v3098, 5
      %v3101 = vor.u32 %v3097, %v3100
      %v3102 = vrot.slane %v3101, 4
      %v3104 = vshll.u32 %v3023, 16
      %v3106 = vrot.slane %v3104, 5
      %v3107 = vsel %vm2332, %v3102, %v3106
      %s3108 = scalar_lea.vmem %s3, 256
      %v3109 = vld [vmem:[%s3108] sm:$0xf]
      %v3110 = vld [vmem:[%s3108 + $0x4] sm:$0xf]
      %v3111 = vld [vmem:[%s3108 + $0x8] sm:$0xf]
      %v3112 = vld [vmem:[%s3108 + $0xc] sm:$0xf]
      %v3113 = vld [vmem:[%s3108 + $0x10] sm:$0xf]
      %v3114 = vld [vmem:[%s3108 + $0x14] sm:$0xf]
      %v3115 = vld [vmem:[%s3108 + $0x18] sm:$0xf]
      %v3116 = vld [vmem:[%s3108 + $0x1c] sm:$0xf]
      %v3117 = vld [vmem:[%s3108 + $0x20] sm:$0xf]
      %v3118 = vld [vmem:[%s3108 + $0x24] sm:$0xf]
      %v3119 = vld [vmem:[%s3108 + $0x28] sm:$0xf]
      %v3120 = vld [vmem:[%s3108 + $0x2c] sm:$0xf]
      %v3121 = vld [vmem:[%s3108 + $0x30] sm:$0xf]
      %v3122 = vld [vmem:[%s3108 + $0x34] sm:$0xf]
      %v3123 = vld [vmem:[%s3108 + $0x38] sm:$0xf]
      %v3124 = vld [vmem:[%s3108 + $0x3c] sm:$0xf]
      %v3125 = vunpack.c.l.b16 %v3037
      %v3126 = vunpack.c.l.b16 %v3051
      %v3127 = vunpack.c.l.b16 %v3065
      %v3128 = vunpack.c.l.b16 %v3079
      %v3129 = vunpack.c.l.b16 %v3093
      %v3130 = vunpack.c.l.b16 %v3107
      %v3131 = vpack.c.b16 %v3126, %v3125
      %v3132 = vpack.c.b16 %v3128, %v3127
      %v3133 = vpack.c.b16 %v3130, %v3129
      %v3153 = vunpack.c.l.b16 %v3109
      %v3154 = vunpack.c.l.b16 %v3110
      %v3155 = vunpack.c.l.b16 %v3111
      %v3156 = vunpack.c.l.b16 %v3112
      %v3157 = vunpack.c.l.b16 %v3113
      %v3158 = vunpack.c.l.b16 %v3114
      %v3159 = vunpack.c.l.b16 %v3115
      %v3160 = vunpack.c.l.b16 %v3116
      %v3161 = vunpack.c.l.b16 %v3117
      %v3162 = vunpack.c.l.b16 %v3118
      %v3163 = vunpack.c.l.b16 %v3119
      %v3164 = vunpack.c.l.b16 %v3120
      %v3165 = vunpack.c.l.b16 %v3121
      %v3166 = vunpack.c.l.b16 %v3122
      %v3167 = vunpack.c.l.b16 %v3123
      %v3168 = vunpack.c.l.b16 %v3124
      %v3169 = vpack.c.b16 %v3154, %v3153
      %v3170 = vpack.c.b16 %v3156, %v3155
      %v3171 = vpack.c.b16 %v3158, %v3157
      %v3172 = vpack.c.b16 %v3160, %v3159
      %v3173 = vpack.c.b16 %v3162, %v3161
      %v3174 = vpack.c.b16 %v3164, %v3163
      %v3175 = vpack.c.b16 %v3166, %v3165
      %v3176 = vpack.c.b16 %v3168, %v3167
      %3185 = vmatprep.subr.bf16.mxu0 0
      %3186 = vmatpush1.bf16.msra.mxu0 %v3169
      %3187 = vmatprep.subr.bf16.mxu0 0
      %3188 = vmatpush1.bf16.msra.mxu0 %v3170
      %3189 = vmatprep.subr.bf16.mxu0 0
      %3190 = vmatpush1.bf16.msra.mxu0 %v3171
      %3191 = vmatprep.subr.bf16.mxu0 0
      %3192 = vmatpush1.bf16.msra.mxu0 %v3172
      %3193 = vmatprep.subr.bf16.mxu0 0
      %3194 = vmatpush1.bf16.msra.mxu0 %v3173
      %3195 = vmatprep.subr.bf16.mxu0 0
      %3196 = vmatpush1.bf16.msra.mxu0 %v3174
      %3197 = vmatprep.subr.bf16.mxu0 0
      %3198 = vmatpush1.bf16.msra.mxu0 %v3175
      %3199 = vmatprep.subr.bf16.mxu0 0
      %3200 = vmatpush1.bf16.msra.mxu0 %v3176
      %3201 = vmatprep.subr.bf16.mxu0 0
      %3202 = vmatpush1.bf16.msra.mxu0 0
      %3203 = vmatprep.subr.bf16.mxu0 0
      %3204 = vmatpush1.bf16.msra.mxu0 0
      %3205 = vmatprep.subr.bf16.mxu0 0
      %3206 = vmatpush1.bf16.msra.mxu0 0
      %3207 = vmatprep.subr.bf16.mxu0 0
      %3208 = vmatpush1.bf16.msra.mxu0 0
      %3209 = vmatprep.subr.bf16.mxu0 0
      %3210 = vmatpush1.bf16.msra.mxu0 0
      %3211 = vmatprep.subr.bf16.mxu0 0
      %3212 = vmatpush1.bf16.msra.mxu0 0
      %3213 = vmatprep.subr.bf16.mxu0 0
      %3214 = vmatpush1.bf16.msra.mxu0 0
      %3215 = vmatprep.subr.bf16.mxu0 0
      %3216 = vmatpush1.bf16.msra.mxu0 0
      %3217 = vmatprep.mubr.bf16.mxu0 0
      %3218 = vmatmul.mubr.bf16.gmra.mrb[0].mxu0 %v3131
      %v3219 = vpop.f32.mrb[0].mxu0
      %v3220 = vadd.f32 0.0, %v3219
      %v3221 = vpop.f32.mrb[0].mxu0
      %v3222 = vpop.f32.mrb[0].mxu0
      %v3223 = vadd.f32 0.0, %v3222
      %v3224 = vpop.f32.mrb[0].mxu0
      %3225 = vmatprep.mubr.bf16.mxu0 0
      %3226 = vmatmul.mubr.bf16.gmra.mrb[0].mxu0 %v3132
      %v3227 = vpop.f32.mrb[0].mxu0
      %v3228 = vadd.f32 0.0, %v3227
      %v3229 = vpop.f32.mrb[0].mxu0
      %v3230 = vpop.f32.mrb[0].mxu0
      %v3231 = vadd.f32 0.0, %v3230
      %v3232 = vpop.f32.mrb[0].mxu0
      %3233 = vmatprep.mubr.bf16.mxu0 0
      %3234 = vmatmul.mubr.bf16.gmra.mrb[0].mxu0 %v3133
      %v3235 = vpop.f32.mrb[0].mxu0
      %v3236 = vadd.f32 0.0, %v3235
      %v3237 = vpop.f32.mrb[0].mxu0
      %v3238 = vpop.f32.mrb[0].mxu0
      %v3239 = vadd.f32 0.0, %v3238
      %v3240 = vpop.f32.mrb[0].mxu0
      %3241 = vdwg.mxu0
      %v3242 = vadd.f32 %v3006, %v3220
      %v3243 = vadd.f32 %v3007, %v3223
      %v3244 = vadd.f32 %v3008, %v3228
      %v3245 = vadd.f32 %v3009, %v3231
      %v3246 = vadd.f32 %v3010, %v3236
      %v3247 = vadd.f32 %v3011, %v3239
      %v3248 = vld [vmem:[%s2859] sm:$0xe]
      %v3249 = vld [vmem:[%s2859 + $0x8] sm:$0xe]
      %v3250 = vld [vmem:[%s2859 + $0x10] sm:$0xe]
      %v3251 = vld [vmem:[%s2859 + $0x18] sm:$0xe]
      %v3252 = vld [vmem:[%s2859 + $0x20] sm:$0xe]
      %v3253 = vld [vmem:[%s2859 + $0x28] sm:$0xe]
      %v3266 = vrot.slane %v3248, 5
      %v3267 = vrot.slane %v3266, 4
      %v3268 = vrot.slane %v3013, 5
      %v3269 = vsel %vm2694, %v3267, %v3268
      %v3270 = vrot.slane %v3249, 5
      %v3271 = vrot.slane %v3270, 4
      %v3272 = vrot.slane %v3015, 5
      %v3273 = vsel %vm2694, %v3271, %v3272
      %v3274 = vrot.slane %v3250, 5
      %v3275 = vrot.slane %v3274, 4
      %v3276 = vrot.slane %v3017, 5
      %v3277 = vsel %vm2694, %v3275, %v3276
      %v3278 = vrot.slane %v3251, 5
      %v3279 = vrot.slane %v3278, 4
      %v3280 = vrot.slane %v3019, 5
      %v3281 = vsel %vm2694, %v3279, %v3280
      %v3282 = vrot.slane %v3252, 5
      %v3283 = vrot.slane %v3282, 4
      %v3284 = vrot.slane %v3021, 5
      %v3285 = vsel %vm2694, %v3283, %v3284
      %v3286 = vrot.slane %v3253, 5
      %v3287 = vrot.slane %v3286, 4
      %v3288 = vrot.slane %v3023, 5
      %v3289 = vsel %vm2694, %v3287, %v3288
      %s3290 = scalar_lea.vmem %s3, 320
      %v3291 = vld [vmem:[%s3290] sm:$0xf]
      %v3292 = vld [vmem:[%s3290 + $0x4] sm:$0xf]
      %v3293 = vld [vmem:[%s3290 + $0x8] sm:$0xf]
      %v3294 = vld [vmem:[%s3290 + $0xc] sm:$0xf]
      %v3295 = vld [vmem:[%s3290 + $0x10] sm:$0xf]
      %v3296 = vld [vmem:[%s3290 + $0x14] sm:$0xf]
      %v3297 = vld [vmem:[%s3290 + $0x18] sm:$0xf]
      %v3298 = vld [vmem:[%s3290 + $0x1c] sm:$0xf]
      %v3299 = vld [vmem:[%s3290 + $0x20] sm:$0xf]
      %v3300 = vld [vmem:[%s3290 + $0x24] sm:$0xf]
      %v3301 = vld [vmem:[%s3290 + $0x28] sm:$0xf]
      %v3302 = vld [vmem:[%s3290 + $0x2c] sm:$0xf]
      %v3303 = vld [vmem:[%s3290 + $0x30] sm:$0xf]
      %v3304 = vld [vmem:[%s3290 + $0x34] sm:$0xf]
      %v3305 = vld [vmem:[%s3290 + $0x38] sm:$0xf]
      %v3306 = vld [vmem:[%s3290 + $0x3c] sm:$0xf]
      %v3307 = vunpack.c.l.b16 %v3269
      %v3308 = vunpack.c.l.b16 %v3273
      %v3309 = vunpack.c.l.b16 %v3277
      %v3310 = vunpack.c.l.b16 %v3281
      %v3311 = vunpack.c.l.b16 %v3285
      %v3312 = vunpack.c.l.b16 %v3289
      %v3313 = vpack.c.b16 %v3308, %v3307
      %v3314 = vpack.c.b16 %v3310, %v3309
      %v3315 = vpack.c.b16 %v3312, %v3311
      %v3335 = vunpack.c.l.b16 %v3291
      %v3336 = vunpack.c.l.b16 %v3292
      %v3337 = vunpack.c.l.b16 %v3293
      %v3338 = vunpack.c.l.b16 %v3294
      %v3339 = vunpack.c.l.b16 %v3295
      %v3340 = vunpack.c.l.b16 %v3296
      %v3341 = vunpack.c.l.b16 %v3297
      %v3342 = vunpack.c.l.b16 %v3298
      %v3343 = vunpack.c.l.b16 %v3299
      %v3344 = vunpack.c.l.b16 %v3300
      %v3345 = vunpack.c.l.b16 %v3301
      %v3346 = vunpack.c.l.b16 %v3302
      %v3347 = vunpack.c.l.b16 %v3303
      %v3348 = vunpack.c.l.b16 %v3304
      %v3349 = vunpack.c.l.b16 %v3305
      %v3350 = vunpack.c.l.b16 %v3306
      %v3351 = vpack.c.b16 %v3336, %v3335
      %v3352 = vpack.c.b16 %v3338, %v3337
      %v3353 = vpack.c.b16 %v3340, %v3339
      %v3354 = vpack.c.b16 %v3342, %v3341
      %v3355 = vpack.c.b16 %v3344, %v3343
      %v3356 = vpack.c.b16 %v3346, %v3345
      %v3357 = vpack.c.b16 %v3348, %v3347
      %v3358 = vpack.c.b16 %v3350, %v3349
      %3367 = vmatprep.subr.bf16.mxu0 0
      %3368 = vmatpush1.bf16.msra.mxu0 %v3351
      %3369 = vmatprep.subr.bf16.mxu0 0
      %3370 = vmatpush1.bf16.msra.mxu0 %v3352
      %3371 = vmatprep.subr.bf16.mxu0 0
      %3372 = vmatpush1.bf16.msra.mxu0 %v3353
      %3373 = vmatprep.subr.bf16.mxu0 0
      %3374 = vmatpush1.bf16.msra.mxu0 %v3354
      %3375 = vmatprep.subr.bf16.mxu0 0
      %3376 = vmatpush1.bf16.msra.mxu0 %v3355
      %3377 = vmatprep.subr.bf16.mxu0 0
      %3378 = vmatpush1.bf16.msra.mxu0 %v3356
      %3379 = vmatprep.subr.bf16.mxu0 0
      %3380 = vmatpush1.bf16.msra.mxu0 %v3357
      %3381 = vmatprep.subr.bf16.mxu0 0
      %3382 = vmatpush1.bf16.msra.mxu0 %v3358
      %3383 = vmatprep.subr.bf16.mxu0 0
      %3384 = vmatpush1.bf16.msra.mxu0 0
      %3385 = vmatprep.subr.bf16.mxu0 0
      %3386 = vmatpush1.bf16.msra.mxu0 0
      %3387 = vmatprep.subr.bf16.mxu0 0
      %3388 = vmatpush1.bf16.msra.mxu0 0
      %3389 = vmatprep.subr.bf16.mxu0 0
      %3390 = vmatpush1.bf16.msra.mxu0 0
      %3391 = vmatprep.subr.bf16.mxu0 0
      %3392 = vmatpush1.bf16.msra.mxu0 0
      %3393 = vmatprep.subr.bf16.mxu0 0
      %3394 = vmatpush1.bf16.msra.mxu0 0
      %3395 = vmatprep.subr.bf16.mxu0 0
      %3396 = vmatpush1.bf16.msra.mxu0 0
      %3397 = vmatprep.subr.bf16.mxu0 0
      %3398 = vmatpush1.bf16.msra.mxu0 0
      %3399 = vmatprep.mubr.bf16.mxu0 0
      %3400 = vmatmul.mubr.bf16.gmra.mrb[0].mxu0 %v3313
      %v3401 = vpop.f32.mrb[0].mxu0
      %v3402 = vadd.f32 0.0, %v3401
      %v3403 = vpop.f32.mrb[0].mxu0
      %v3404 = vpop.f32.mrb[0].mxu0
      %v3405 = vadd.f32 0.0, %v3404
      %v3406 = vpop.f32.mrb[0].mxu0
      %3407 = vmatprep.mubr.bf16.mxu0 0
      %3408 = vmatmul.mubr.bf16.gmra.mrb[0].mxu0 %v3314
      %v3409 = vpop.f32.mrb[0].mxu0
      %v3410 = vadd.f32 0.0, %v3409
      %v3411 = vpop.f32.mrb[0].mxu0
      %v3412 = vpop.f32.mrb[0].mxu0
      %v3413 = vadd.f32 0.0, %v3412
      %v3414 = vpop.f32.mrb[0].mxu0
      %3415 = vmatprep.mubr.bf16.mxu0 0
      %3416 = vmatmul.mubr.bf16.gmra.mrb[0].mxu0 %v3315
      %v3417 = vpop.f32.mrb[0].mxu0
      %v3418 = vadd.f32 0.0, %v3417
      %v3419 = vpop.f32.mrb[0].mxu0
      %v3420 = vpop.f32.mrb[0].mxu0
      %v3421 = vadd.f32 0.0, %v3420
      %v3422 = vpop.f32.mrb[0].mxu0
      %3423 = vdwg.mxu0
      %v3424 = vadd.f32 %v3242, %v3402
      %v3425 = vadd.f32 %v3243, %v3405
      %v3426 = vadd.f32 %v3244, %v3410
      %v3427 = vadd.f32 %v3245, %v3413
      %v3428 = vadd.f32 %v3246, %v3418
      %v3429 = vadd.f32 %v3247, %v3421
      %v3430 = vld [vmem:[%s2186] sm:$0xf]
      %v3431 = vld [vmem:[%s2186 + $0x8] sm:$0xf]
      %v3432 = vld [vmem:[%s2186 + $0x10] sm:$0xf]
      %v3433 = vld [vmem:[%s2186 + $0x18] sm:$0xf]
      %v3434 = vld [vmem:[%s2186 + $0x20] sm:$0xf]
      %v3435 = vld [vmem:[%s2186 + $0x28] sm:$0xf]
      %s3436 = scalar_lea.vmem %s3, 384
      %v3437 = vld [vmem:[%s3436] sm:$0xf]
      %v3438 = vld [vmem:[%s3436 + $0x4] sm:$0xf]
      %v3439 = vld [vmem:[%s3436 + $0x8] sm:$0xf]
      %v3440 = vld [vmem:[%s3436 + $0xc] sm:$0xf]
      %v3441 = vld [vmem:[%s3436 + $0x10] sm:$0xf]
      %v3442 = vld [vmem:[%s3436 + $0x14] sm:$0xf]
      %v3443 = vld [vmem:[%s3436 + $0x18] sm:$0xf]
      %v3444 = vld [vmem:[%s3436 + $0x1c] sm:$0xf]
      %v3445 = vld [vmem:[%s3436 + $0x20] sm:$0xf]
      %v3446 = vld [vmem:[%s3436 + $0x24] sm:$0xf]
      %v3447 = vld [vmem:[%s3436 + $0x28] sm:$0xf]
      %v3448 = vld [vmem:[%s3436 + $0x2c] sm:$0xf]
      %v3449 = vld [vmem:[%s3436 + $0x30] sm:$0xf]
      %v3450 = vld [vmem:[%s3436 + $0x34] sm:$0xf]
      %v3451 = vld [vmem:[%s3436 + $0x38] sm:$0xf]
      %v3452 = vld [vmem:[%s3436 + $0x3c] sm:$0xf]
      %v3459 = vunpack.c.l.b16 %v3430
      %v3460 = vunpack.c.l.b16 %v3431
      %v3461 = vunpack.c.l.b16 %v3432
      %v3462 = vunpack.c.l.b16 %v3433
      %v3463 = vunpack.c.l.b16 %v3434
      %v3464 = vunpack.c.l.b16 %v3435
      %v3465 = vpack.c.b16 %v3460, %v3459
      %v3466 = vpack.c.b16 %v3462, %v3461
      %v3467 = vpack.c.b16 %v3464, %v3463
      %v3487 = vunpack.c.l.b16 %v3437
      %v3488 = vunpack.c.l.b16 %v3438
      %v3489 = vunpack.c.l.b16 %v3439
      %v3490 = vunpack.c.l.b16 %v3440
      %v3491 = vunpack.c.l.b16 %v3441
      %v3492 = vunpack.c.l.b16 %v3442
      %v3493 = vunpack.c.l.b16 %v3443
      %v3494 = vunpack.c.l.b16 %v3444
      %v3495 = vunpack.c.l.b16 %v3445
      %v3496 = vunpack.c.l.b16 %v3446
      %v3497 = vunpack.c.l.b16 %v3447
      %v3498 = vunpack.c.l.b16 %v3448
      %v3499 = vunpack.c.l.b16 %v3449
      %v3500 = vunpack.c.l.b16 %v3450
      %v3501 = vunpack.c.l.b16 %v3451
      %v3502 = vunpack.c.l.b16 %v3452
      %v3503 = vpack.c.b16 %v3488, %v3487
      %v3504 = vpack.c.b16 %v3490, %v3489
      %v3505 = vpack.c.b16 %v3492, %v3491
      %v3506 = vpack.c.b16 %v3494, %v3493
      %v3507 = vpack.c.b16 %v3496, %v3495
      %v3508 = vpack.c.b16 %v3498, %v3497
      %v3509 = vpack.c.b16 %v3500, %v3499
      %v3510 = vpack.c.b16 %v3502, %v3501
      %3519 = vmatprep.subr.bf16.mxu0 0
      %3520 = vmatpush1.bf16.msra.mxu0 %v3503
      %3521 = vmatprep.subr.bf16.mxu0 0
      %3522 = vmatpush1.bf16.msra.mxu0 %v3504
      %3523 = vmatprep.subr.bf16.mxu0 0
      %3524 = vmatpush1.bf16.msra.mxu0 %v3505
      %3525 = vmatprep.subr.bf16.mxu0 0
      %3526 = vmatpush1.bf16.msra.mxu0 %v3506
      %3527 = vmatprep.subr.bf16.mxu0 0
      %3528 = vmatpush1.bf16.msra.mxu0 %v3507
      %3529 = vmatprep.subr.bf16.mxu0 0
      %3530 = vmatpush1.bf16.msra.mxu0 %v3508
      %3531 = vmatprep.subr.bf16.mxu0 0
      %3532 = vmatpush1.bf16.msra.mxu0 %v3509
      %3533 = vmatprep.subr.bf16.mxu0 0
      %3534 = vmatpush1.bf16.msra.mxu0 %v3510
      %3535 = vmatprep.subr.bf16.mxu0 0
      %3536 = vmatpush1.bf16.msra.mxu0 0
      %3537 = vmatprep.subr.bf16.mxu0 0
      %3538 = vmatpush1.bf16.msra.mxu0 0
      %3539 = vmatprep.subr.bf16.mxu0 0
      %3540 = vmatpush1.bf16.msra.mxu0 0
      %3541 = vmatprep.subr.bf16.mxu0 0
      %3542 = vmatpush1.bf16.msra.mxu0 0
      %3543 = vmatprep.subr.bf16.mxu0 0
      %3544 = vmatpush1.bf16.msra.mxu0 0
      %3545 = vmatprep.subr.bf16.mxu0 0
      %3546 = vmatpush1.bf16.msra.mxu0 0
      %3547 = vmatprep.subr.bf16.mxu0 0
      %3548 = vmatpush1.bf16.msra.mxu0 0
      %3549 = vmatprep.subr.bf16.mxu0 0
      %3550 = vmatpush1.bf16.msra.mxu0 0
      %3551 = vmatprep.mubr.bf16.mxu0 0
      %3552 = vmatmul.mubr.bf16.gmra.mrb[0].mxu0 %v3465
      %v3553 = vpop.f32.mrb[0].mxu0
      %v3554 = vadd.f32 0.0, %v3553
      %v3555 = vpop.f32.mrb[0].mxu0
      %v3556 = vpop.f32.mrb[0].mxu0
      %v3557 = vadd.f32 0.0, %v3556
      %v3558 = vpop.f32.mrb[0].mxu0
      %3559 = vmatprep.mubr.bf16.mxu0 0
      %3560 = vmatmul.mubr.bf16.gmra.mrb[0].mxu0 %v3466
      %v3561 = vpop.f32.mrb[0].mxu0
      %v3562 = vadd.f32 0.0, %v3561
      %v3563 = vpop.f32.mrb[0].mxu0
      %v3564 = vpop.f32.mrb[0].mxu0
      %v3565 = vadd.f32 0.0, %v3564
      %v3566 = vpop.f32.mrb[0].mxu0
      %3567 = vmatprep.mubr.bf16.mxu0 0
      %3568 = vmatmul.mubr.bf16.gmra.mrb[0].mxu0 %v3467
      %v3569 = vpop.f32.mrb[0].mxu0
      %v3570 = vadd.f32 0.0, %v3569
      %v3571 = vpop.f32.mrb[0].mxu0
      %v3572 = vpop.f32.mrb[0].mxu0
      %v3573 = vadd.f32 0.0, %v3572
      %v3574 = vpop.f32.mrb[0].mxu0
      %3575 = vdwg.mxu0
      %v3576 = vadd.f32 %v3424, %v3554
      %v3577 = vadd.f32 %v3425, %v3557
      %v3578 = vadd.f32 %v3426, %v3562
      %v3579 = vadd.f32 %v3427, %v3565
      %v3580 = vadd.f32 %v3428, %v3570
      %v3581 = vadd.f32 %v3429, %v3573
      %v3582 = vld [vmem:[%s2186] sm:$0xf]
      %v3583 = vld [vmem:[%s2186 + $0x4] sm:$0x1]
      %v3584 = vld [vmem:[%s2186 + $0x8] sm:$0xf]
      %v3585 = vld [vmem:[%s2186 + $0xc] sm:$0x1]
      %v3586 = vld [vmem:[%s2186 + $0x10] sm:$0xf]
      %v3587 = vld [vmem:[%s2186 + $0x14] sm:$0x1]
      %v3588 = vld [vmem:[%s2186 + $0x18] sm:$0xf]
      %v3589 = vld [vmem:[%s2186 + $0x1c] sm:$0x1]
      %v3590 = vld [vmem:[%s2186 + $0x20] sm:$0xf]
      %v3591 = vld [vmem:[%s2186 + $0x24] sm:$0x1]
      %v3592 = vld [vmem:[%s2186 + $0x28] sm:$0xf]
      %v3593 = vld [vmem:[%s2186 + $0x2c] sm:$0x1]
      %v3595 = vshrl.u32 %v3582, 16
      %v3597 = vrot.slane %v3595, 4
      %v3598 = vshll.u32 %v3582, 16
      %v3600 = vrot.slane %v3598, 5
      %v3601 = vor.u32 %v3597, %v3600
      %v3602 = vrot.slane %v3601, 4
      %v3604 = vshll.u32 %v3583, 16
      %v3606 = vrot.slane %v3604, 5
      %v3607 = vsel %vm2332, %v3602, %v3606
      %v3609 = vshrl.u32 %v3584, 16
      %v3611 = vrot.slane %v3609, 4
      %v3612 = vshll.u32 %v3584, 16
      %v3614 = vrot.slane %v3612, 5
      %v3615 = vor.u32 %v3611, %v3614
      %v3616 = vrot.slane %v3615, 4
      %v3618 = vshll.u32 %v3585, 16
      %v3620 = vrot.slane %v3618, 5
      %v3621 = vsel %vm2332, %v3616, %v3620
      %v3623 = vshrl.u32 %v3586, 16
      %v3625 = vrot.slane %v3623, 4
      %v3626 = vshll.u32 %v3586, 16
      %v3628 = vrot.slane %v3626, 5
      %v3629 = vor.u32 %v3625, %v3628
      %v3630 = vrot.slane %v3629, 4
      %v3632 = vshll.u32 %v3587, 16
      %v3634 = vrot.slane %v3632, 5
      %v3635 = vsel %vm2332, %v3630, %v3634
      %v3637 = vshrl.u32 %v3588, 16
      %v3639 = vrot.slane %v3637, 4
      %v3640 = vshll.u32 %v3588, 16
      %v3642 = vrot.slane %v3640, 5
      %v3643 = vor.u32 %v3639, %v3642
      %v3644 = vrot.slane %v3643, 4
      %v3646 = vshll.u32 %v3589, 16
      %v3648 = vrot.slane %v3646, 5
      %v3649 = vsel %vm2332, %v3644, %v3648
      %v3651 = vshrl.u32 %v3590, 16
      %v3653 = vrot.slane %v3651, 4
      %v3654 = vshll.u32 %v3590, 16
      %v3656 = vrot.slane %v3654, 5
      %v3657 = vor.u32 %v3653, %v3656
      %v3658 = vrot.slane %v3657, 4
      %v3660 = vshll.u32 %v3591, 16
      %v3662 = vrot.slane %v3660, 5
      %v3663 = vsel %vm2332, %v3658, %v3662
      %v3665 = vshrl.u32 %v3592, 16
      %v3667 = vrot.slane %v3665, 4
      %v3668 = vshll.u32 %v3592, 16
      %v3670 = vrot.slane %v3668, 5
      %v3671 = vor.u32 %v3667, %v3670
      %v3672 = vrot.slane %v3671, 4
      %v3674 = vshll.u32 %v3593, 16
      %v3676 = vrot.slane %v3674, 5
      %v3677 = vsel %vm2332, %v3672, %v3676
      %s3678 = scalar_lea.vmem %s3, 448
      %v3679 = vld [vmem:[%s3678] sm:$0xf]
      %v3680 = vld [vmem:[%s3678 + $0x4] sm:$0xf]
      %v3681 = vld [vmem:[%s3678 + $0x8] sm:$0xf]
      %v3682 = vld [vmem:[%s3678 + $0xc] sm:$0xf]
      %v3683 = vld [vmem:[%s3678 + $0x10] sm:$0xf]
      %v3684 = vld [vmem:[%s3678 + $0x14] sm:$0xf]
      %v3685 = vld [vmem:[%s3678 + $0x18] sm:$0xf]
      %v3686 = vld [vmem:[%s3678 + $0x1c] sm:$0xf]
      %v3687 = vld [vmem:[%s3678 + $0x20] sm:$0xf]
      %v3688 = vld [vmem:[%s3678 + $0x24] sm:$0xf]
      %v3689 = vld [vmem:[%s3678 + $0x28] sm:$0xf]
      %v3690 = vld [vmem:[%s3678 + $0x2c] sm:$0xf]
      %v3691 = vld [vmem:[%s3678 + $0x30] sm:$0xf]
      %v3692 = vld [vmem:[%s3678 + $0x34] sm:$0xf]
      %v3693 = vld [vmem:[%s3678 + $0x38] sm:$0xf]
      %v3694 = vld [vmem:[%s3678 + $0x3c] sm:$0xf]
      %v3695 = vunpack.c.l.b16 %v3607
      %v3696 = vunpack.c.l.b16 %v3621
      %v3697 = vunpack.c.l.b16 %v3635
      %v3698 = vunpack.c.l.b16 %v3649
      %v3699 = vunpack.c.l.b16 %v3663
      %v3700 = vunpack.c.l.b16 %v3677
      %v3701 = vpack.c.b16 %v3696, %v3695
      %v3702 = vpack.c.b16 %v3698, %v3697
      %v3703 = vpack.c.b16 %v3700, %v3699
      %v3723 = vunpack.c.l.b16 %v3679
      %v3724 = vunpack.c.l.b16 %v3680
      %v3725 = vunpack.c.l.b16 %v3681
      %v3726 = vunpack.c.l.b16 %v3682
      %v3727 = vunpack.c.l.b16 %v3683
      %v3728 = vunpack.c.l.b16 %v3684
      %v3729 = vunpack.c.l.b16 %v3685
      %v3730 = vunpack.c.l.b16 %v3686
      %v3731 = vunpack.c.l.b16 %v3687
      %v3732 = vunpack.c.l.b16 %v3688
      %v3733 = vunpack.c.l.b16 %v3689
      %v3734 = vunpack.c.l.b16 %v3690
      %v3735 = vunpack.c.l.b16 %v3691
      %v3736 = vunpack.c.l.b16 %v3692
      %v3737 = vunpack.c.l.b16 %v3693
      %v3738 = vunpack.c.l.b16 %v3694
      %v3739 = vpack.c.b16 %v3724, %v3723
      %v3740 = vpack.c.b16 %v3726, %v3725
      %v3741 = vpack.c.b16 %v3728, %v3727
      %v3742 = vpack.c.b16 %v3730, %v3729
      %v3743 = vpack.c.b16 %v3732, %v3731
      %v3744 = vpack.c.b16 %v3734, %v3733
      %v3745 = vpack.c.b16 %v3736, %v3735
      %v3746 = vpack.c.b16 %v3738, %v3737
      %3755 = vmatprep.subr.bf16.mxu0 0
      %3756 = vmatpush1.bf16.msra.mxu0 %v3739
      %3757 = vmatprep.subr.bf16.mxu0 0
      %3758 = vmatpush1.bf16.msra.mxu0 %v3740
      %3759 = vmatprep.subr.bf16.mxu0 0
      %3760 = vmatpush1.bf16.msra.mxu0 %v3741
      %3761 = vmatprep.subr.bf16.mxu0 0
      %3762 = vmatpush1.bf16.msra.mxu0 %v3742
      %3763 = vmatprep.subr.bf16.mxu0 0
      %3764 = vmatpush1.bf16.msra.mxu0 %v3743
      %3765 = vmatprep.subr.bf16.mxu0 0
      %3766 = vmatpush1.bf16.msra.mxu0 %v3744
      %3767 = vmatprep.subr.bf16.mxu0 0
      %3768 = vmatpush1.bf16.msra.mxu0 %v3745
      %3769 = vmatprep.subr.bf16.mxu0 0
      %3770 = vmatpush1.bf16.msra.mxu0 %v3746
      %3771 = vmatprep.subr.bf16.mxu0 0
      %3772 = vmatpush1.bf16.msra.mxu0 0
      %3773 = vmatprep.subr.bf16.mxu0 0
      %3774 = vmatpush1.bf16.msra.mxu0 0
      %3775 = vmatprep.subr.bf16.mxu0 0
      %3776 = vmatpush1.bf16.msra.mxu0 0
      %3777 = vmatprep.subr.bf16.mxu0 0
      %3778 = vmatpush1.bf16.msra.mxu0 0
      %3779 = vmatprep.subr.bf16.mxu0 0
      %3780 = vmatpush1.bf16.msra.mxu0 0
      %3781 = vmatprep.subr.bf16.mxu0 0
      %3782 = vmatpush1.bf16.msra.mxu0 0
      %3783 = vmatprep.subr.bf16.mxu0 0
      %3784 = vmatpush1.bf16.msra.mxu0 0
      %3785 = vmatprep.subr.bf16.mxu0 0
      %3786 = vmatpush1.bf16.msra.mxu0 0
      %3787 = vmatprep.mubr.bf16.mxu0 0
      %3788 = vmatmul.mubr.bf16.gmra.mrb[0].mxu0 %v3701
      %v3789 = vpop.f32.mrb[0].mxu0
      %v3790 = vadd.f32 0.0, %v3789
      %v3791 = vpop.f32.mrb[0].mxu0
      %v3792 = vpop.f32.mrb[0].mxu0
      %v3793 = vadd.f32 0.0, %v3792
      %v3794 = vpop.f32.mrb[0].mxu0
      %3795 = vmatprep.mubr.bf16.mxu0 0
      %3796 = vmatmul.mubr.bf16.gmra.mrb[0].mxu0 %v3702
      %v3797 = vpop.f32.mrb[0].mxu0
      %v3798 = vadd.f32 0.0, %v3797
      %v3799 = vpop.f32.mrb[0].mxu0
      %v3800 = vpop.f32.mrb[0].mxu0
      %v3801 = vadd.f32 0.0, %v3800
      %v3802 = vpop.f32.mrb[0].mxu0
      %3803 = vmatprep.mubr.bf16.mxu0 0
      %3804 = vmatmul.mubr.bf16.gmra.mrb[0].mxu0 %v3703
      %v3805 = vpop.f32.mrb[0].mxu0
      %v3806 = vadd.f32 0.0, %v3805
      %v3807 = vpop.f32.mrb[0].mxu0
      %v3808 = vpop.f32.mrb[0].mxu0
      %v3809 = vadd.f32 0.0, %v3808
      %v3810 = vpop.f32.mrb[0].mxu0
      %3811 = vdwg.mxu0
      %v3812 = vadd.f32 %v3576, %v3790
      %v3813 = vadd.f32 %v3577, %v3793
      %v3814 = vadd.f32 %v3578, %v3798
      %v3815 = vadd.f32 %v3579, %v3801
      %v3816 = vadd.f32 %v3580, %v3806
      %v3817 = vadd.f32 %v3581, %v3809
      %v3818 = vld [vmem:[%s2186] sm:$0xe]
      %v3819 = vld [vmem:[%s2186 + $0x8] sm:$0xe]
      %v3820 = vld [vmem:[%s2186 + $0x10] sm:$0xe]
      %v3821 = vld [vmem:[%s2186 + $0x18] sm:$0xe]
      %v3822 = vld [vmem:[%s2186 + $0x20] sm:$0xe]
      %v3823 = vld [vmem:[%s2186 + $0x28] sm:$0xe]
      %v3836 = vrot.slane %v3818, 5
      %v3837 = vrot.slane %v3836, 4
      %v3838 = vrot.slane %v3583, 5
      %v3839 = vsel %vm2694, %v3837, %v3838
      %v3840 = vrot.slane %v3819, 5
      %v3841 = vrot.slane %v3840, 4
      %v3842 = vrot.slane %v3585, 5
      %v3843 = vsel %vm2694, %v3841, %v3842
      %v3844 = vrot.slane %v3820, 5
      %v3845 = vrot.slane %v3844, 4
      %v3846 = vrot.slane %v3587, 5
      %v3847 = vsel %vm2694, %v3845, %v3846
      %v3848 = vrot.slane %v3821, 5
      %v3849 = vrot.slane %v3848, 4
      %v3850 = vrot.slane %v3589, 5
      %v3851 = vsel %vm2694, %v3849, %v3850
      %v3852 = vrot.slane %v3822, 5
      %v3853 = vrot.slane %v3852, 4
      %v3854 = vrot.slane %v3591, 5
      %v3855 = vsel %vm2694, %v3853, %v3854
      %v3856 = vrot.slane %v3823, 5
      %v3857 = vrot.slane %v3856, 4
      %v3858 = vrot.slane %v3593, 5
      %v3859 = vsel %vm2694, %v3857, %v3858
      %s3860 = scalar_lea.vmem %s3, 512
      %v3861 = vld [vmem:[%s3860] sm:$0xf]
      %v3862 = vld [vmem:[%s3860 + $0x4] sm:$0xf]
      %v3863 = vld [vmem:[%s3860 + $0x8] sm:$0xf]
      %v3864 = vld [vmem:[%s3860 + $0xc] sm:$0xf]
      %v3865 = vld [vmem:[%s3860 + $0x10] sm:$0xf]
      %v3866 = vld [vmem:[%s3860 + $0x14] sm:$0xf]
      %v3867 = vld [vmem:[%s3860 + $0x18] sm:$0xf]
      %v3868 = vld [vmem:[%s3860 + $0x1c] sm:$0xf]
      %v3869 = vld [vmem:[%s3860 + $0x20] sm:$0xf]
      %v3870 = vld [vmem:[%s3860 + $0x24] sm:$0xf]
      %v3871 = vld [vmem:[%s3860 + $0x28] sm:$0xf]
      %v3872 = vld [vmem:[%s3860 + $0x2c] sm:$0xf]
      %v3873 = vld [vmem:[%s3860 + $0x30] sm:$0xf]
      %v3874 = vld [vmem:[%s3860 + $0x34] sm:$0xf]
      %v3875 = vld [vmem:[%s3860 + $0x38] sm:$0xf]
      %v3876 = vld [vmem:[%s3860 + $0x3c] sm:$0xf]
      %v3877 = vunpack.c.l.b16 %v3839
      %v3878 = vunpack.c.l.b16 %v3843
      %v3879 = vunpack.c.l.b16 %v3847
      %v3880 = vunpack.c.l.b16 %v3851
      %v3881 = vunpack.c.l.b16 %v3855
      %v3882 = vunpack.c.l.b16 %v3859
      %v3883 = vpack.c.b16 %v3878, %v3877
      %v3884 = vpack.c.b16 %v3880, %v3879
      %v3885 = vpack.c.b16 %v3882, %v3881
      %v3905 = vunpack.c.l.b16 %v3861
      %v3906 = vunpack.c.l.b16 %v3862
      %v3907 = vunpack.c.l.b16 %v3863
      %v3908 = vunpack.c.l.b16 %v3864
      %v3909 = vunpack.c.l.b16 %v3865
      %v3910 = vunpack.c.l.b16 %v3866
      %v3911 = vunpack.c.l.b16 %v3867
      %v3912 = vunpack.c.l.b16 %v3868
      %v3913 = vunpack.c.l.b16 %v3869
      %v3914 = vunpack.c.l.b16 %v3870
      %v3915 = vunpack.c.l.b16 %v3871
      %v3916 = vunpack.c.l.b16 %v3872
      %v3917 = vunpack.c.l.b16 %v3873
      %v3918 = vunpack.c.l.b16 %v3874
      %v3919 = vunpack.c.l.b16 %v3875
      %v3920 = vunpack.c.l.b16 %v3876
      %v3921 = vpack.c.b16 %v3906, %v3905
      %v3922 = vpack.c.b16 %v3908, %v3907
      %v3923 = vpack.c.b16 %v3910, %v3909
      %v3924 = vpack.c.b16 %v3912, %v3911
      %v3925 = vpack.c.b16 %v3914, %v3913
      %v3926 = vpack.c.b16 %v3916, %v3915
      %v3927 = vpack.c.b16 %v3918, %v3917
      %v3928 = vpack.c.b16 %v3920, %v3919
      %3937 = vmatprep.subr.bf16.mxu0 0
      %3938 = vmatpush1.bf16.msra.mxu0 %v3921
      %3939 = vmatprep.subr.bf16.mxu0 0
      %3940 = vmatpush1.bf16.msra.mxu0 %v3922
      %3941 = vmatprep.subr.bf16.mxu0 0
      %3942 = vmatpush1.bf16.msra.mxu0 %v3923
      %3943 = vmatprep.subr.bf16.mxu0 0
      %3944 = vmatpush1.bf16.msra.mxu0 %v3924
      %3945 = vmatprep.subr.bf16.mxu0 0
      %3946 = vmatpush1.bf16.msra.mxu0 %v3925
      %3947 = vmatprep.subr.bf16.mxu0 0
      %3948 = vmatpush1.bf16.msra.mxu0 %v3926
      %3949 = vmatprep.subr.bf16.mxu0 0
      %3950 = vmatpush1.bf16.msra.mxu0 %v3927
      %3951 = vmatprep.subr.bf16.mxu0 0
      %3952 = vmatpush1.bf16.msra.mxu0 %v3928
      %3953 = vmatprep.subr.bf16.mxu0 0
      %3954 = vmatpush1.bf16.msra.mxu0 0
      %3955 = vmatprep.subr.bf16.mxu0 0
      %3956 = vmatpush1.bf16.msra.mxu0 0
      %3957 = vmatprep.subr.bf16.mxu0 0
      %3958 = vmatpush1.bf16.msra.mxu0 0
      %3959 = vmatprep.subr.bf16.mxu0 0
      %3960 = vmatpush1.bf16.msra.mxu0 0
      %3961 = vmatprep.subr.bf16.mxu0 0
      %3962 = vmatpush1.bf16.msra.mxu0 0
      %3963 = vmatprep.subr.bf16.mxu0 0
      %3964 = vmatpush1.bf16.msra.mxu0 0
      %3965 = vmatprep.subr.bf16.mxu0 0
      %3966 = vmatpush1.bf16.msra.mxu0 0
      %3967 = vmatprep.subr.bf16.mxu0 0
      %3968 = vmatpush1.bf16.msra.mxu0 0
      %3969 = vmatprep.mubr.bf16.mxu0 0
      %3970 = vmatmul.mubr.bf16.gmra.mrb[0].mxu0 %v3883
      %v3971 = vpop.f32.mrb[0].mxu0
      %v3972 = vadd.f32 0.0, %v3971
      %v3973 = vpop.f32.mrb[0].mxu0
      %v3974 = vpop.f32.mrb[0].mxu0
      %v3975 = vadd.f32 0.0, %v3974
      %v3976 = vpop.f32.mrb[0].mxu0
      %3977 = vmatprep.mubr.bf16.mxu0 0
      %3978 = vmatmul.mubr.bf16.gmra.mrb[0].mxu0 %v3884
      %v3979 = vpop.f32.mrb[0].mxu0
      %v3980 = vadd.f32 0.0, %v3979
      %v3981 = vpop.f32.mrb[0].mxu0
      %v3982 = vpop.f32.mrb[0].mxu0
      %v3983 = vadd.f32 0.0, %v3982
      %v3984 = vpop.f32.mrb[0].mxu0
      %3985 = vmatprep.mubr.bf16.mxu0 0
      %3986 = vmatmul.mubr.bf16.gmra.mrb[0].mxu0 %v3885
      %v3987 = vpop.f32.mrb[0].mxu0
      %v3988 = vadd.f32 0.0, %v3987
      %v3989 = vpop.f32.mrb[0].mxu0
      %v3990 = vpop.f32.mrb[0].mxu0
      %v3991 = vadd.f32 0.0, %v3990
      %v3992 = vpop.f32.mrb[0].mxu0
      %3993 = vdwg.mxu0
      %v3994 = vadd.f32 %v3812, %v3972
      %v3995 = vadd.f32 %v3813, %v3975
      %v3996 = vadd.f32 %v3814, %v3980
      %v3997 = vadd.f32 %v3815, %v3983
      %v3998 = vadd.f32 %v3816, %v3988
      %v3999 = vadd.f32 %v3817, %v3991
      %v4000 = vld [vmem:[%s4] sm:$0x1]
      %v4002 = vlaneseq
      %v4003 = vshrl.u32 %v4002, 7
      %v4004 = vsub.s32 0, %v4003
      %v4005 = vrot.slane %v4000, %v4004
      %v4007 = vadd.f32 %v3994, %v4005
      %v4008 = vadd.f32 %v3995, %v4005
      %v4009 = vadd.f32 %v3996, %v4005
      %v4010 = vadd.f32 %v3997, %v4005
      %v4011 = vadd.f32 %v3998, %v4005
      %v4012 = vadd.f32 %v3999, %v4005
      %v4013 = vmul.f32 %v4007, 0.5
      %v4014 = vmul.f32 %v4008, 0.5
      %v4015 = vmul.f32 %v4009, 0.5
      %v4016 = vmul.f32 %v4010, 0.5
      %v4017 = vmul.f32 %v4011, 0.5
      %v4018 = vmul.f32 %v4012, 0.5
      %v4019 = vmul.f32 %v4007, 0.70710677
      %v4020 = vmul.f32 %v4008, 0.70710677
      %v4021 = vmul.f32 %v4009, 0.70710677
      %v4022 = vmul.f32 %v4010, 0.70710677
      %v4023 = vmul.f32 %v4011, 0.70710677
      %v4024 = vmul.f32 %v4012, 0.70710677
      %vm4025 = vcmp.ge.f32.partialorder %v4019, 0.0
      %vm4026 = vcmp.ge.f32.partialorder %v4020, 0.0
      %vm4027 = vcmp.ge.f32.partialorder %v4021, 0.0
      %vm4028 = vcmp.ge.f32.partialorder %v4022, 0.0
      %vm4029 = vcmp.ge.f32.partialorder %v4023, 0.0
      %vm4030 = vcmp.ge.f32.partialorder %v4024, 0.0
      %v4031 = vsel %vm4025, 1.0, -1.0
      %v4032 = vsel %vm4026, 1.0, -1.0
      %v4033 = vsel %vm4027, 1.0, -1.0
      %v4034 = vsel %vm4028, 1.0, -1.0
      %v4035 = vsel %vm4029, 1.0, -1.0
      %v4036 = vsel %vm4030, 1.0, -1.0
      %v4037 = vand.u32 2147483647, %v4019
      %v4038 = vand.u32 2147483647, %v4020
      %v4039 = vand.u32 2147483647, %v4021
      %v4040 = vand.u32 2147483647, %v4022
      %v4041 = vand.u32 2147483647, %v4023
      %v4042 = vand.u32 2147483647, %v4024
      %v4043 = vmul.f32 %v4037, 0.3275911
      %v4044 = vmul.f32 %v4038, 0.3275911
      %v4045 = vmul.f32 %v4039, 0.3275911
      %v4046 = vmul.f32 %v4040, 0.3275911
      %v4047 = vmul.f32 %v4041, 0.3275911
      %v4048 = vmul.f32 %v4042, 0.3275911
      %v4049 = vadd.f32 %v4043, 1.0
      %v4050 = vadd.f32 %v4044, 1.0
      %v4051 = vadd.f32 %v4045, 1.0
      %v4052 = vadd.f32 %v4046, 1.0
      %v4053 = vadd.f32 %v4047, 1.0
      %v4054 = vadd.f32 %v4048, 1.0
      %v4055 = vrcp.pop %v4049
      %v4056 = vrcp.pop %v4050
      %v4057 = vrcp.pop %v4051
      %v4058 = vrcp.pop %v4052
      %v4059 = vrcp.pop %v4053
      %v4060 = vrcp.pop %v4054
      %v4061 = vmul.f32 %v4055, 1.0614054
      %v4062 = vmul.f32 %v4056, 1.0614054
      %v4063 = vmul.f32 %v4057, 1.0614054
      %v4064 = vmul.f32 %v4058, 1.0614054
      %v4065 = vmul.f32 %v4059, 1.0614054
      %v4066 = vmul.f32 %v4060, 1.0614054
      %v4067 = vadd.f32 %v4061, -1.4531521
      %v4068 = vadd.f32 %v4062, -1.4531521
      %v4069 = vadd.f32 %v4063, -1.4531521
      %v4070 = vadd.f32 %v4064, -1.4531521
      %v4071 = vadd.f32 %v4065, -1.4531521
      %v4072 = vadd.f32 %v4066, -1.4531521
      %v4073 = vmul.f32 %v4067, %v4055
      %v4074 = vmul.f32 %v4068, %v4056
      %v4075 = vmul.f32 %v4069, %v4057
      %v4076 = vmul.f32 %v4070, %v4058
      %v4077 = vmul.f32 %v4071, %v4059
      %v4078 = vmul.f32 %v4072, %v4060
      %v4079 = vadd.f32 %v4073, 1.4214138
      %v4080 = vadd.f32 %v4074, 1.4214138
      %v4081 = vadd.f32 %v4075, 1.4214138
      %v4082 = vadd.f32 %v4076, 1.4214138
      %v4083 = vadd.f32 %v4077, 1.4214138
      %v4084 = vadd.f32 %v4078, 1.4214138
      %v4085 = vmul.f32 %v4079, %v4055
      %v4086 = vmul.f32 %v4080, %v4056
      %v4087 = vmul.f32 %v4081, %v4057
      %v4088 = vmul.f32 %v4082, %v4058
      %v4089 = vmul.f32 %v4083, %v4059
      %v4090 = vmul.f32 %v4084, %v4060
      %v4091 = vadd.f32 %v4085, -0.28449672
      %v4092 = vadd.f32 %v4086, -0.28449672
      %v4093 = vadd.f32 %v4087, -0.28449672
      %v4094 = vadd.f32 %v4088, -0.28449672
      %v4095 = vadd.f32 %v4089, -0.28449672
      %v4096 = vadd.f32 %v4090, -0.28449672
      %v4097 = vmul.f32 %v4091, %v4055
      %v4098 = vmul.f32 %v4092, %v4056
      %v4099 = vmul.f32 %v4093, %v4057
      %v4100 = vmul.f32 %v4094, %v4058
      %v4101 = vmul.f32 %v4095, %v4059
      %v4102 = vmul.f32 %v4096, %v4060
      %v4103 = vadd.f32 %v4097, 0.2548296
      %v4104 = vadd.f32 %v4098, 0.2548296
      %v4105 = vadd.f32 %v4099, 0.2548296
      %v4106 = vadd.f32 %v4100, 0.2548296
      %v4107 = vadd.f32 %v4101, 0.2548296
      %v4108 = vadd.f32 %v4102, 0.2548296
      %v4109 = vmul.f32 %v4103, %v4055
      %v4110 = vmul.f32 %v4104, %v4056
      %v4111 = vmul.f32 %v4105, %v4057
      %v4112 = vmul.f32 %v4106, %v4058
      %v4113 = vmul.f32 %v4107, %v4059
      %v4114 = vmul.f32 %v4108, %v4060
      %v4115 = vsub.f32 0.0, %v4037
      %v4116 = vsub.f32 0.0, %v4038
      %v4117 = vsub.f32 0.0, %v4039
      %v4118 = vsub.f32 0.0, %v4040
      %v4119 = vsub.f32 0.0, %v4041
      %v4120 = vsub.f32 0.0, %v4042
      %v4121 = vmul.f32 %v4115, %v4037
      %v4122 = vmul.f32 %v4116, %v4038
      %v4123 = vmul.f32 %v4117, %v4039
      %v4124 = vmul.f32 %v4118, %v4040
      %v4125 = vmul.f32 %v4119, %v4041
      %v4126 = vmul.f32 %v4120, %v4042
      %v4127 = vmul.f32 %v4121, 1.442695
      %v4128 = vpow.pop %v4127
      %v4129 = vmul.f32 %v4122, 1.442695
      %v4130 = vpow.pop %v4129
      %v4131 = vmul.f32 %v4123, 1.442695
      %v4132 = vpow.pop %v4131
      %v4133 = vmul.f32 %v4124, 1.442695
      %v4134 = vpow.pop %v4133
      %v4135 = vmul.f32 %v4125, 1.442695
      %v4136 = vpow.pop %v4135
      %v4137 = vmul.f32 %v4126, 1.442695
      %v4138 = vpow.pop %v4137
      %v4139 = vmul.f32 %v4109, %v4128
      %v4140 = vmul.f32 %v4110, %v4130
      %v4141 = vmul.f32 %v4111, %v4132
      %v4142 = vmul.f32 %v4112, %v4134
      %v4143 = vmul.f32 %v4113, %v4136
      %v4144 = vmul.f32 %v4114, %v4138
      %v4145 = vsub.f32 1.0, %v4139
      %v4146 = vsub.f32 1.0, %v4140
      %v4147 = vsub.f32 1.0, %v4141
      %v4148 = vsub.f32 1.0, %v4142
      %v4149 = vsub.f32 1.0, %v4143
      %v4150 = vsub.f32 1.0, %v4144
      %v4151 = vmul.f32 %v4031, %v4145
      %v4152 = vmul.f32 %v4032, %v4146
      %v4153 = vmul.f32 %v4033, %v4147
      %v4154 = vmul.f32 %v4034, %v4148
      %v4155 = vmul.f32 %v4035, %v4149
      %v4156 = vmul.f32 %v4036, %v4150
      %v4157 = vadd.f32 %v4151, 1.0
      %v4158 = vadd.f32 %v4152, 1.0
      %v4159 = vadd.f32 %v4153, 1.0
      %v4160 = vadd.f32 %v4154, 1.0
      %v4161 = vadd.f32 %v4155, 1.0
      %v4162 = vadd.f32 %v4156, 1.0
      %v4163 = vmul.f32 %v4013, %v4157
      %v4164 = vmul.f32 %v4014, %v4158
      %v4165 = vmul.f32 %v4015, %v4159
      %v4166 = vmul.f32 %v4016, %v4160
      %v4167 = vmul.f32 %v4017, %v4161
      %v4168 = vmul.f32 %v4018, %v4162
      %v4169 = vpack.c.bf16 %v4163, %v4163
      %v4170 = vpack.c.bf16 %v4164, %v4164
      %v4171 = vpack.c.bf16 %v4165, %v4165
      %v4172 = vpack.c.bf16 %v4166, %v4166
      %v4173 = vpack.c.bf16 %v4167, %v4167
      %v4174 = vpack.c.bf16 %v4168, %v4168
      %v4175 = vld [vmem:[#allocation3] sm:$0x1]
      %v4176 = vsel %vm1878, 0, %v4175
      %4177 = vst [vmem:[#allocation3] sm:$0x1] %v4176
      %v4178 = vld [vmem:[#allocation3 + $0x8] sm:$0x1]
      %v4179 = vsel %vm1878, 0, %v4178
      %4180 = vst [vmem:[#allocation3 + $0x8] sm:$0x1] %v4179
      %v4181 = vld [vmem:[#allocation3 + $0x10] sm:$0x1]
      %v4182 = vsel %vm1878, 0, %v4181
      %4183 = vst [vmem:[#allocation3 + $0x10] sm:$0x1] %v4182
      %v4184 = vld [vmem:[#allocation3 + $0x18] sm:$0x1]
      %v4185 = vsel %vm1878, 0, %v4184
      %4186 = vst [vmem:[#allocation3 + $0x18] sm:$0x1] %v4185
      %v4187 = vld [vmem:[#allocation3 + $0x20] sm:$0x1]
      %v4188 = vsel %vm1878, 0, %v4187
      %4189 = vst [vmem:[#allocation3 + $0x20] sm:$0x1] %v4188
      %v4190 = vld [vmem:[#allocation3 + $0x28] sm:$0x1]
      %v4191 = vsel %vm1878, 0, %v4190
      %4192 = vst [vmem:[#allocation3 + $0x28] sm:$0x1] %v4191
      %v4193 = vld [vmem:[#allocation3 + $0x4] sm:$0x1]
      %v4194 = vsel %vm1904, 0, %v4193
      %4195 = vst [vmem:[#allocation3 + $0x4] sm:$0x1] %v4194
      %v4196 = vld [vmem:[#allocation3 + $0xc] sm:$0x1]
      %v4197 = vsel %vm1904, 0, %v4196
      %4198 = vst [vmem:[#allocation3 + $0xc] sm:$0x1] %v4197
      %v4199 = vld [vmem:[#allocation3 + $0x14] sm:$0x1]
      %v4200 = vsel %vm1904, 0, %v4199
      %4201 = vst [vmem:[#allocation3 + $0x14] sm:$0x1] %v4200
      %v4202 = vld [vmem:[#allocation3 + $0x1c] sm:$0x1]
      %v4203 = vsel %vm1904, 0, %v4202
      %4204 = vst [vmem:[#allocation3 + $0x1c] sm:$0x1] %v4203
      %v4205 = vld [vmem:[#allocation3 + $0x24] sm:$0x1]
      %v4206 = vsel %vm1904, 0, %v4205
      %4207 = vst [vmem:[#allocation3 + $0x24] sm:$0x1] %v4206
      %v4208 = vld [vmem:[#allocation3 + $0x2c] sm:$0x1]
      %v4209 = vsel %vm1904, 0, %v4208
      %4210 = vst [vmem:[#allocation3 + $0x2c] sm:$0x1] %v4209
      %v4211 = vsel %vm1839, %v4169, 0
      %v4213 = vunpack.c.l.b16 %v4211
      %v4214 = vpack.c.b16 %v4213, %v4213
      %v4216 = vshrl.u32 %v4214, 16
      %v4218 = vrot.slane %v4216, 7
      %v4219 = vshll.u32 %v4214, 16
      %v4221 = vor.u32 %v4218, %v4219
      %v4222 = vrot.slane %v4218, 4
      %v4225 = vld [vmem:[#allocation3] sm:$0xf]
      %v4226 = vsel %vm2017, %v4221, %v4225
      %4227 = vst [vmem:[#allocation3] sm:$0xf] %v4226
      %v4228 = vld [vmem:[#allocation3 + $0x4] sm:$0x1]
      %v4229 = vsel %vm1878, %v4222, %v4228
      %4230 = vst [vmem:[#allocation3 + $0x4] sm:$0x1] %v4229
      %v4235 = vunpack.c.l.b16 %v4170
      %v4236 = vunpack.c.l.b16 %v4171
      %v4237 = vunpack.c.l.b16 %v4172
      %v4238 = vunpack.c.l.b16 %v4173
      %v4239 = vpack.c.b16 %v4235, %v4235
      %v4240 = vpack.c.b16 %v4236, %v4236
      %v4241 = vpack.c.b16 %v4237, %v4237
      %v4242 = vpack.c.b16 %v4238, %v4238
      %v4244 = vshrl.u32 %v4239, 16
      %v4246 = vrot.slane %v4244, 7
      %v4247 = vshll.u32 %v4239, 16
      %v4249 = vor.u32 %v4246, %v4247
      %v4250 = vrot.slane %v4246, 4
      %v4252 = vshrl.u32 %v4240, 16
      %v4254 = vrot.slane %v4252, 7
      %v4255 = vshll.u32 %v4240, 16
      %v4257 = vor.u32 %v4254, %v4255
      %v4258 = vrot.slane %v4254, 4
      %v4260 = vshrl.u32 %v4241, 16
      %v4262 = vrot.slane %v4260, 7
      %v4263 = vshll.u32 %v4241, 16
      %v4265 = vor.u32 %v4262, %v4263
      %v4266 = vrot.slane %v4262, 4
      %v4268 = vshrl.u32 %v4242, 16
      %v4270 = vrot.slane %v4268, 7
      %v4271 = vshll.u32 %v4242, 16
      %v4273 = vor.u32 %v4270, %v4271
      %v4274 = vrot.slane %v4270, 4
      %s4283 = scalar_lea.vmem [#allocation3], 8
      %v4284 = vld [vmem:[%s4283] sm:$0xf]
      %v4285 = vsel %vm2017, %v4249, %v4284
      %4286 = vst [vmem:[%s4283] sm:$0xf] %v4285
      %v4287 = vld [vmem:[%s4283 + $0x4] sm:$0x1]
      %v4288 = vsel %vm1878, %v4250, %v4287
      %4289 = vst [vmem:[%s4283 + $0x4] sm:$0x1] %v4288
      %v4290 = vld [vmem:[%s4283 + $0x8] sm:$0xf]
      %v4291 = vsel %vm2017, %v4257, %v4290
      %4292 = vst [vmem:[%s4283 + $0x8] sm:$0xf] %v4291
      %v4293 = vld [vmem:[%s4283 + $0xc] sm:$0x1]
      %v4294 = vsel %vm1878, %v4258, %v4293
      %4295 = vst [vmem:[%s4283 + $0xc] sm:$0x1] %v4294
      %v4296 = vld [vmem:[%s4283 + $0x10] sm:$0xf]
      %v4297 = vsel %vm2017, %v4265, %v4296
      %4298 = vst [vmem:[%s4283 + $0x10] sm:$0xf] %v4297
      %v4299 = vld [vmem:[%s4283 + $0x14] sm:$0x1]
      %v4300 = vsel %vm1878, %v4266, %v4299
      %4301 = vst [vmem:[%s4283 + $0x14] sm:$0x1] %v4300
      %v4302 = vld [vmem:[%s4283 + $0x18] sm:$0xf]
      %v4303 = vsel %vm2017, %v4273, %v4302
      %4304 = vst [vmem:[%s4283 + $0x18] sm:$0xf] %v4303
      %v4305 = vld [vmem:[%s4283 + $0x1c] sm:$0x1]
      %v4306 = vsel %vm1878, %v4274, %v4305
      %4307 = vst [vmem:[%s4283 + $0x1c] sm:$0x1] %v4306
      %v4308 = vsel %vm1859, %v4174, 0
      %v4310 = vunpack.c.l.b16 %v4308
      %v4311 = vpack.c.b16 %v4310, %v4310
      %v4313 = vshrl.u32 %v4311, 16
      %v4315 = vrot.slane %v4313, 7
      %v4316 = vshll.u32 %v4311, 16
      %v4318 = vor.u32 %v4315, %v4316
      %v4319 = vrot.slane %v4315, 4
      %s4322 = scalar_lea.vmem [#allocation3], 40
      %v4323 = vld [vmem:[%s4322] sm:$0xf]
      %v4324 = vsel %vm2017, %v4318, %v4323
      %4325 = vst [vmem:[%s4322] sm:$0xf] %v4324
      %v4326 = vld [vmem:[%s4322 + $0x4] sm:$0x1]
      %v4327 = vsel %vm1878, %v4319, %v4326
      %4328 = vst [vmem:[%s4322 + $0x4] sm:$0x1] %v4327
      %v4329 = vld [vmem:[#allocation3] sm:$0xf]
      %v4330 = vld [vmem:[#allocation3 + $0x8] sm:$0xf]
      %v4331 = vld [vmem:[#allocation3 + $0x10] sm:$0xf]
      %v4332 = vld [vmem:[#allocation3 + $0x18] sm:$0xf]
      %v4333 = vld [vmem:[%s5] sm:$0xf]
      %v4334 = vld [vmem:[%s5 + $0x4] sm:$0xf]
      %v4335 = vld [vmem:[%s5 + $0x8] sm:$0xf]
      %v4336 = vld [vmem:[%s5 + $0xc] sm:$0xf]
      %v4337 = vld [vmem:[%s5 + $0x10] sm:$0xf]
      %v4338 = vld [vmem:[%s5 + $0x14] sm:$0xf]
      %v4339 = vld [vmem:[%s5 + $0x18] sm:$0xf]
      %v4340 = vld [vmem:[%s5 + $0x1c] sm:$0xf]
      %v4341 = vld [vmem:[%s5 + $0x20] sm:$0xf]
      %v4342 = vld [vmem:[%s5 + $0x24] sm:$0xf]
      %v4343 = vld [vmem:[%s5 + $0x28] sm:$0xf]
      %v4344 = vld [vmem:[%s5 + $0x2c] sm:$0xf]
      %v4345 = vld [vmem:[%s5 + $0x30] sm:$0xf]
      %v4346 = vld [vmem:[%s5 + $0x34] sm:$0xf]
      %v4347 = vld [vmem:[%s5 + $0x38] sm:$0xf]
      %v4348 = vld [vmem:[%s5 + $0x3c] sm:$0xf]
      %v4349 = vld [vmem:[#allocation3 + $0x4] sm:$0x1]
      %v4350 = vld [vmem:[#allocation3 + $0xc] sm:$0x1]
      %v4351 = vld [vmem:[#allocation3 + $0x14] sm:$0x1]
      %v4352 = vld [vmem:[#allocation3 + $0x1c] sm:$0x1]
      %v4354 = vshrl.u32 %v4329, 16
      %v4356 = vrot.slane %v4354, 4
      %v4357 = vshll.u32 %v4329, 16
      %v4359 = vrot.slane %v4357, 5
      %v4360 = vor.u32 %v4356, %v4359
      %v4361 = vrot.slane %v4360, 4
      %v4363 = vshll.u32 %v4349, 16
      %v4365 = vrot.slane %v4363, 5
      %v4366 = vsel %vm2332, %v4361, %v4365
      %v4368 = vshrl.u32 %v4330, 16
      %v4370 = vrot.slane %v4368, 4
      %v4371 = vshll.u32 %v4330, 16
      %v4373 = vrot.slane %v4371, 5
      %v4374 = vor.u32 %v4370, %v4373
      %v4375 = vrot.slane %v4374, 4
      %v4377 = vshll.u32 %v4350, 16
      %v4379 = vrot.slane %v4377, 5
      %v4380 = vsel %vm2332, %v4375, %v4379
      %v4382 = vshrl.u32 %v4331, 16
      %v4384 = vrot.slane %v4382, 4
      %v4385 = vshll.u32 %v4331, 16
      %v4387 = vrot.slane %v4385, 5
      %v4388 = vor.u32 %v4384, %v4387
      %v4389 = vrot.slane %v4388, 4
      %v4391 = vshll.u32 %v4351, 16
      %v4393 = vrot.slane %v4391, 5
      %v4394 = vsel %vm2332, %v4389, %v4393
      %v4396 = vshrl.u32 %v4332, 16
      %v4398 = vrot.slane %v4396, 4
      %v4399 = vshll.u32 %v4332, 16
      %v4401 = vrot.slane %v4399, 5
      %v4402 = vor.u32 %v4398, %v4401
      %v4403 = vrot.slane %v4402, 4
      %v4405 = vshll.u32 %v4352, 16
      %v4407 = vrot.slane %v4405, 5
      %v4408 = vsel %vm2332, %v4403, %v4407
      %s4409 = scalar_lea.vmem %s5, 64
      %v4410 = vld [vmem:[%s4409] sm:$0xf]
      %v4411 = vld [vmem:[%s4409 + $0x4] sm:$0xf]
      %v4412 = vld [vmem:[%s4409 + $0x8] sm:$0xf]
      %v4413 = vld [vmem:[%s4409 + $0xc] sm:$0xf]
      %v4414 = vld [vmem:[%s4409 + $0x10] sm:$0xf]
      %v4415 = vld [vmem:[%s4409 + $0x14] sm:$0xf]
      %v4416 = vld [vmem:[%s4409 + $0x18] sm:$0xf]
      %v4417 = vld [vmem:[%s4409 + $0x1c] sm:$0xf]
      %v4418 = vld [vmem:[%s4409 + $0x20] sm:$0xf]
      %v4419 = vld [vmem:[%s4409 + $0x24] sm:$0xf]
      %v4420 = vld [vmem:[%s4409 + $0x28] sm:$0xf]
      %v4421 = vld [vmem:[%s4409 + $0x2c] sm:$0xf]
      %v4422 = vld [vmem:[%s4409 + $0x30] sm:$0xf]
      %v4423 = vld [vmem:[%s4409 + $0x34] sm:$0xf]
      %v4424 = vld [vmem:[%s4409 + $0x38] sm:$0xf]
      %v4425 = vld [vmem:[%s4409 + $0x3c] sm:$0xf]
      %v4426 = vunpack.c.l.b16 %v4366
      %v4427 = vunpack.c.l.b16 %v4380
      %v4428 = vunpack.c.l.b16 %v4394
      %v4429 = vunpack.c.l.b16 %v4408
      %v4430 = vpack.c.b16 %v4427, %v4426
      %v4431 = vpack.c.b16 %v4429, %v4428
      %v4450 = vunpack.c.l.b16 %v4410
      %v4451 = vunpack.c.l.b16 %v4411
      %v4452 = vunpack.c.l.b16 %v4412
      %v4453 = vunpack.c.l.b16 %v4413
      %v4454 = vunpack.c.l.b16 %v4414
      %v4455 = vunpack.c.l.b16 %v4415
      %v4456 = vunpack.c.l.b16 %v4416
      %v4457 = vunpack.c.l.b16 %v4417
      %v4458 = vunpack.c.l.b16 %v4418
      %v4459 = vunpack.c.l.b16 %v4419
      %v4460 = vunpack.c.l.b16 %v4420
      %v4461 = vunpack.c.l.b16 %v4421
      %v4462 = vunpack.c.l.b16 %v4422
      %v4463 = vunpack.c.l.b16 %v4423
      %v4464 = vunpack.c.l.b16 %v4424
      %v4465 = vunpack.c.l.b16 %v4425
      %v4466 = vpack.c.b16 %v4451, %v4450
      %v4467 = vpack.c.b16 %v4453, %v4452
      %v4468 = vpack.c.b16 %v4455, %v4454
      %v4469 = vpack.c.b16 %v4457, %v4456
      %v4470 = vpack.c.b16 %v4459, %v4458
      %v4471 = vpack.c.b16 %v4461, %v4460
      %v4472 = vpack.c.b16 %v4463, %v4462
      %v4473 = vpack.c.b16 %v4465, %v4464
      %4482 = vmatprep.subr.bf16.mxu0 0
      %4483 = vmatpush1.bf16.msra.mxu0 %v4466
      %4484 = vmatprep.subr.bf16.mxu0 0
      %4485 = vmatpush1.bf16.msra.mxu0 %v4467
      %4486 = vmatprep.subr.bf16.mxu0 0
      %4487 = vmatpush1.bf16.msra.mxu0 %v4468
      %4488 = vmatprep.subr.bf16.mxu0 0
      %4489 = vmatpush1.bf16.msra.mxu0 %v4469
      %4490 = vmatprep.subr.bf16.mxu0 0
      %4491 = vmatpush1.bf16.msra.mxu0 %v4470
      %4492 = vmatprep.subr.bf16.mxu0 0
      %4493 = vmatpush1.bf16.msra.mxu0 %v4471
      %4494 = vmatprep.subr.bf16.mxu0 0
      %4495 = vmatpush1.bf16.msra.mxu0 %v4472
      %4496 = vmatprep.subr.bf16.mxu0 0
      %4497 = vmatpush1.bf16.msra.mxu0 %v4473
      %4498 = vmatprep.subr.bf16.mxu0 0
      %4499 = vmatpush1.bf16.msra.mxu0 0
      %4500 = vmatprep.subr.bf16.mxu0 0
      %4501 = vmatpush1.bf16.msra.mxu0 0
      %4502 = vmatprep.subr.bf16.mxu0 0
      %4503 = vmatpush1.bf16.msra.mxu0 0
      %4504 = vmatprep.subr.bf16.mxu0 0
      %4505 = vmatpush1.bf16.msra.mxu0 0
      %4506 = vmatprep.subr.bf16.mxu0 0
      %4507 = vmatpush1.bf16.msra.mxu0 0
      %4508 = vmatprep.subr.bf16.mxu0 0
      %4509 = vmatpush1.bf16.msra.mxu0 0
      %4510 = vmatprep.subr.bf16.mxu0 0
      %4511 = vmatpush1.bf16.msra.mxu0 0
      %4512 = vmatprep.subr.bf16.mxu0 0
      %4513 = vmatpush1.bf16.msra.mxu0 0
      %4514 = vmatprep.mubr.bf16.mxu0 0
      %4515 = vmatmul.mubr.bf16.gmra.mrb[0].mxu0 %v4430
      %v4516 = vpop.f32.mrb[0].mxu0
      %v4517 = vadd.f32 0.0, %v4516
      %v4518 = vpop.f32.mrb[0].mxu0
      %v4519 = vpop.f32.mrb[0].mxu0
      %v4520 = vadd.f32 0.0, %v4519
      %v4521 = vpop.f32.mrb[0].mxu0
      %4522 = vmatprep.mubr.bf16.mxu0 0
      %4523 = vmatmul.mubr.bf16.gmra.mrb[0].mxu0 %v4431
      %v4524 = vpop.f32.mrb[0].mxu0
      %v4525 = vadd.f32 0.0, %v4524
      %v4526 = vpop.f32.mrb[0].mxu0
      %v4527 = vpop.f32.mrb[0].mxu0
      %v4528 = vadd.f32 0.0, %v4527
      %v4529 = vpop.f32.mrb[0].mxu0
      %4530 = vdwg.mxu0
      %v4535 = vunpack.c.l.b16 %v4329
      %v4536 = vunpack.c.l.b16 %v4330
      %v4537 = vunpack.c.l.b16 %v4331
      %v4538 = vunpack.c.l.b16 %v4332
      %v4539 = vpack.c.b16 %v4536, %v4535
      %v4540 = vpack.c.b16 %v4538, %v4537
      %v4559 = vunpack.c.l.b16 %v4333
      %v4560 = vunpack.c.l.b16 %v4334
      %v4561 = vunpack.c.l.b16 %v4335
      %v4562 = vunpack.c.l.b16 %v4336
      %v4563 = vunpack.c.l.b16 %v4337
      %v4564 = vunpack.c.l.b16 %v4338
      %v4565 = vunpack.c.l.b16 %v4339
      %v4566 = vunpack.c.l.b16 %v4340
      %v4567 = vunpack.c.l.b16 %v4341
      %v4568 = vunpack.c.l.b16 %v4342
      %v4569 = vunpack.c.l.b16 %v4343
      %v4570 = vunpack.c.l.b16 %v4344
      %v4571 = vunpack.c.l.b16 %v4345
      %v4572 = vunpack.c.l.b16 %v4346
      %v4573 = vunpack.c.l.b16 %v4347
      %v4574 = vunpack.c.l.b16 %v4348
      %v4575 = vpack.c.b16 %v4560, %v4559
      %v4576 = vpack.c.b16 %v4562, %v4561
      %v4577 = vpack.c.b16 %v4564, %v4563
      %v4578 = vpack.c.b16 %v4566, %v4565
      %v4579 = vpack.c.b16 %v4568, %v4567
      %v4580 = vpack.c.b16 %v4570, %v4569
      %v4581 = vpack.c.b16 %v4572, %v4571
      %v4582 = vpack.c.b16 %v4574, %v4573
      %4591 = vmatprep.subr.bf16.mxu0 0
      %4592 = vmatpush1.bf16.msra.mxu0 %v4575
      %4593 = vmatprep.subr.bf16.mxu0 0
      %4594 = vmatpush1.bf16.msra.mxu0 %v4576
      %4595 = vmatprep.subr.bf16.mxu0 0
      %4596 = vmatpush1.bf16.msra.mxu0 %v4577
      %4597 = vmatprep.subr.bf16.mxu0 0
      %4598 = vmatpush1.bf16.msra.mxu0 %v4578
      %4599 = vmatprep.subr.bf16.mxu0 0
      %4600 = vmatpush1.bf16.msra.mxu0 %v4579
      %4601 = vmatprep.subr.bf16.mxu0 0
      %4602 = vmatpush1.bf16.msra.mxu0 %v4580
      %4603 = vmatprep.subr.bf16.mxu0 0
      %4604 = vmatpush1.bf16.msra.mxu0 %v4581
      %4605 = vmatprep.subr.bf16.mxu0 0
      %4606 = vmatpush1.bf16.msra.mxu0 %v4582
      %4607 = vmatprep.subr.bf16.mxu0 0
      %4608 = vmatpush1.bf16.msra.mxu0 0
      %4609 = vmatprep.subr.bf16.mxu0 0
      %4610 = vmatpush1.bf16.msra.mxu0 0
      %4611 = vmatprep.subr.bf16.mxu0 0
      %4612 = vmatpush1.bf16.msra.mxu0 0
      %4613 = vmatprep.subr.bf16.mxu0 0
      %4614 = vmatpush1.bf16.msra.mxu0 0
      %4615 = vmatprep.subr.bf16.mxu0 0
      %4616 = vmatpush1.bf16.msra.mxu0 0
      %4617 = vmatprep.subr.bf16.mxu0 0
      %4618 = vmatpush1.bf16.msra.mxu0 0
      %4619 = vmatprep.subr.bf16.mxu0 0
      %4620 = vmatpush1.bf16.msra.mxu0 0
      %4621 = vmatprep.subr.bf16.mxu0 0
      %4622 = vmatpush1.bf16.msra.mxu0 0
      %4623 = vmatprep.mubr.bf16.mxu0 0
      %4624 = vmatmul.mubr.bf16.gmra.mrb[0].mxu0 %v4539
      %v4625 = vpop.f32.mrb[0].mxu0
      %v4626 = vadd.f32 %v4517, %v4625
      %v4627 = vpop.f32.mrb[0].mxu0
      %v4628 = vpop.f32.mrb[0].mxu0
      %v4629 = vadd.f32 %v4520, %v4628
      %v4630 = vpop.f32.mrb[0].mxu0
      %4631 = vmatprep.mubr.bf16.mxu0 0
      %4632 = vmatmul.mubr.bf16.gmra.mrb[0].mxu0 %v4540
      %v4633 = vpop.f32.mrb[0].mxu0
      %v4634 = vadd.f32 %v4525, %v4633
      %v4635 = vpop.f32.mrb[0].mxu0
      %v4636 = vpop.f32.mrb[0].mxu0
      %v4637 = vadd.f32 %v4528, %v4636
      %v4638 = vpop.f32.mrb[0].mxu0
      %4639 = vdwg.mxu0
      %v4640 = vld [vmem:[#allocation3] sm:$0xe]
      %v4641 = vld [vmem:[#allocation3 + $0x8] sm:$0xe]
      %v4642 = vld [vmem:[#allocation3 + $0x10] sm:$0xe]
      %v4643 = vld [vmem:[#allocation3 + $0x18] sm:$0xe]
      %v4652 = vrot.slane %v4640, 5
      %v4653 = vrot.slane %v4652, 4
      %v4654 = vrot.slane %v4349, 5
      %v4655 = vsel %vm2694, %v4653, %v4654
      %v4656 = vrot.slane %v4641, 5
      %v4657 = vrot.slane %v4656, 4
      %v4658 = vrot.slane %v4350, 5
      %v4659 = vsel %vm2694, %v4657, %v4658
      %v4660 = vrot.slane %v4642, 5
      %v4661 = vrot.slane %v4660, 4
      %v4662 = vrot.slane %v4351, 5
      %v4663 = vsel %vm2694, %v4661, %v4662
      %v4664 = vrot.slane %v4643, 5
      %v4665 = vrot.slane %v4664, 4
      %v4666 = vrot.slane %v4352, 5
      %v4667 = vsel %vm2694, %v4665, %v4666
      %s4668 = scalar_lea.vmem %s5, 128
      %v4669 = vld [vmem:[%s4668] sm:$0xf]
      %v4670 = vld [vmem:[%s4668 + $0x4] sm:$0xf]
      %v4671 = vld [vmem:[%s4668 + $0x8] sm:$0xf]
      %v4672 = vld [vmem:[%s4668 + $0xc] sm:$0xf]
      %v4673 = vld [vmem:[%s4668 + $0x10] sm:$0xf]
      %v4674 = vld [vmem:[%s4668 + $0x14] sm:$0xf]
      %v4675 = vld [vmem:[%s4668 + $0x18] sm:$0xf]
      %v4676 = vld [vmem:[%s4668 + $0x1c] sm:$0xf]
      %v4677 = vld [vmem:[%s4668 + $0x20] sm:$0xf]
      %v4678 = vld [vmem:[%s4668 + $0x24] sm:$0xf]
      %v4679 = vld [vmem:[%s4668 + $0x28] sm:$0xf]
      %v4680 = vld [vmem:[%s4668 + $0x2c] sm:$0xf]
      %v4681 = vld [vmem:[%s4668 + $0x30] sm:$0xf]
      %v4682 = vld [vmem:[%s4668 + $0x34] sm:$0xf]
      %v4683 = vld [vmem:[%s4668 + $0x38] sm:$0xf]
      %v4684 = vld [vmem:[%s4668 + $0x3c] sm:$0xf]
      %v4685 = vunpack.c.l.b16 %v4655
      %v4686 = vunpack.c.l.b16 %v4659
      %v4687 = vunpack.c.l.b16 %v4663
      %v4688 = vunpack.c.l.b16 %v4667
      %v4689 = vpack.c.b16 %v4686, %v4685
      %v4690 = vpack.c.b16 %v4688, %v4687
      %v4709 = vunpack.c.l.b16 %v4669
      %v4710 = vunpack.c.l.b16 %v4670
      %v4711 = vunpack.c.l.b16 %v4671
      %v4712 = vunpack.c.l.b16 %v4672
      %v4713 = vunpack.c.l.b16 %v4673
      %v4714 = vunpack.c.l.b16 %v4674
      %v4715 = vunpack.c.l.b16 %v4675
      %v4716 = vunpack.c.l.b16 %v4676
      %v4717 = vunpack.c.l.b16 %v4677
      %v4718 = vunpack.c.l.b16 %v4678
      %v4719 = vunpack.c.l.b16 %v4679
      %v4720 = vunpack.c.l.b16 %v4680
      %v4721 = vunpack.c.l.b16 %v4681
      %v4722 = vunpack.c.l.b16 %v4682
      %v4723 = vunpack.c.l.b16 %v4683
      %v4724 = vunpack.c.l.b16 %v4684
      %v4725 = vpack.c.b16 %v4710, %v4709
      %v4726 = vpack.c.b16 %v4712, %v4711
      %v4727 = vpack.c.b16 %v4714, %v4713
      %v4728 = vpack.c.b16 %v4716, %v4715
      %v4729 = vpack.c.b16 %v4718, %v4717
      %v4730 = vpack.c.b16 %v4720, %v4719
      %v4731 = vpack.c.b16 %v4722, %v4721
      %v4732 = vpack.c.b16 %v4724, %v4723
      %4741 = vmatprep.subr.bf16.mxu0 0
      %4742 = vmatpush1.bf16.msra.mxu0 %v4725
      %4743 = vmatprep.subr.bf16.mxu0 0
      %4744 = vmatpush1.bf16.msra.mxu0 %v4726
      %4745 = vmatprep.subr.bf16.mxu0 0
      %4746 = vmatpush1.bf16.msra.mxu0 %v4727
      %4747 = vmatprep.subr.bf16.mxu0 0
      %4748 = vmatpush1.bf16.msra.mxu0 %v4728
      %4749 = vmatprep.subr.bf16.mxu0 0
      %4750 = vmatpush1.bf16.msra.mxu0 %v4729
      %4751 = vmatprep.subr.bf16.mxu0 0
      %4752 = vmatpush1.bf16.msra.mxu0 %v4730
      %4753 = vmatprep.subr.bf16.mxu0 0
      %4754 = vmatpush1.bf16.msra.mxu0 %v4731
      %4755 = vmatprep.subr.bf16.mxu0 0
      %4756 = vmatpush1.bf16.msra.mxu0 %v4732
      %4757 = vmatprep.subr.bf16.mxu0 0
      %4758 = vmatpush1.bf16.msra.mxu0 0
      %4759 = vmatprep.subr.bf16.mxu0 0
      %4760 = vmatpush1.bf16.msra.mxu0 0
      %4761 = vmatprep.subr.bf16.mxu0 0
      %4762 = vmatpush1.bf16.msra.mxu0 0
      %4763 = vmatprep.subr.bf16.mxu0 0
      %4764 = vmatpush1.bf16.msra.mxu0 0
      %4765 = vmatprep.subr.bf16.mxu0 0
      %4766 = vmatpush1.bf16.msra.mxu0 0
      %4767 = vmatprep.subr.bf16.mxu0 0
      %4768 = vmatpush1.bf16.msra.mxu0 0
      %4769 = vmatprep.subr.bf16.mxu0 0
      %4770 = vmatpush1.bf16.msra.mxu0 0
      %4771 = vmatprep.subr.bf16.mxu0 0
      %4772 = vmatpush1.bf16.msra.mxu0 0
      %4773 = vmatprep.mubr.bf16.mxu0 0
      %4774 = vmatmul.mubr.bf16.gmra.mrb[0].mxu0 %v4689
      %v4775 = vpop.f32.mrb[0].mxu0
      %v4776 = vadd.f32 0.0, %v4775
      %v4777 = vpop.f32.mrb[0].mxu0
      %v4778 = vpop.f32.mrb[0].mxu0
      %v4779 = vadd.f32 0.0, %v4778
      %v4780 = vpop.f32.mrb[0].mxu0
      %4781 = vmatprep.mubr.bf16.mxu0 0
      %4782 = vmatmul.mubr.bf16.gmra.mrb[0].mxu0 %v4690
      %v4783 = vpop.f32.mrb[0].mxu0
      %v4784 = vadd.f32 0.0, %v4783
      %v4785 = vpop.f32.mrb[0].mxu0
      %v4786 = vpop.f32.mrb[0].mxu0
      %v4787 = vadd.f32 0.0, %v4786
      %v4788 = vpop.f32.mrb[0].mxu0
      %4789 = vdwg.mxu0
      %v4790 = vadd.f32 %v4626, %v4776
      %v4791 = vadd.f32 %v4629, %v4779
      %v4792 = vadd.f32 %v4634, %v4784
      %v4793 = vadd.f32 %v4637, %v4787
      %v4794 = vld [vmem:[%s4283] sm:$0xf]
      %v4795 = vld [vmem:[%s4283 + $0x8] sm:$0xf]
      %v4796 = vld [vmem:[%s4283 + $0x10] sm:$0xf]
      %v4797 = vld [vmem:[%s4283 + $0x18] sm:$0xf]
      %s4798 = scalar_lea.vmem %s5, 192
      %v4799 = vld [vmem:[%s4798] sm:$0xf]
      %v4800 = vld [vmem:[%s4798 + $0x4] sm:$0xf]
      %v4801 = vld [vmem:[%s4798 + $0x8] sm:$0xf]
      %v4802 = vld [vmem:[%s4798 + $0xc] sm:$0xf]
      %v4803 = vld [vmem:[%s4798 + $0x10] sm:$0xf]
      %v4804 = vld [vmem:[%s4798 + $0x14] sm:$0xf]
      %v4805 = vld [vmem:[%s4798 + $0x18] sm:$0xf]
      %v4806 = vld [vmem:[%s4798 + $0x1c] sm:$0xf]
      %v4807 = vld [vmem:[%s4798 + $0x20] sm:$0xf]
      %v4808 = vld [vmem:[%s4798 + $0x24] sm:$0xf]
      %v4809 = vld [vmem:[%s4798 + $0x28] sm:$0xf]
      %v4810 = vld [vmem:[%s4798 + $0x2c] sm:$0xf]
      %v4811 = vld [vmem:[%s4798 + $0x30] sm:$0xf]
      %v4812 = vld [vmem:[%s4798 + $0x34] sm:$0xf]
      %v4813 = vld [vmem:[%s4798 + $0x38] sm:$0xf]
      %v4814 = vld [vmem:[%s4798 + $0x3c] sm:$0xf]
      %v4819 = vunpack.c.l.b16 %v4794
      %v4820 = vunpack.c.l.b16 %v4795
      %v4821 = vunpack.c.l.b16 %v4796
      %v4822 = vunpack.c.l.b16 %v4797
      %v4823 = vpack.c.b16 %v4820, %v4819
      %v4824 = vpack.c.b16 %v4822, %v4821
      %v4843 = vunpack.c.l.b16 %v4799
      %v4844 = vunpack.c.l.b16 %v4800
      %v4845 = vunpack.c.l.b16 %v4801
      %v4846 = vunpack.c.l.b16 %v4802
      %v4847 = vunpack.c.l.b16 %v4803
      %v4848 = vunpack.c.l.b16 %v4804
      %v4849 = vunpack.c.l.b16 %v4805
      %v4850 = vunpack.c.l.b16 %v4806
      %v4851 = vunpack.c.l.b16 %v4807
      %v4852 = vunpack.c.l.b16 %v4808
      %v4853 = vunpack.c.l.b16 %v4809
      %v4854 = vunpack.c.l.b16 %v4810
      %v4855 = vunpack.c.l.b16 %v4811
      %v4856 = vunpack.c.l.b16 %v4812
      %v4857 = vunpack.c.l.b16 %v4813
      %v4858 = vunpack.c.l.b16 %v4814
      %v4859 = vpack.c.b16 %v4844, %v4843
      %v4860 = vpack.c.b16 %v4846, %v4845
      %v4861 = vpack.c.b16 %v4848, %v4847
      %v4862 = vpack.c.b16 %v4850, %v4849
      %v4863 = vpack.c.b16 %v4852, %v4851
      %v4864 = vpack.c.b16 %v4854, %v4853
      %v4865 = vpack.c.b16 %v4856, %v4855
      %v4866 = vpack.c.b16 %v4858, %v4857
      %4875 = vmatprep.subr.bf16.mxu0 0
      %4876 = vmatpush1.bf16.msra.mxu0 %v4859
      %4877 = vmatprep.subr.bf16.mxu0 0
      %4878 = vmatpush1.bf16.msra.mxu0 %v4860
      %4879 = vmatprep.subr.bf16.mxu0 0
      %4880 = vmatpush1.bf16.msra.mxu0 %v4861
      %4881 = vmatprep.subr.bf16.mxu0 0
      %4882 = vmatpush1.bf16.msra.mxu0 %v4862
      %4883 = vmatprep.subr.bf16.mxu0 0
      %4884 = vmatpush1.bf16.msra.mxu0 %v4863
      %4885 = vmatprep.subr.bf16.mxu0 0
      %4886 = vmatpush1.bf16.msra.mxu0 %v4864
      %4887 = vmatprep.subr.bf16.mxu0 0
      %4888 = vmatpush1.bf16.msra.mxu0 %v4865
      %4889 = vmatprep.subr.bf16.mxu0 0
      %4890 = vmatpush1.bf16.msra.mxu0 %v4866
      %4891 = vmatprep.subr.bf16.mxu0 0
      %4892 = vmatpush1.bf16.msra.mxu0 0
      %4893 = vmatprep.subr.bf16.mxu0 0
      %4894 = vmatpush1.bf16.msra.mxu0 0
      %4895 = vmatprep.subr.bf16.mxu0 0
      %4896 = vmatpush1.bf16.msra.mxu0 0
      %4897 = vmatprep.subr.bf16.mxu0 0
      %4898 = vmatpush1.bf16.msra.mxu0 0
      %4899 = vmatprep.subr.bf16.mxu0 0
      %4900 = vmatpush1.bf16.msra.mxu0 0
      %4901 = vmatprep.subr.bf16.mxu0 0
      %4902 = vmatpush1.bf16.msra.mxu0 0
      %4903 = vmatprep.subr.bf16.mxu0 0
      %4904 = vmatpush1.bf16.msra.mxu0 0
      %4905 = vmatprep.subr.bf16.mxu0 0
      %4906 = vmatpush1.bf16.msra.mxu0 0
      %4907 = vmatprep.mubr.bf16.mxu0 0
      %4908 = vmatmul.mubr.bf16.gmra.mrb[0].mxu0 %v4823
      %v4909 = vpop.f32.mrb[0].mxu0
      %v4910 = vadd.f32 0.0, %v4909
      %v4911 = vpop.f32.mrb[0].mxu0
      %v4912 = vpop.f32.mrb[0].mxu0
      %v4913 = vadd.f32 0.0, %v4912
      %v4914 = vpop.f32.mrb[0].mxu0
      %4915 = vmatprep.mubr.bf16.mxu0 0
      %4916 = vmatmul.mubr.bf16.gmra.mrb[0].mxu0 %v4824
      %v4917 = vpop.f32.mrb[0].mxu0
      %v4918 = vadd.f32 0.0, %v4917
      %v4919 = vpop.f32.mrb[0].mxu0
      %v4920 = vpop.f32.mrb[0].mxu0
      %v4921 = vadd.f32 0.0, %v4920
      %v4922 = vpop.f32.mrb[0].mxu0
      %4923 = vdwg.mxu0
      %v4924 = vadd.f32 %v4790, %v4910
      %v4925 = vadd.f32 %v4791, %v4913
      %v4926 = vadd.f32 %v4792, %v4918
      %v4927 = vadd.f32 %v4793, %v4921
      %v4928 = vld [vmem:[%s4283] sm:$0xf]
      %v4929 = vld [vmem:[%s4283 + $0x4] sm:$0x1]
      %v4930 = vld [vmem:[%s4283 + $0x8] sm:$0xf]
      %v4931 = vld [vmem:[%s4283 + $0xc] sm:$0x1]
      %v4932 = vld [vmem:[%s4283 + $0x10] sm:$0xf]
      %v4933 = vld [vmem:[%s4283 + $0x14] sm:$0x1]
      %v4934 = vld [vmem:[%s4283 + $0x18] sm:$0xf]
      %v4935 = vld [vmem:[%s4283 + $0x1c] sm:$0x1]
      %v4937 = vshrl.u32 %v4928, 16
      %v4939 = vrot.slane %v4937, 4
      %v4940 = vshll.u32 %v4928, 16
      %v4942 = vrot.slane %v4940, 5
      %v4943 = vor.u32 %v4939, %v4942
      %v4944 = vrot.slane %v4943, 4
      %v4946 = vshll.u32 %v4929, 16
      %v4948 = vrot.slane %v4946, 5
      %v4949 = vsel %vm2332, %v4944, %v4948
      %v4951 = vshrl.u32 %v4930, 16
      %v4953 = vrot.slane %v4951, 4
      %v4954 = vshll.u32 %v4930, 16
      %v4956 = vrot.slane %v4954, 5
      %v4957 = vor.u32 %v4953, %v4956
      %v4958 = vrot.slane %v4957, 4
      %v4960 = vshll.u32 %v4931, 16
      %v4962 = vrot.slane %v4960, 5
      %v4963 = vsel %vm2332, %v4958, %v4962
      %v4965 = vshrl.u32 %v4932, 16
      %v4967 = vrot.slane %v4965, 4
      %v4968 = vshll.u32 %v4932, 16
      %v4970 = vrot.slane %v4968, 5
      %v4971 = vor.u32 %v4967, %v4970
      %v4972 = vrot.slane %v4971, 4
      %v4974 = vshll.u32 %v4933, 16
      %v4976 = vrot.slane %v4974, 5
      %v4977 = vsel %vm2332, %v4972, %v4976
      %v4979 = vshrl.u32 %v4934, 16
      %v4981 = vrot.slane %v4979, 4
      %v4982 = vshll.u32 %v4934, 16
      %v4984 = vrot.slane %v4982, 5
      %v4985 = vor.u32 %v4981, %v4984
      %v4986 = vrot.slane %v4985, 4
      %v4988 = vshll.u32 %v4935, 16
      %v4990 = vrot.slane %v4988, 5
      %v4991 = vsel %vm2332, %v4986, %v4990
      %s4992 = scalar_lea.vmem %s5, 256
      %v4993 = vld [vmem:[%s4992] sm:$0xf]
      %v4994 = vld [vmem:[%s4992 + $0x4] sm:$0xf]
      %v4995 = vld [vmem:[%s4992 + $0x8] sm:$0xf]
      %v4996 = vld [vmem:[%s4992 + $0xc] sm:$0xf]
      %v4997 = vld [vmem:[%s4992 + $0x10] sm:$0xf]
      %v4998 = vld [vmem:[%s4992 + $0x14] sm:$0xf]
      %v4999 = vld [vmem:[%s4992 + $0x18] sm:$0xf]
      %v5000 = vld [vmem:[%s4992 + $0x1c] sm:$0xf]
      %v5001 = vld [vmem:[%s4992 + $0x20] sm:$0xf]
      %v5002 = vld [vmem:[%s4992 + $0x24] sm:$0xf]
      %v5003 = vld [vmem:[%s4992 + $0x28] sm:$0xf]
      %v5004 = vld [vmem:[%s4992 + $0x2c] sm:$0xf]
      %v5005 = vld [vmem:[%s4992 + $0x30] sm:$0xf]
      %v5006 = vld [vmem:[%s4992 + $0x34] sm:$0xf]
      %v5007 = vld [vmem:[%s4992 + $0x38] sm:$0xf]
      %v5008 = vld [vmem:[%s4992 + $0x3c] sm:$0xf]
      %v5009 = vunpack.c.l.b16 %v4949
      %v5010 = vunpack.c.l.b16 %v4963
      %v5011 = vunpack.c.l.b16 %v4977
      %v5012 = vunpack.c.l.b16 %v4991
      %v5013 = vpack.c.b16 %v5010, %v5009
      %v5014 = vpack.c.b16 %v5012, %v5011
      %v5033 = vunpack.c.l.b16 %v4993
      %v5034 = vunpack.c.l.b16 %v4994
      %v5035 = vunpack.c.l.b16 %v4995
      %v5036 = vunpack.c.l.b16 %v4996
      %v5037 = vunpack.c.l.b16 %v4997
      %v5038 = vunpack.c.l.b16 %v4998
      %v5039 = vunpack.c.l.b16 %v4999
      %v5040 = vunpack.c.l.b16 %v5000
      %v5041 = vunpack.c.l.b16 %v5001
      %v5042 = vunpack.c.l.b16 %v5002
      %v5043 = vunpack.c.l.b16 %v5003
      %v5044 = vunpack.c.l.b16 %v5004
      %v5045 = vunpack.c.l.b16 %v5005
      %v5046 = vunpack.c.l.b16 %v5006
      %v5047 = vunpack.c.l.b16 %v5007
      %v5048 = vunpack.c.l.b16 %v5008
      %v5049 = vpack.c.b16 %v5034, %v5033
      %v5050 = vpack.c.b16 %v5036, %v5035
      %v5051 = vpack.c.b16 %v5038, %v5037
      %v5052 = vpack.c.b16 %v5040, %v5039
      %v5053 = vpack.c.b16 %v5042, %v5041
      %v5054 = vpack.c.b16 %v5044, %v5043
      %v5055 = vpack.c.b16 %v5046, %v5045
      %v5056 = vpack.c.b16 %v5048, %v5047
      %5065 = vmatprep.subr.bf16.mxu0 0
      %5066 = vmatpush1.bf16.msra.mxu0 %v5049
      %5067 = vmatprep.subr.bf16.mxu0 0
      %5068 = vmatpush1.bf16.msra.mxu0 %v5050
      %5069 = vmatprep.subr.bf16.mxu0 0
      %5070 = vmatpush1.bf16.msra.mxu0 %v5051
      %5071 = vmatprep.subr.bf16.mxu0 0
      %5072 = vmatpush1.bf16.msra.mxu0 %v5052
      %5073 = vmatprep.subr.bf16.mxu0 0
      %5074 = vmatpush1.bf16.msra.mxu0 %v5053
      %5075 = vmatprep.subr.bf16.mxu0 0
      %5076 = vmatpush1.bf16.msra.mxu0 %v5054
      %5077 = vmatprep.subr.bf16.mxu0 0
      %5078 = vmatpush1.bf16.msra.mxu0 %v5055
      %5079 = vmatprep.subr.bf16.mxu0 0
      %5080 = vmatpush1.bf16.msra.mxu0 %v5056
      %5081 = vmatprep.subr.bf16.mxu0 0
      %5082 = vmatpush1.bf16.msra.mxu0 0
      %5083 = vmatprep.subr.bf16.mxu0 0
      %5084 = vmatpush1.bf16.msra.mxu0 0
      %5085 = vmatprep.subr.bf16.mxu0 0
      %5086 = vmatpush1.bf16.msra.mxu0 0
      %5087 = vmatprep.subr.bf16.mxu0 0
      %5088 = vmatpush1.bf16.msra.mxu0 0
      %5089 = vmatprep.subr.bf16.mxu0 0
      %5090 = vmatpush1.bf16.msra.mxu0 0
      %5091 = vmatprep.subr.bf16.mxu0 0
      %5092 = vmatpush1.bf16.msra.mxu0 0
      %5093 = vmatprep.subr.bf16.mxu0 0
      %5094 = vmatpush1.bf16.msra.mxu0 0
      %5095 = vmatprep.subr.bf16.mxu0 0
      %5096 = vmatpush1.bf16.msra.mxu0 0
      %5097 = vmatprep.mubr.bf16.mxu0 0
      %5098 = vmatmul.mubr.bf16.gmra.mrb[0].mxu0 %v5013
      %v5099 = vpop.f32.mrb[0].mxu0
      %v5100 = vadd.f32 0.0, %v5099
      %v5101 = vpop.f32.mrb[0].mxu0
      %v5102 = vpop.f32.mrb[0].mxu0
      %v5103 = vadd.f32 0.0, %v5102
      %v5104 = vpop.f32.mrb[0].mxu0
      %5105 = vmatprep.mubr.bf16.mxu0 0
      %5106 = vmatmul.mubr.bf16.gmra.mrb[0].mxu0 %v5014
      %v5107 = vpop.f32.mrb[0].mxu0
      %v5108 = vadd.f32 0.0, %v5107
      %v5109 = vpop.f32.mrb[0].mxu0
      %v5110 = vpop.f32.mrb[0].mxu0
      %v5111 = vadd.f32 0.0, %v5110
      %v5112 = vpop.f32.mrb[0].mxu0
      %5113 = vdwg.mxu0
      %v5114 = vadd.f32 %v4924, %v5100
      %v5115 = vadd.f32 %v4925, %v5103
      %v5116 = vadd.f32 %v4926, %v5108
      %v5117 = vadd.f32 %v4927, %v5111
      %v5118 = vld [vmem:[%s4283] sm:$0xe]
      %v5119 = vld [vmem:[%s4283 + $0x8] sm:$0xe]
      %v5120 = vld [vmem:[%s4283 + $0x10] sm:$0xe]
      %v5121 = vld [vmem:[%s4283 + $0x18] sm:$0xe]
      %v5130 = vrot.slane %v5118, 5
      %v5131 = vrot.slane %v5130, 4
      %v5132 = vrot.slane %v4929, 5
      %v5133 = vsel %vm2694, %v5131, %v5132
      %v5134 = vrot.slane %v5119, 5
      %v5135 = vrot.slane %v5134, 4
      %v5136 = vrot.slane %v4931, 5
      %v5137 = vsel %vm2694, %v5135, %v5136
      %v5138 = vrot.slane %v5120, 5
      %v5139 = vrot.slane %v5138, 4
      %v5140 = vrot.slane %v4933, 5
      %v5141 = vsel %vm2694, %v5139, %v5140
      %v5142 = vrot.slane %v5121, 5
      %v5143 = vrot.slane %v5142, 4
      %v5144 = vrot.slane %v4935, 5
      %v5145 = vsel %vm2694, %v5143, %v5144
      %s5146 = scalar_lea.vmem %s5, 320
      %v5147 = vld [vmem:[%s5146] sm:$0xf]
      %v5148 = vld [vmem:[%s5146 + $0x4] sm:$0xf]
      %v5149 = vld [vmem:[%s5146 + $0x8] sm:$0xf]
      %v5150 = vld [vmem:[%s5146 + $0xc] sm:$0xf]
      %v5151 = vld [vmem:[%s5146 + $0x10] sm:$0xf]
      %v5152 = vld [vmem:[%s5146 + $0x14] sm:$0xf]
      %v5153 = vld [vmem:[%s5146 + $0x18] sm:$0xf]
      %v5154 = vld [vmem:[%s5146 + $0x1c] sm:$0xf]
      %v5155 = vld [vmem:[%s5146 + $0x20] sm:$0xf]
      %v5156 = vld [vmem:[%s5146 + $0x24] sm:$0xf]
      %v5157 = vld [vmem:[%s5146 + $0x28] sm:$0xf]
      %v5158 = vld [vmem:[%s5146 + $0x2c] sm:$0xf]
      %v5159 = vld [vmem:[%s5146 + $0x30] sm:$0xf]
      %v5160 = vld [vmem:[%s5146 + $0x34] sm:$0xf]
      %v5161 = vld [vmem:[%s5146 + $0x38] sm:$0xf]
      %v5162 = vld [vmem:[%s5146 + $0x3c] sm:$0xf]
      %v5163 = vunpack.c.l.b16 %v5133
      %v5164 = vunpack.c.l.b16 %v5137
      %v5165 = vunpack.c.l.b16 %v5141
      %v5166 = vunpack.c.l.b16 %v5145
      %v5167 = vpack.c.b16 %v5164, %v5163
      %v5168 = vpack.c.b16 %v5166, %v5165
      %v5187 = vunpack.c.l.b16 %v5147
      %v5188 = vunpack.c.l.b16 %v5148
      %v5189 = vunpack.c.l.b16 %v5149
      %v5190 = vunpack.c.l.b16 %v5150
      %v5191 = vunpack.c.l.b16 %v5151
      %v5192 = vunpack.c.l.b16 %v5152
      %v5193 = vunpack.c.l.b16 %v5153
      %v5194 = vunpack.c.l.b16 %v5154
      %v5195 = vunpack.c.l.b16 %v5155
      %v5196 = vunpack.c.l.b16 %v5156
      %v5197 = vunpack.c.l.b16 %v5157
      %v5198 = vunpack.c.l.b16 %v5158
      %v5199 = vunpack.c.l.b16 %v5159
      %v5200 = vunpack.c.l.b16 %v5160
      %v5201 = vunpack.c.l.b16 %v5161
      %v5202 = vunpack.c.l.b16 %v5162
      %v5203 = vpack.c.b16 %v5188, %v5187
      %v5204 = vpack.c.b16 %v5190, %v5189
      %v5205 = vpack.c.b16 %v5192, %v5191
      %v5206 = vpack.c.b16 %v5194, %v5193
      %v5207 = vpack.c.b16 %v5196, %v5195
      %v5208 = vpack.c.b16 %v5198, %v5197
      %v5209 = vpack.c.b16 %v5200, %v5199
      %v5210 = vpack.c.b16 %v5202, %v5201
      %5219 = vmatprep.subr.bf16.mxu0 0
      %5220 = vmatpush1.bf16.msra.mxu0 %v5203
      %5221 = vmatprep.subr.bf16.mxu0 0
      %5222 = vmatpush1.bf16.msra.mxu0 %v5204
      %5223 = vmatprep.subr.bf16.mxu0 0
      %5224 = vmatpush1.bf16.msra.mxu0 %v5205
      %5225 = vmatprep.subr.bf16.mxu0 0
      %5226 = vmatpush1.bf16.msra.mxu0 %v5206
      %5227 = vmatprep.subr.bf16.mxu0 0
      %5228 = vmatpush1.bf16.msra.mxu0 %v5207
      %5229 = vmatprep.subr.bf16.mxu0 0
      %5230 = vmatpush1.bf16.msra.mxu0 %v5208
      %5231 = vmatprep.subr.bf16.mxu0 0
      %5232 = vmatpush1.bf16.msra.mxu0 %v5209
      %5233 = vmatprep.subr.bf16.mxu0 0
      %5234 = vmatpush1.bf16.msra.mxu0 %v5210
      %5235 = vmatprep.subr.bf16.mxu0 0
      %5236 = vmatpush1.bf16.msra.mxu0 0
      %5237 = vmatprep.subr.bf16.mxu0 0
      %5238 = vmatpush1.bf16.msra.mxu0 0
      %5239 = vmatprep.subr.bf16.mxu0 0
      %5240 = vmatpush1.bf16.msra.mxu0 0
      %5241 = vmatprep.subr.bf16.mxu0 0
      %5242 = vmatpush1.bf16.msra.mxu0 0
      %5243 = vmatprep.subr.bf16.mxu0 0
      %5244 = vmatpush1.bf16.msra.mxu0 0
      %5245 = vmatprep.subr.bf16.mxu0 0
      %5246 = vmatpush1.bf16.msra.mxu0 0
      %5247 = vmatprep.subr.bf16.mxu0 0
      %5248 = vmatpush1.bf16.msra.mxu0 0
      %5249 = vmatprep.subr.bf16.mxu0 0
      %5250 = vmatpush1.bf16.msra.mxu0 0
      %5251 = vmatprep.mubr.bf16.mxu0 0
      %5252 = vmatmul.mubr.bf16.gmra.mrb[0].mxu0 %v5167
      %v5253 = vpop.f32.mrb[0].mxu0
      %v5254 = vadd.f32 0.0, %v5253
      %v5255 = vpop.f32.mrb[0].mxu0
      %v5256 = vpop.f32.mrb[0].mxu0
      %v5257 = vadd.f32 0.0, %v5256
      %v5258 = vpop.f32.mrb[0].mxu0
      %5259 = vmatprep.mubr.bf16.mxu0 0
      %5260 = vmatmul.mubr.bf16.gmra.mrb[0].mxu0 %v5168
      %v5261 = vpop.f32.mrb[0].mxu0
      %v5262 = vadd.f32 0.0, %v5261
      %v5263 = vpop.f32.mrb[0].mxu0
      %v5264 = vpop.f32.mrb[0].mxu0
      %v5265 = vadd.f32 0.0, %v5264
      %v5266 = vpop.f32.mrb[0].mxu0
      %5267 = vdwg.mxu0
      %v5268 = vadd.f32 %v5114, %v5254
      %v5269 = vadd.f32 %v5115, %v5257
      %v5270 = vadd.f32 %v5116, %v5262
      %v5271 = vadd.f32 %v5117, %v5265
      %s5272 = scalar_lea.vmem [#allocation3], 16
      %v5273 = vld [vmem:[%s5272] sm:$0xf]
      %v5274 = vld [vmem:[%s5272 + $0x8] sm:$0xf]
      %v5275 = vld [vmem:[%s5272 + $0x10] sm:$0xf]
      %v5276 = vld [vmem:[%s5272 + $0x18] sm:$0xf]
      %s5277 = scalar_lea.vmem %s5, 384
      %v5278 = vld [vmem:[%s5277] sm:$0xf]
      %v5279 = vld [vmem:[%s5277 + $0x4] sm:$0xf]
      %v5280 = vld [vmem:[%s5277 + $0x8] sm:$0xf]
      %v5281 = vld [vmem:[%s5277 + $0xc] sm:$0xf]
      %v5282 = vld [vmem:[%s5277 + $0x10] sm:$0xf]
      %v5283 = vld [vmem:[%s5277 + $0x14] sm:$0xf]
      %v5284 = vld [vmem:[%s5277 + $0x18] sm:$0xf]
      %v5285 = vld [vmem:[%s5277 + $0x1c] sm:$0xf]
      %v5286 = vld [vmem:[%s5277 + $0x20] sm:$0xf]
      %v5287 = vld [vmem:[%s5277 + $0x24] sm:$0xf]
      %v5288 = vld [vmem:[%s5277 + $0x28] sm:$0xf]
      %v5289 = vld [vmem:[%s5277 + $0x2c] sm:$0xf]
      %v5290 = vld [vmem:[%s5277 + $0x30] sm:$0xf]
      %v5291 = vld [vmem:[%s5277 + $0x34] sm:$0xf]
      %v5292 = vld [vmem:[%s5277 + $0x38] sm:$0xf]
      %v5293 = vld [vmem:[%s5277 + $0x3c] sm:$0xf]
      %v5298 = vunpack.c.l.b16 %v5273
      %v5299 = vunpack.c.l.b16 %v5274
      %v5300 = vunpack.c.l.b16 %v5275
      %v5301 = vunpack.c.l.b16 %v5276
      %v5302 = vpack.c.b16 %v5299, %v5298
      %v5303 = vpack.c.b16 %v5301, %v5300
      %v5322 = vunpack.c.l.b16 %v5278
      %v5323 = vunpack.c.l.b16 %v5279
      %v5324 = vunpack.c.l.b16 %v5280
      %v5325 = vunpack.c.l.b16 %v5281
      %v5326 = vunpack.c.l.b16 %v5282
      %v5327 = vunpack.c.l.b16 %v5283
      %v5328 = vunpack.c.l.b16 %v5284
      %v5329 = vunpack.c.l.b16 %v5285
      %v5330 = vunpack.c.l.b16 %v5286
      %v5331 = vunpack.c.l.b16 %v5287
      %v5332 = vunpack.c.l.b16 %v5288
      %v5333 = vunpack.c.l.b16 %v5289
      %v5334 = vunpack.c.l.b16 %v5290
      %v5335 = vunpack.c.l.b16 %v5291
      %v5336 = vunpack.c.l.b16 %v5292
      %v5337 = vunpack.c.l.b16 %v5293
      %v5338 = vpack.c.b16 %v5323, %v5322
      %v5339 = vpack.c.b16 %v5325, %v5324
      %v5340 = vpack.c.b16 %v5327, %v5326
      %v5341 = vpack.c.b16 %v5329, %v5328
      %v5342 = vpack.c.b16 %v5331, %v5330
      %v5343 = vpack.c.b16 %v5333, %v5332
      %v5344 = vpack.c.b16 %v5335, %v5334
      %v5345 = vpack.c.b16 %v5337, %v5336
      %5354 = vmatprep.subr.bf16.mxu0 0
      %5355 = vmatpush1.bf16.msra.mxu0 %v5338
      %5356 = vmatprep.subr.bf16.mxu0 0
      %5357 = vmatpush1.bf16.msra.mxu0 %v5339
      %5358 = vmatprep.subr.bf16.mxu0 0
      %5359 = vmatpush1.bf16.msra.mxu0 %v5340
      %5360 = vmatprep.subr.bf16.mxu0 0
      %5361 = vmatpush1.bf16.msra.mxu0 %v5341
      %5362 = vmatprep.subr.bf16.mxu0 0
      %5363 = vmatpush1.bf16.msra.mxu0 %v5342
      %5364 = vmatprep.subr.bf16.mxu0 0
      %5365 = vmatpush1.bf16.msra.mxu0 %v5343
      %5366 = vmatprep.subr.bf16.mxu0 0
      %5367 = vmatpush1.bf16.msra.mxu0 %v5344
      %5368 = vmatprep.subr.bf16.mxu0 0
      %5369 = vmatpush1.bf16.msra.mxu0 %v5345
      %5370 = vmatprep.subr.bf16.mxu0 0
      %5371 = vmatpush1.bf16.msra.mxu0 0
      %5372 = vmatprep.subr.bf16.mxu0 0
      %5373 = vmatpush1.bf16.msra.mxu0 0
      %5374 = vmatprep.subr.bf16.mxu0 0
      %5375 = vmatpush1.bf16.msra.mxu0 0
      %5376 = vmatprep.subr.bf16.mxu0 0
      %5377 = vmatpush1.bf16.msra.mxu0 0
      %5378 = vmatprep.subr.bf16.mxu0 0
      %5379 = vmatpush1.bf16.msra.mxu0 0
      %5380 = vmatprep.subr.bf16.mxu0 0
      %5381 = vmatpush1.bf16.msra.mxu0 0
      %5382 = vmatprep.subr.bf16.mxu0 0
      %5383 = vmatpush1.bf16.msra.mxu0 0
      %5384 = vmatprep.subr.bf16.mxu0 0
      %5385 = vmatpush1.bf16.msra.mxu0 0
      %5386 = vmatprep.mubr.bf16.mxu0 0
      %5387 = vmatmul.mubr.bf16.gmra.mrb[0].mxu0 %v5302
      %v5388 = vpop.f32.mrb[0].mxu0
      %v5389 = vadd.f32 0.0, %v5388
      %v5390 = vpop.f32.mrb[0].mxu0
      %v5391 = vpop.f32.mrb[0].mxu0
      %v5392 = vadd.f32 0.0, %v5391
      %v5393 = vpop.f32.mrb[0].mxu0
      %5394 = vmatprep.mubr.bf16.mxu0 0
      %5395 = vmatmul.mubr.bf16.gmra.mrb[0].mxu0 %v5303
      %v5396 = vpop.f32.mrb[0].mxu0
      %v5397 = vadd.f32 0.0, %v5396
      %v5398 = vpop.f32.mrb[0].mxu0
      %v5399 = vpop.f32.mrb[0].mxu0
      %v5400 = vadd.f32 0.0, %v5399
      %v5401 = vpop.f32.mrb[0].mxu0
      %5402 = vdwg.mxu0
      %v5403 = vadd.f32 %v5268, %v5389
      %v5404 = vadd.f32 %v5269, %v5392
      %v5405 = vadd.f32 %v5270, %v5397
      %v5406 = vadd.f32 %v5271, %v5400
      %v5407 = vld [vmem:[%s5272] sm:$0xf]
      %v5408 = vld [vmem:[%s5272 + $0x4] sm:$0x1]
      %v5409 = vld [vmem:[%s5272 + $0x8] sm:$0xf]
      %v5410 = vld [vmem:[%s5272 + $0xc] sm:$0x1]
      %v5411 = vld [vmem:[%s5272 + $0x10] sm:$0xf]
      %v5412 = vld [vmem:[%s5272 + $0x14] sm:$0x1]
      %v5413 = vld [vmem:[%s5272 + $0x18] sm:$0xf]
      %v5414 = vld [vmem:[%s5272 + $0x1c] sm:$0x1]
      %v5416 = vshrl.u32 %v5407, 16
      %v5418 = vrot.slane %v5416, 4
      %v5419 = vshll.u32 %v5407, 16
      %v5421 = vrot.slane %v5419, 5
      %v5422 = vor.u32 %v5418, %v5421
      %v5423 = vrot.slane %v5422, 4
      %v5425 = vshll.u32 %v5408, 16
      %v5427 = vrot.slane %v5425, 5
      %v5428 = vsel %vm2332, %v5423, %v5427
      %v5430 = vshrl.u32 %v5409, 16
      %v5432 = vrot.slane %v5430, 4
      %v5433 = vshll.u32 %v5409, 16
      %v5435 = vrot.slane %v5433, 5
      %v5436 = vor.u32 %v5432, %v5435
      %v5437 = vrot.slane %v5436, 4
      %v5439 = vshll.u32 %v5410, 16
      %v5441 = vrot.slane %v5439, 5
      %v5442 = vsel %vm2332, %v5437, %v5441
      %v5444 = vshrl.u32 %v5411, 16
      %v5446 = vrot.slane %v5444, 4
      %v5447 = vshll.u32 %v5411, 16
      %v5449 = vrot.slane %v5447, 5
      %v5450 = vor.u32 %v5446, %v5449
      %v5451 = vrot.slane %v5450, 4
      %v5453 = vshll.u32 %v5412, 16
      %v5455 = vrot.slane %v5453, 5
      %v5456 = vsel %vm2332, %v5451, %v5455
      %v5458 = vshrl.u32 %v5413, 16
      %v5460 = vrot.slane %v5458, 4
      %v5461 = vshll.u32 %v5413, 16
      %v5463 = vrot.slane %v5461, 5
      %v5464 = vor.u32 %v5460, %v5463
      %v5465 = vrot.slane %v5464, 4
      %v5467 = vshll.u32 %v5414, 16
      %v5469 = vrot.slane %v5467, 5
      %v5470 = vsel %vm2332, %v5465, %v5469
      %s5471 = scalar_lea.vmem %s5, 448
      %v5472 = vld [vmem:[%s5471] sm:$0xf]
      %v5473 = vld [vmem:[%s5471 + $0x4] sm:$0xf]
      %v5474 = vld [vmem:[%s5471 + $0x8] sm:$0xf]
      %v5475 = vld [vmem:[%s5471 + $0xc] sm:$0xf]
      %v5476 = vld [vmem:[%s5471 + $0x10] sm:$0xf]
      %v5477 = vld [vmem:[%s5471 + $0x14] sm:$0xf]
      %v5478 = vld [vmem:[%s5471 + $0x18] sm:$0xf]
      %v5479 = vld [vmem:[%s5471 + $0x1c] sm:$0xf]
      %v5480 = vld [vmem:[%s5471 + $0x20] sm:$0xf]
      %v5481 = vld [vmem:[%s5471 + $0x24] sm:$0xf]
      %v5482 = vld [vmem:[%s5471 + $0x28] sm:$0xf]
      %v5483 = vld [vmem:[%s5471 + $0x2c] sm:$0xf]
      %v5484 = vld [vmem:[%s5471 + $0x30] sm:$0xf]
      %v5485 = vld [vmem:[%s5471 + $0x34] sm:$0xf]
      %v5486 = vld [vmem:[%s5471 + $0x38] sm:$0xf]
      %v5487 = vld [vmem:[%s5471 + $0x3c] sm:$0xf]
      %v5488 = vunpack.c.l.b16 %v5428
      %v5489 = vunpack.c.l.b16 %v5442
      %v5490 = vunpack.c.l.b16 %v5456
      %v5491 = vunpack.c.l.b16 %v5470
      %v5492 = vpack.c.b16 %v5489, %v5488
      %v5493 = vpack.c.b16 %v5491, %v5490
      %v5512 = vunpack.c.l.b16 %v5472
      %v5513 = vunpack.c.l.b16 %v5473
      %v5514 = vunpack.c.l.b16 %v5474
      %v5515 = vunpack.c.l.b16 %v5475
      %v5516 = vunpack.c.l.b16 %v5476
      %v5517 = vunpack.c.l.b16 %v5477
      %v5518 = vunpack.c.l.b16 %v5478
      %v5519 = vunpack.c.l.b16 %v5479
      %v5520 = vunpack.c.l.b16 %v5480
      %v5521 = vunpack.c.l.b16 %v5481
      %v5522 = vunpack.c.l.b16 %v5482
      %v5523 = vunpack.c.l.b16 %v5483
      %v5524 = vunpack.c.l.b16 %v5484
      %v5525 = vunpack.c.l.b16 %v5485
      %v5526 = vunpack.c.l.b16 %v5486
      %v5527 = vunpack.c.l.b16 %v5487
      %v5528 = vpack.c.b16 %v5513, %v5512
      %v5529 = vpack.c.b16 %v5515, %v5514
      %v5530 = vpack.c.b16 %v5517, %v5516
      %v5531 = vpack.c.b16 %v5519, %v5518
      %v5532 = vpack.c.b16 %v5521, %v5520
      %v5533 = vpack.c.b16 %v5523, %v5522
      %v5534 = vpack.c.b16 %v5525, %v5524
      %v5535 = vpack.c.b16 %v5527, %v5526
      %5544 = vmatprep.subr.bf16.mxu0 0
      %5545 = vmatpush1.bf16.msra.mxu0 %v5528
      %5546 = vmatprep.subr.bf16.mxu0 0
      %5547 = vmatpush1.bf16.msra.mxu0 %v5529
      %5548 = vmatprep.subr.bf16.mxu0 0
      %5549 = vmatpush1.bf16.msra.mxu0 %v5530
      %5550 = vmatprep.subr.bf16.mxu0 0
      %5551 = vmatpush1.bf16.msra.mxu0 %v5531
      %5552 = vmatprep.subr.bf16.mxu0 0
      %5553 = vmatpush1.bf16.msra.mxu0 %v5532
      %5554 = vmatprep.subr.bf16.mxu0 0
      %5555 = vmatpush1.bf16.msra.mxu0 %v5533
      %5556 = vmatprep.subr.bf16.mxu0 0
      %5557 = vmatpush1.bf16.msra.mxu0 %v5534
      %5558 = vmatprep.subr.bf16.mxu0 0
      %5559 = vmatpush1.bf16.msra.mxu0 %v5535
      %5560 = vmatprep.subr.bf16.mxu0 0
      %5561 = vmatpush1.bf16.msra.mxu0 0
      %5562 = vmatprep.subr.bf16.mxu0 0
      %5563 = vmatpush1.bf16.msra.mxu0 0
      %5564 = vmatprep.subr.bf16.mxu0 0
      %5565 = vmatpush1.bf16.msra.mxu0 0
      %5566 = vmatprep.subr.bf16.mxu0 0
      %5567 = vmatpush1.bf16.msra.mxu0 0
      %5568 = vmatprep.subr.bf16.mxu0 0
      %5569 = vmatpush1.bf16.msra.mxu0 0
      %5570 = vmatprep.subr.bf16.mxu0 0
      %5571 = vmatpush1.bf16.msra.mxu0 0
      %5572 = vmatprep.subr.bf16.mxu0 0
      %5573 = vmatpush1.bf16.msra.mxu0 0
      %5574 = vmatprep.subr.bf16.mxu0 0
      %5575 = vmatpush1.bf16.msra.mxu0 0
      %5576 = vmatprep.mubr.bf16.mxu0 0
      %5577 = vmatmul.mubr.bf16.gmra.mrb[0].mxu0 %v5492
      %v5578 = vpop.f32.mrb[0].mxu0
      %v5579 = vadd.f32 0.0, %v5578
      %v5580 = vpop.f32.mrb[0].mxu0
      %v5581 = vpop.f32.mrb[0].mxu0
      %v5582 = vadd.f32 0.0, %v5581
      %v5583 = vpop.f32.mrb[0].mxu0
      %5584 = vmatprep.mubr.bf16.mxu0 0
      %5585 = vmatmul.mubr.bf16.gmra.mrb[0].mxu0 %v5493
      %v5586 = vpop.f32.mrb[0].mxu0
      %v5587 = vadd.f32 0.0, %v5586
      %v5588 = vpop.f32.mrb[0].mxu0
      %v5589 = vpop.f32.mrb[0].mxu0
      %v5590 = vadd.f32 0.0, %v5589
      %v5591 = vpop.f32.mrb[0].mxu0
      %5592 = vdwg.mxu0
      %v5593 = vadd.f32 %v5403, %v5579
      %v5594 = vadd.f32 %v5404, %v5582
      %v5595 = vadd.f32 %v5405, %v5587
      %v5596 = vadd.f32 %v5406, %v5590
      %v5597 = vld [vmem:[%s5272] sm:$0xe]
      %v5598 = vld [vmem:[%s5272 + $0x8] sm:$0xe]
      %v5599 = vld [vmem:[%s5272 + $0x10] sm:$0xe]
      %v5600 = vld [vmem:[%s5272 + $0x18] sm:$0xe]
      %v5609 = vrot.slane %v5597, 5
      %v5610 = vrot.slane %v5609, 4
      %v5611 = vrot.slane %v5408, 5
      %v5612 = vsel %vm2694, %v5610, %v5611
      %v5613 = vrot.slane %v5598, 5
      %v5614 = vrot.slane %v5613, 4
      %v5615 = vrot.slane %v5410, 5
      %v5616 = vsel %vm2694, %v5614, %v5615
      %v5617 = vrot.slane %v5599, 5
      %v5618 = vrot.slane %v5617, 4
      %v5619 = vrot.slane %v5412, 5
      %v5620 = vsel %vm2694, %v5618, %v5619
      %v5621 = vrot.slane %v5600, 5
      %v5622 = vrot.slane %v5621, 4
      %v5623 = vrot.slane %v5414, 5
      %v5624 = vsel %vm2694, %v5622, %v5623
      %s5625 = scalar_lea.vmem %s5, 512
      %v5626 = vld [vmem:[%s5625] sm:$0xf]
      %v5627 = vld [vmem:[%s5625 + $0x4] sm:$0xf]
      %v5628 = vld [vmem:[%s5625 + $0x8] sm:$0xf]
      %v5629 = vld [vmem:[%s5625 + $0xc] sm:$0xf]
      %v5630 = vld [vmem:[%s5625 + $0x10] sm:$0xf]
      %v5631 = vld [vmem:[%s5625 + $0x14] sm:$0xf]
      %v5632 = vld [vmem:[%s5625 + $0x18] sm:$0xf]
      %v5633 = vld [vmem:[%s5625 + $0x1c] sm:$0xf]
      %v5634 = vld [vmem:[%s5625 + $0x20] sm:$0xf]
      %v5635 = vld [vmem:[%s5625 + $0x24] sm:$0xf]
      %v5636 = vld [vmem:[%s5625 + $0x28] sm:$0xf]
      %v5637 = vld [vmem:[%s5625 + $0x2c] sm:$0xf]
      %v5638 = vld [vmem:[%s5625 + $0x30] sm:$0xf]
      %v5639 = vld [vmem:[%s5625 + $0x34] sm:$0xf]
      %v5640 = vld [vmem:[%s5625 + $0x38] sm:$0xf]
      %v5641 = vld [vmem:[%s5625 + $0x3c] sm:$0xf]
      %v5642 = vunpack.c.l.b16 %v5612
      %v5643 = vunpack.c.l.b16 %v5616
      %v5644 = vunpack.c.l.b16 %v5620
      %v5645 = vunpack.c.l.b16 %v5624
      %v5646 = vpack.c.b16 %v5643, %v5642
      %v5647 = vpack.c.b16 %v5645, %v5644
      %v5666 = vunpack.c.l.b16 %v5626
      %v5667 = vunpack.c.l.b16 %v5627
      %v5668 = vunpack.c.l.b16 %v5628
      %v5669 = vunpack.c.l.b16 %v5629
      %v5670 = vunpack.c.l.b16 %v5630
      %v5671 = vunpack.c.l.b16 %v5631
      %v5672 = vunpack.c.l.b16 %v5632
      %v5673 = vunpack.c.l.b16 %v5633
      %v5674 = vunpack.c.l.b16 %v5634
      %v5675 = vunpack.c.l.b16 %v5635
      %v5676 = vunpack.c.l.b16 %v5636
      %v5677 = vunpack.c.l.b16 %v5637
      %v5678 = vunpack.c.l.b16 %v5638
      %v5679 = vunpack.c.l.b16 %v5639
      %v5680 = vunpack.c.l.b16 %v5640
      %v5681 = vunpack.c.l.b16 %v5641
      %v5682 = vpack.c.b16 %v5667, %v5666
      %v5683 = vpack.c.b16 %v5669, %v5668
      %v5684 = vpack.c.b16 %v5671, %v5670
      %v5685 = vpack.c.b16 %v5673, %v5672
      %v5686 = vpack.c.b16 %v5675, %v5674
      %v5687 = vpack.c.b16 %v5677, %v5676
      %v5688 = vpack.c.b16 %v5679, %v5678
      %v5689 = vpack.c.b16 %v5681, %v5680
      %5698 = vmatprep.subr.bf16.mxu0 0
      %5699 = vmatpush1.bf16.msra.mxu0 %v5682
      %5700 = vmatprep.subr.bf16.mxu0 0
      %5701 = vmatpush1.bf16.msra.mxu0 %v5683
      %5702 = vmatprep.subr.bf16.mxu0 0
      %5703 = vmatpush1.bf16.msra.mxu0 %v5684
      %5704 = vmatprep.subr.bf16.mxu0 0
      %5705 = vmatpush1.bf16.msra.mxu0 %v5685
      %5706 = vmatprep.subr.bf16.mxu0 0
      %5707 = vmatpush1.bf16.msra.mxu0 %v5686
      %5708 = vmatprep.subr.bf16.mxu0 0
      %5709 = vmatpush1.bf16.msra.mxu0 %v5687
      %5710 = vmatprep.subr.bf16.mxu0 0
      %5711 = vmatpush1.bf16.msra.mxu0 %v5688
      %5712 = vmatprep.subr.bf16.mxu0 0
      %5713 = vmatpush1.bf16.msra.mxu0 %v5689
      %5714 = vmatprep.subr.bf16.mxu0 0
      %5715 = vmatpush1.bf16.msra.mxu0 0
      %5716 = vmatprep.subr.bf16.mxu0 0
      %5717 = vmatpush1.bf16.msra.mxu0 0
      %5718 = vmatprep.subr.bf16.mxu0 0
      %5719 = vmatpush1.bf16.msra.mxu0 0
      %5720 = vmatprep.subr.bf16.mxu0 0
      %5721 = vmatpush1.bf16.msra.mxu0 0
      %5722 = vmatprep.subr.bf16.mxu0 0
      %5723 = vmatpush1.bf16.msra.mxu0 0
      %5724 = vmatprep.subr.bf16.mxu0 0
      %5725 = vmatpush1.bf16.msra.mxu0 0
      %5726 = vmatprep.subr.bf16.mxu0 0
      %5727 = vmatpush1.bf16.msra.mxu0 0
      %5728 = vmatprep.subr.bf16.mxu0 0
      %5729 = vmatpush1.bf16.msra.mxu0 0
      %5730 = vmatprep.mubr.bf16.mxu0 0
      %5731 = vmatmul.mubr.bf16.gmra.mrb[0].mxu0 %v5646
      %v5732 = vpop.f32.mrb[0].mxu0
      %v5733 = vadd.f32 0.0, %v5732
      %v5734 = vpop.f32.mrb[0].mxu0
      %v5735 = vpop.f32.mrb[0].mxu0
      %v5736 = vadd.f32 0.0, %v5735
      %v5737 = vpop.f32.mrb[0].mxu0
      %5738 = vmatprep.mubr.bf16.mxu0 0
      %5739 = vmatmul.mubr.bf16.gmra.mrb[0].mxu0 %v5647
      %v5740 = vpop.f32.mrb[0].mxu0
      %v5741 = vadd.f32 0.0, %v5740
      %v5742 = vpop.f32.mrb[0].mxu0
      %v5743 = vpop.f32.mrb[0].mxu0
      %v5744 = vadd.f32 0.0, %v5743
      %v5745 = vpop.f32.mrb[0].mxu0
      %5746 = vdwg.mxu0
      %v5747 = vadd.f32 %v5593, %v5733
      %v5748 = vadd.f32 %v5594, %v5736
      %v5749 = vadd.f32 %v5595, %v5741
      %v5750 = vadd.f32 %v5596, %v5744
      %v5751 = vld [vmem:[%s6] sm:$0x1]
      %v5753 = vlaneseq
      %v5754 = vshrl.u32 %v5753, 7
      %v5755 = vsub.s32 0, %v5754
      %v5756 = vrot.slane %v5751, %v5755
      %v5758 = vadd.f32 %v5747, %v5756
      %v5759 = vadd.f32 %v5748, %v5756
      %v5760 = vadd.f32 %v5749, %v5756
      %v5761 = vadd.f32 %v5750, %v5756
      %v5762 = vmul.f32 %v5758, 0.5
      %v5763 = vmul.f32 %v5759, 0.5
      %v5764 = vmul.f32 %v5760, 0.5
      %v5765 = vmul.f32 %v5761, 0.5
      %v5766 = vmul.f32 %v5758, 0.70710677
      %v5767 = vmul.f32 %v5759, 0.70710677
      %v5768 = vmul.f32 %v5760, 0.70710677
      %v5769 = vmul.f32 %v5761, 0.70710677
      %vm5770 = vcmp.ge.f32.partialorder %v5766, 0.0
      %vm5771 = vcmp.ge.f32.partialorder %v5767, 0.0
      %vm5772 = vcmp.ge.f32.partialorder %v5768, 0.0
      %vm5773 = vcmp.ge.f32.partialorder %v5769, 0.0
      %v5774 = vsel %vm5770, 1.0, -1.0
      %v5775 = vsel %vm5771, 1.0, -1.0
      %v5776 = vsel %vm5772, 1.0, -1.0
      %v5777 = vsel %vm5773, 1.0, -1.0
      %v5778 = vand.u32 2147483647, %v5766
      %v5779 = vand.u32 2147483647, %v5767
      %v5780 = vand.u32 2147483647, %v5768
      %v5781 = vand.u32 2147483647, %v5769
      %v5782 = vmul.f32 %v5778, 0.3275911
      %v5783 = vmul.f32 %v5779, 0.3275911
      %v5784 = vmul.f32 %v5780, 0.3275911
      %v5785 = vmul.f32 %v5781, 0.3275911
      %v5786 = vadd.f32 %v5782, 1.0
      %v5787 = vadd.f32 %v5783, 1.0
      %v5788 = vadd.f32 %v5784, 1.0
      %v5789 = vadd.f32 %v5785, 1.0
      %v5790 = vrcp.pop %v5786
      %v5791 = vrcp.pop %v5787
      %v5792 = vrcp.pop %v5788
      %v5793 = vrcp.pop %v5789
      %v5794 = vmul.f32 %v5790, 1.0614054
      %v5795 = vmul.f32 %v5791, 1.0614054
      %v5796 = vmul.f32 %v5792, 1.0614054
      %v5797 = vmul.f32 %v5793, 1.0614054
      %v5798 = vadd.f32 %v5794, -1.4531521
      %v5799 = vadd.f32 %v5795, -1.4531521
      %v5800 = vadd.f32 %v5796, -1.4531521
      %v5801 = vadd.f32 %v5797, -1.4531521
      %v5802 = vmul.f32 %v5798, %v5790
      %v5803 = vmul.f32 %v5799, %v5791
      %v5804 = vmul.f32 %v5800, %v5792
      %v5805 = vmul.f32 %v5801, %v5793
      %v5806 = vadd.f32 %v5802, 1.4214138
      %v5807 = vadd.f32 %v5803, 1.4214138
      %v5808 = vadd.f32 %v5804, 1.4214138
      %v5809 = vadd.f32 %v5805, 1.4214138
      %v5810 = vmul.f32 %v5806, %v5790
      %v5811 = vmul.f32 %v5807, %v5791
      %v5812 = vmul.f32 %v5808, %v5792
      %v5813 = vmul.f32 %v5809, %v5793
      %v5814 = vadd.f32 %v5810, -0.28449672
      %v5815 = vadd.f32 %v5811, -0.28449672
      %v5816 = vadd.f32 %v5812, -0.28449672
      %v5817 = vadd.f32 %v5813, -0.28449672
      %v5818 = vmul.f32 %v5814, %v5790
      %v5819 = vmul.f32 %v5815, %v5791
      %v5820 = vmul.f32 %v5816, %v5792
      %v5821 = vmul.f32 %v5817, %v5793
      %v5822 = vadd.f32 %v5818, 0.2548296
      %v5823 = vadd.f32 %v5819, 0.2548296
      %v5824 = vadd.f32 %v5820, 0.2548296
      %v5825 = vadd.f32 %v5821, 0.2548296
      %v5826 = vmul.f32 %v5822, %v5790
      %v5827 = vmul.f32 %v5823, %v5791
      %v5828 = vmul.f32 %v5824, %v5792
      %v5829 = vmul.f32 %v5825, %v5793
      %v5830 = vsub.f32 0.0, %v5778
      %v5831 = vsub.f32 0.0, %v5779
      %v5832 = vsub.f32 0.0, %v5780
      %v5833 = vsub.f32 0.0, %v5781
      %v5834 = vmul.f32 %v5830, %v5778
      %v5835 = vmul.f32 %v5831, %v5779
      %v5836 = vmul.f32 %v5832, %v5780
      %v5837 = vmul.f32 %v5833, %v5781
      %v5838 = vmul.f32 %v5834, 1.442695
      %v5839 = vpow.pop %v5838
      %v5840 = vmul.f32 %v5835, 1.442695
      %v5841 = vpow.pop %v5840
      %v5842 = vmul.f32 %v5836, 1.442695
      %v5843 = vpow.pop %v5842
      %v5844 = vmul.f32 %v5837, 1.442695
      %v5845 = vpow.pop %v5844
      %v5846 = vmul.f32 %v5826, %v5839
      %v5847 = vmul.f32 %v5827, %v5841
      %v5848 = vmul.f32 %v5828, %v5843
      %v5849 = vmul.f32 %v5829, %v5845
      %v5850 = vsub.f32 1.0, %v5846
      %v5851 = vsub.f32 1.0, %v5847
      %v5852 = vsub.f32 1.0, %v5848
      %v5853 = vsub.f32 1.0, %v5849
      %v5854 = vmul.f32 %v5774, %v5850
      %v5855 = vmul.f32 %v5775, %v5851
      %v5856 = vmul.f32 %v5776, %v5852
      %v5857 = vmul.f32 %v5777, %v5853
      %v5858 = vadd.f32 %v5854, 1.0
      %v5859 = vadd.f32 %v5855, 1.0
      %v5860 = vadd.f32 %v5856, 1.0
      %v5861 = vadd.f32 %v5857, 1.0
      %v5862 = vmul.f32 %v5762, %v5858
      %v5863 = vmul.f32 %v5763, %v5859
      %v5864 = vmul.f32 %v5764, %v5860
      %v5865 = vmul.f32 %v5765, %v5861
      %v5866 = vpack.c.bf16 %v5862, %v5862
      %v5867 = vpack.c.bf16 %v5863, %v5863
      %v5868 = vpack.c.bf16 %v5864, %v5864
      %v5869 = vpack.c.bf16 %v5865, %v5865
      %5870 = vst [vmem:[%s453] sm:$0xf] %v5866
      %5871 = vst [vmem:[%s453 + $0x4] sm:$0xf] %v5867
      %5872 = vst [vmem:[%s453 + $0x8] sm:$0xf] %v5868
      %5873 = vst [vmem:[%s453 + $0xc] sm:$0xf] %v5869
      %s5874 = smul.u32 4, %s23
      %p5875 = scmp.lt.s32.totalorder %s22, 1
      %s5876 = scalar_select %p5875, %s22, 1
      %p5877 = scmp.lt.s32.totalorder %s5874, 7
      %s5878 = scalar_select %p5877, %s5874, 7
      %s5879 = smul.addr %s5876, 8
      %s5880 = sadd.s32 %s5878, %s5879
      %s5881 = smul.addr %s5880, 4
      %s5882 = scalar_lea.vmem %s7, %s5881
      // Predicated region
      $region49: #{down_forward.1} parent=47 // pred_check
        %p5883 = pneg %p234
      $region50: #{down_forward.1} parent=47 // pred_check_branch
        %5885 = sbr.rel (%p5883) target = $region52
      $region51: #{down_forward.1} parent=47 // pred_region
        %s5886 = smul.u32 4, %s23
      $region52: #{down_forward.1} parent=47 // pred_fallthru
        _
    $region48: #{down_forward.1} parent=5 // pred_fallthru
      _
    %p5887 = scmp.le.s32.totalorder 2, %s13
    // Predicated region
    $region53: #{down_forward.1} parent=5 // pred_check
      %p5888 = pneg %p5887
    $region54: #{down_forward.1} parent=5 // pred_check_branch
      %5890 = sbr.rel (%p5888) target = $region56
    $region55: #{down_forward.1} parent=5 // pred_region
      %s5891 = ssub.s32 %s13, 2
      // Predicated region
      $region57: #{down_forward.1} parent=55 // pred_check
        %p5892 = pneg %p240
      $region58: #{down_forward.1} parent=55 // pred_check_branch
        %5894 = sbr.rel (%p5892) target = $region60
      $region59: #{down_forward.1} parent=55 // pred_region
        %s5895 = smul.u32 4, %s25
        %p5896 = scmp.lt.s32.totalorder %s24, 1
        %s5897 = scalar_select %p5896, %s24, 1
        %p5898 = scmp.lt.s32.totalorder %s5895, 7
        %s5899 = scalar_select %p5898, %s5895, 7
        %s5900 = smul.addr %s5897, 8
        %s5901 = sadd.s32 %s5899, %s5900
        %s5902 = smul.addr %s5901, 4
        %s5903 = scalar_lea.vmem %s7, %s5902
      $region60: #{down_forward.1} parent=55 // pred_fallthru
        _
    $region56: #{down_forward.1} parent=5 // pred_fallthru
      _
  $region6: #{down_forward.1} parent=0 // loop_footer
    %s17 = sadd.s32 1, %s13
  $region7: #{down_forward.1} parent=0 // loop_footer_branch
    %12 = sbr.rel target = $region3
  $region8: #{down_forward.1} parent=0 // loop_exit
    _

</llo_original>
